<compile_context>
chip_gen: v5e
topology: v5e:2x2
jax: 0.10.0
libtpu: 0.0.40
codegen_flags: <defaults>
</compile_context>

<pallas_src>
import math
from functools import partial

import jax
import jax.numpy as jnp
from jax.experimental import pallas as pl
from jax.experimental.pallas import tpu as pltpu


# --------------------------------------------------------------------------
# Small helpers
# --------------------------------------------------------------------------
def _round_up(x, m):
    return ((x + m - 1) // m) * m


def _pad_axis(a, axis, new):
    if a.shape[axis] == new:
        return a
    pads = [(0, 0)] * a.ndim
    pads[axis] = (0, new - a.shape[axis])
    return jnp.pad(a, pads)


def _vmem_capacity_bytes():
    try:
        return int(pltpu.get_tpu_info().vmem_capacity_bytes)
    except Exception:
        return 64 << 20  # conservative fallback (v7x per-core VMEM)


def _estimate_step_bytes(bb, S, Dp, Fp, f_chunk, H):
    """Rough per-grid-step VMEM use: activation tiles + in-kernel intermediates."""
    rows = bb * S
    hd_p = Dp // H
    b = 4 * rows * Dp * 4                        # double-buffered in+out tiles (f32)
    b += rows * 3 * Dp * (4 + 2)                 # qkv (f32) + bf16 slices
    b += bb * S * S * 4 * 3                      # one head's logits / p (f32)
    b += rows * hd_p * (2 * 3 + 4 + 2)           # per-head q/k/v (bf16) + vals
    b += rows * Dp * 4 * 4 + rows * Dp * 2       # attn_out, x1, ff, x2 + x1 bf16
    b += rows * min(f_chunk, Fp) * (4 + 2)       # one MLP hidden chunk (f32 + bf16)
    return b


def _pick_block_b(B, S, Dp, Fp, f_chunk, H, budget_bytes):
    divisors = [d for d in range(1, B + 1) if B % d == 0]
    feasible = [d for d in divisors
                if _estimate_step_bytes(d, S, Dp, Fp, f_chunk, H) <= budget_bytes]
    feasible = feasible or [1]
    target_steps = min(4, B)                     # want >= 4 pipeline iterations
    deep = [d for d in feasible if B // d >= target_steps]
    pool = deep or feasible
    even = [d for d in pool if (B // d) % 2 == 0]  # even step count for megacore
    return max(even or pool)


def _const_spec(shape, single_buffer):
    """BlockSpec for a grid-invariant (weight/bias) block."""
    ndim = len(shape)
    idx = lambda b, _n=ndim: (0,) * _n
    if single_buffer:
        # Constant index_map -> never re-DMA'd -> one buffer is enough.
        return pl.BlockSpec(shape, idx, pipeline_mode=pl.Buffered(1))
    return pl.BlockSpec(shape, idx)


# --------------------------------------------------------------------------
# Kernel: one full EncoderBlock on a (Bt, S, Dp) tile of batch rows.
# All padded lane columns of every activation are exactly zero, by
# construction of the padded parameters (see prepare_encoder_params).
# --------------------------------------------------------------------------
def encoder_block_kernel(x_ref, wqkv_ref, bqkv_ref, wo_ref, bo_ref,
                         w1_ref, b1_ref, w2_ref, b2_ref,
                         g1_ref, be1_ref, g2_ref, be2_ref,
                         out_ref, *, num_heads, d_orig, head_dim, f_chunk):
    Bt, S, Dp = x_ref.shape
    H = num_heads
    hd_p = Dp // H
    n = Bt * S
    scale = 1.0 / math.sqrt(head_dim)
    inv_d = 1.0 / d_orig

    def layer_norm(t, g, b):
        # Padded columns of t are zero, so sums over Dp equal sums over d_orig.
        mu = jnp.sum(t, axis=-1, keepdims=True) * inv_d
        var = jnp.sum(t * t, axis=-1, keepdims=True) * inv_d - mu * mu
        return (t - mu) * jax.lax.rsqrt(var + 1e-5) * g + b

    x = x_ref[...].astype(jnp.float32).reshape(n, Dp)

    # ---- fused QKV projection: one (n, Dp) x (Dp, 3*Dp) MXU matmul ----
    qkv = jnp.dot(x.astype(jnp.bfloat16), wqkv_ref[...],
                  preferred_element_type=jnp.float32) + bqkv_ref[...]

    # ---- multi-head attention (no transposes / concats) ----
    # Columns of qkv are [all Q | all K | all V], each head-contiguous and
    # zero-padded to hd_p per head.  The head concat is folded into the
    # output projection: o = sum_h vals_h @ Wo[h*hd_p:(h+1)*hd_p, :].
    wo = wo_ref[...]
    attn_out = jnp.zeros((n, Dp), jnp.float32)
    for h in range(H):                               # static unroll, H is small
        q_h = qkv[:, h * hd_p:(h + 1) * hd_p]
        k_h = qkv[:, Dp + h * hd_p:Dp + (h + 1) * hd_p]
        v_h = qkv[:, 2 * Dp + h * hd_p:2 * Dp + (h + 1) * hd_p]
        q_h = q_h.reshape(Bt, S, hd_p).astype(jnp.bfloat16)
        k_h = k_h.reshape(Bt, S, hd_p).astype(jnp.bfloat16)
        v_h = v_h.reshape(Bt, S, hd_p).astype(jnp.bfloat16)

        logits = jnp.einsum('bqd,bkd->bqk', q_h, k_h,
                            preferred_element_type=jnp.float32) * scale
        m = jnp.max(logits, axis=-1, keepdims=True)
        p = jnp.exp(logits - m)
        denom = jnp.sum(p, axis=-1, keepdims=True)
        p = p * pl.reciprocal(denom, approx=True)    # softmax in f32, EUP recip
        # TODO(synk): flash-style KV tiling here for long S (bound O(S^2) live).

        vals = jnp.einsum('bqk,bkd->bqd', p.astype(jnp.bfloat16), v_h,
                          preferred_element_type=jnp.float32)
        vals = vals.reshape(n, hd_p).astype(jnp.bfloat16)
        attn_out = attn_out + jnp.dot(vals, wo[h * hd_p:(h + 1) * hd_p, :],
                                      preferred_element_type=jnp.float32)
    attn_out = attn_out + bo_ref[...]

    # ---- residual + LayerNorm 1 (f32) ----
    x1 = layer_norm(x + attn_out, g1_ref[...], be1_ref[...])
    x1_b = x1.astype(jnp.bfloat16)

    # ---- feed-forward MLP, tiled over the hidden dim F ----
    Fp = w1_ref.shape[1]
    ff = jnp.zeros((n, Dp), jnp.float32)
    for c0 in range(0, Fp, f_chunk):                 # static, 128-aligned chunks
        c1 = min(c0 + f_chunk, Fp)
        hck = jnp.dot(x1_b, w1_ref[:, c0:c1],
                      preferred_element_type=jnp.float32) + b1_ref[:, c0:c1]
        hck = jnp.maximum(hck, 0.0).astype(jnp.bfloat16)
        ff = ff + jnp.dot(hck, w2_ref[c0:c1, :],
                          preferred_element_type=jnp.float32)
    ff = ff + b2_ref[...]

    # ---- residual + LayerNorm 2 (f32) ----
    x2 = layer_norm(x1 + ff, g2_ref[...], be2_ref[...])
    out_ref[...] = x2.reshape(Bt, S, Dp).astype(out_ref.dtype)


# --------------------------------------------------------------------------
# Parameter preparation: reorder, pad to lane-dense dims, cast to bf16.
# Done ONCE per model (hoisted out of the forward path).
# --------------------------------------------------------------------------
def prepare_encoder_params(layer_params, num_heads):
    D = layer_params[0]["wo"].shape[0]
    F = layer_params[0]["w1"].shape[1]
    H = num_heads
    hd = D // H
    d_pad = _round_up(D, math.lcm(128, H))    # lane-dense and divisible by H
    f_pad = _round_up(F, 128)
    hd_p = d_pad // H

    def fix_qkv(a):
        # PyTorch column order is (head, [q|k|v], hd); reorder to
        # ([q|k|v], head, hd) and zero-pad each head to hd_p lanes.
        lead = a.shape[:-1]
        a = a.reshape(*lead, H, 3, hd)
        a = jnp.swapaxes(a, -3, -2)
        a = _pad_axis(a, -1, hd_p)
        return a.reshape(*lead, 3 * d_pad)

    def prep(p):
        wqkv = _pad_axis(fix_qkv(p["wqkv"]), 0, d_pad).astype(jnp.bfloat16)
        bqkv = fix_qkv(p["bqkv"]).astype(jnp.float32)
        wo = _pad_axis(p["wo"].reshape(H, hd, D), 1, hd_p).reshape(d_pad, D)
        wo = _pad_axis(wo, 1, d_pad).astype(jnp.bfloat16)
        return dict(
            wqkv=wqkv, bqkv=bqkv, wo=wo,
            bo=_pad_axis(p["bo"], 1, d_pad).astype(jnp.float32),
            w1=_pad_axis(_pad_axis(p["w1"], 0, d_pad), 1, f_pad).astype(jnp.bfloat16),
            b1=_pad_axis(p["b1"], 1, f_pad).astype(jnp.float32),
            w2=_pad_axis(_pad_axis(p["w2"], 0, f_pad), 1, d_pad).astype(jnp.bfloat16),
            b2=_pad_axis(p["b2"], 1, d_pad).astype(jnp.float32),
            g1=_pad_axis(p["g1"], 1, d_pad).astype(jnp.float32),
            be1=_pad_axis(p["be1"], 1, d_pad).astype(jnp.float32),
            g2=_pad_axis(p["g2"], 1, d_pad).astype(jnp.float32),
            be2=_pad_axis(p["be2"], 1, d_pad).astype(jnp.float32),
        )

    layers = [prep(p) for p in layer_params]
    meta = dict(num_heads=H, d_orig=D, head_dim=hd, d_pad=d_pad, f_pad=f_pad)
    return layers, meta


# --------------------------------------------------------------------------
# Wrapper: one pallas_call per EncoderBlock
# --------------------------------------------------------------------------
def encoder_block(x, lp, *, num_heads, d_orig, head_dim, f_chunk=1024, block_b=None):
    """Apply one EncoderBlock to x of shape (B, S, Dp) (already padded)."""
    B, S, Dp = x.shape
    Fp = lp["w1"].shape[1]
    f_chunk = min(f_chunk, Fp)

    cap = _vmem_capacity_bytes()
    args = (x, lp["wqkv"], lp["bqkv"], lp["wo"], lp["bo"],
            lp["w1"], lp["b1"], lp["w2"], lp["b2"],
            lp["g1"], lp["be1"], lp["g2"], lp["be2"])
    weight_bytes = sum(int(a.size) * a.dtype.itemsize for a in args[1:])

    if block_b is None:
        budget = max(8 << 20, int(0.8 * cap) - 2 * weight_bytes - (4 << 20))
        block_b = _pick_block_b(B, S, Dp, Fp, f_chunk, num_heads, budget)
    assert B % block_b == 0
    grid = (B // block_b,)
    vmem_limit = max(32 << 20, int(0.85 * cap))   # generation-aware cap

    kern = partial(encoder_block_kernel, num_heads=num_heads, d_orig=d_orig,
                   head_dim=head_dim, f_chunk=f_chunk)

    def run(single_buffer_weights):
        in_specs = [pl.BlockSpec((block_b, S, Dp), lambda b: (b, 0, 0))]
        in_specs += [_const_spec(a.shape, single_buffer_weights) for a in args[1:]]
        return pl.pallas_call(
            kern,
            out_shape=jax.ShapeDtypeStruct((B, S, Dp), x.dtype),
            grid=grid,
            in_specs=in_specs,
            out_specs=pl.BlockSpec((block_b, S, Dp), lambda b: (b, 0, 0)),
            compiler_params=pltpu.CompilerParams(
                dimension_semantics=("parallel",),
                vmem_limit_bytes=vmem_limit),
        )(*args)

    try:
        return run(True)
    except Exception:
        # Fallback for Pallas builds where pl.Buffered(1) single-buffering of
        # grid-invariant weight blocks is unavailable / rejected at lowering.
        return run(False)


def transformer_encoder(x, prepared_layers, meta, *, block_b=None, f_chunk=1024):
    """TransformerEncoder.forward: sequentially apply each EncoderBlock."""
    B, S, D = x.shape
    d_pad = meta["d_pad"]
    xp = _pad_axis(x, 2, d_pad)        # pad once; zero-pad invariant holds per layer
    # TODO(synk): cross-layer weight prefetch / in-kernel layer loop would avoid
    # the per-layer HBM round trip of the (B, S, Dp) activation.
    for lp in prepared_layers:
        xp = encoder_block(xp, lp, num_heads=meta["num_heads"],
                           d_orig=meta["d_orig"], head_dim=meta["head_dim"],
                           f_chunk=f_chunk, block_b=block_b)
    return xp[..., :D]


# --------------------------------------------------------------------------
# Pure-JAX f32 reference (mirrors the PyTorch module) for a sanity check.
# --------------------------------------------------------------------------
def _layer_norm_ref(x, g, b):
    mu = jnp.mean(x, axis=-1, keepdims=True)
    var = jnp.mean((x - mu) ** 2, axis=-1, keepdims=True)
    return (x - mu) * jax.lax.rsqrt(var + 1e-5) * g + b


def encoder_block_ref(x, params, num_heads):
    B, S, D = x.shape
    H, hd = num_heads, D // num_heads
    qkv = x @ params["wqkv"] + params["bqkv"][0]
    qkv = qkv.reshape(B, S, H, 3 * hd).transpose(0, 2, 1, 3)
    q, k, v = qkv[..., :hd], qkv[..., hd:2 * hd], qkv[..., 2 * hd:]
    logits = jnp.einsum('bhqd,bhkd->bhqk', q, k) / math.sqrt(hd)
    attn = jax.nn.softmax(logits, axis=-1)
    vals = jnp.einsum('bhqk,bhkd->bhqd', attn, v)
    vals = vals.transpose(0, 2, 1, 3).reshape(B, S, D)
    o = vals @ params["wo"] + params["bo"][0]
    x1 = _layer_norm_ref(x + o, params["g1"][0], params["be1"][0])
    h = jnp.maximum(x1 @ params["w1"] + params["b1"][0], 0.0)
    ff = h @ params["w2"] + params["b2"][0]
    return _layer_norm_ref(x1 + ff, params["g2"][0], params["be2"][0])


def transformer_encoder_ref(x, layer_params, num_heads):
    for params in layer_params:
        x = encoder_block_ref(x, params, num_heads)
    return x


# --------------------------------------------------------------------------
# Deterministic synthetic init mirroring the PyTorch module's shapes.
# Weights are stored transposed relative to nn.Linear, i.e. (in, out), with
# the qkv columns in the PyTorch (head, [q|k|v], hd) order.
# --------------------------------------------------------------------------
def init_layer_params(key, d, dim_ff):
    ks = jax.random.split(key, 6)

    def xavier(k, fan_in, fan_out, shape):
        bound = math.sqrt(6.0 / (fan_in + fan_out))
        return jax.random.uniform(k, shape, jnp.float32, -bound, bound)

    wqkv = xavier(ks[0], d, 3 * d, (d, 3 * d))     # xavier_uniform, bias = 0
    wo = xavier(ks[1], d, d, (d, d))               # xavier_uniform, bias = 0
    lim1 = 1.0 / math.sqrt(d)
    lim2 = 1.0 / math.sqrt(dim_ff)
    w1 = jax.random.uniform(ks[2], (d, dim_ff), jnp.float32, -lim1, lim1)
    b1 = jax.random.uniform(ks[3], (1, dim_ff), jnp.float32, -lim1, lim1)
    w2 = jax.random.uniform(ks[4], (dim_ff, d), jnp.float32, -lim2, lim2)
    b2 = jax.random.uniform(ks[5], (1, d), jnp.float32, -lim2, lim2)

    return dict(
        wqkv=wqkv, bqkv=jnp.zeros((1, 3 * d), jnp.float32),
        wo=wo, bo=jnp.zeros((1, d), jnp.float32),
        w1=w1, b1=b1, w2=w2, b2=b2,
        g1=jnp.ones((1, d), jnp.float32), be1=jnp.zeros((1, d), jnp.float32),
        g2=jnp.ones((1, d), jnp.float32), be2=jnp.zeros((1, d), jnp.float32),
    )


if __name__ == "__main__":
    NUM_LAYERS = 2
    BATCH = 2
    SEQ = 8
    INPUT_DIM = 32           # embed_dim == input_dim in EncoderBlock
    NUM_HEADS = 4
    DIM_FEEDFORWARD = 64

    root = jax.random.PRNGKey(0)
    k_x, k_p = jax.random.split(root)
    x = jax.random.normal(k_x, (BATCH, SEQ, INPUT_DIM), dtype=jnp.float32)

    layer_keys = jax.random.split(k_p, NUM_LAYERS)
    layer_params = [init_layer_params(k, INPUT_DIM, DIM_FEEDFORWARD)
                    for k in layer_keys]

    # Hoisted parameter prep: reorder / pad / bf16-cast once per model.
    prepared, meta = prepare_encoder_params(layer_params, NUM_HEADS)

    out = transformer_encoder(x, prepared, meta)
    jax.block_until_ready(out)
    assert out.shape == (BATCH, SEQ, INPUT_DIM)

    # Loose-tolerance check vs. a pure-JAX f32 reference (bf16 MXU inputs and
    # the approximate reciprocal introduce small, intentional drift).
    ref = transformer_encoder_ref(x, layer_params, NUM_HEADS)
    assert bool(jnp.allclose(out, ref, atol=1e-1, rtol=1e-1)), (
        float(jnp.max(jnp.abs(out - ref))))

    print("KERNEL_OK")
</pallas_src>

<mosaic_0001>
module attributes {stable_mosaic.version = 11 : i64} {
  func.func @encoder_block_kernel(%arg0: i32, %arg1: memref<1x8x128xf32, #tpu.memory_space<vmem>>, %arg2: memref<128x384xbf16, #tpu.memory_space<vmem>>, %arg3: memref<1x384xf32, #tpu.memory_space<vmem>>, %arg4: memref<128x128xbf16, #tpu.memory_space<vmem>>, %arg5: memref<1x128xf32, #tpu.memory_space<vmem>>, %arg6: memref<128x128xbf16, #tpu.memory_space<vmem>>, %arg7: memref<1x128xf32, #tpu.memory_space<vmem>>, %arg8: memref<128x128xbf16, #tpu.memory_space<vmem>>, %arg9: memref<1x128xf32, #tpu.memory_space<vmem>>, %arg10: memref<1x128xf32, #tpu.memory_space<vmem>>, %arg11: memref<1x128xf32, #tpu.memory_space<vmem>>, %arg12: memref<1x128xf32, #tpu.memory_space<vmem>>, %arg13: memref<1x128xf32, #tpu.memory_space<vmem>>, %arg14: memref<1x8x128xf32, #tpu.memory_space<vmem>>) attributes {dimension_semantics = [#tpu.dimension_semantics<parallel>], iteration_bounds = array<i64: 2>, scalar_prefetch = 0 : i64, scratch_operands = 0 : i64, tpu.core_type = #tpu.core_type<tc>, window_params = [{transform_indices = @transform_0, window_bounds = array<i64: 1, 8, 128>}, {pipeline_mode = #tpu.pipeline_mode<synchronous>, transform_indices = @transform_1, window_bounds = array<i64: 128, 384>}, {pipeline_mode = #tpu.pipeline_mode<synchronous>, transform_indices = @transform_2, window_bounds = array<i64: 1, 384>}, {pipeline_mode = #tpu.pipeline_mode<synchronous>, transform_indices = @transform_3, window_bounds = array<i64: 128, 128>}, {pipeline_mode = #tpu.pipeline_mode<synchronous>, transform_indices = @transform_4, window_bounds = array<i64: 1, 128>}, {pipeline_mode = #tpu.pipeline_mode<synchronous>, transform_indices = @transform_5, window_bounds = array<i64: 128, 128>}, {pipeline_mode = #tpu.pipeline_mode<synchronous>, transform_indices = @transform_6, window_bounds = array<i64: 1, 128>}, {pipeline_mode = #tpu.pipeline_mode<synchronous>, transform_indices = @transform_7, window_bounds = array<i64: 128, 128>}, {pipeline_mode = #tpu.pipeline_mode<synchronous>, transform_indices = @transform_8, window_bounds = array<i64: 1, 128>}, {pipeline_mode = #tpu.pipeline_mode<synchronous>, transform_indices = @transform_9, window_bounds = array<i64: 1, 128>}, {pipeline_mode = #tpu.pipeline_mode<synchronous>, transform_indices = @transform_10, window_bounds = array<i64: 1, 128>}, {pipeline_mode = #tpu.pipeline_mode<synchronous>, transform_indices = @transform_11, window_bounds = array<i64: 1, 128>}, {pipeline_mode = #tpu.pipeline_mode<synchronous>, transform_indices = @transform_12, window_bounds = array<i64: 1, 128>}, {transform_indices = @transform_13, window_bounds = array<i64: 1, 8, 128>}]} {
    %c0 = arith.constant 0 : index
    %c0_0 = arith.constant 0 : index
    %c0_1 = arith.constant 0 : index
    %0 = vector.load %arg1[%c0, %c0_0, %c0_1] : memref<1x8x128xf32, #tpu.memory_space<vmem>>, vector<1x8x128xf32>
    %1 = vector.shape_cast %0 : vector<1x8x128xf32> to vector<8x128xf32>
    %2 = arith.truncf %1 : vector<8x128xf32> to vector<8x128xbf16>
    %c0_2 = arith.constant 0 : index
    %c0_3 = arith.constant 0 : index
    %3 = vector.load %arg2[%c0_2, %c0_3] : memref<128x384xbf16, #tpu.memory_space<vmem>>, vector<128x384xbf16>
    %cst = arith.constant dense<0.000000e+00> : vector<8x384xf32>
    %4 = tpu.matmul %2, %3, %cst {dimension_numbers = #tpu.dot_dimension_numbers<[1], [0], [0], [1], [0, 0, 1, 1], [], []>} : vector<8x128xbf16>, vector<128x384xbf16>, vector<8x384xf32> -> vector<8x384xf32>
    %c0_4 = arith.constant 0 : index
    %c0_5 = arith.constant 0 : index
    %5 = vector.load %arg3[%c0_4, %c0_5] : memref<1x384xf32, #tpu.memory_space<vmem>>, vector<1x384xf32>
    %6 = vector.broadcast %5 : vector<1x384xf32> to vector<8x384xf32>
    %7 = arith.addf %4, %6 : vector<8x384xf32>
    %c0_6 = arith.constant 0 : index
    %c0_7 = arith.constant 0 : index
    %8 = vector.load %arg4[%c0_6, %c0_7] : memref<128x128xbf16, #tpu.memory_space<vmem>>, vector<128x128xbf16>
    %cst_8 = arith.constant 0.000000e+00 : f32
    %9 = vector.broadcast %cst_8 : f32 to vector<8x128xf32>
    %10 = vector.extract_strided_slice %7 {offsets = [0, 0], sizes = [8, 32], strides = [1, 1]} : vector<8x384xf32> to vector<8x32xf32>
    %11 = vector.extract_strided_slice %7 {offsets = [0, 128], sizes = [8, 32], strides = [1, 1]} : vector<8x384xf32> to vector<8x32xf32>
    %12 = vector.extract_strided_slice %7 {offsets = [0, 256], sizes = [8, 32], strides = [1, 1]} : vector<8x384xf32> to vector<8x32xf32>
    %13 = vector.shape_cast %10 : vector<8x32xf32> to vector<1x8x32xf32>
    %14 = arith.truncf %13 : vector<1x8x32xf32> to vector<1x8x32xbf16>
    %15 = vector.shape_cast %11 : vector<8x32xf32> to vector<1x8x32xf32>
    %16 = arith.truncf %15 : vector<1x8x32xf32> to vector<1x8x32xbf16>
    %17 = vector.shape_cast %12 : vector<8x32xf32> to vector<1x8x32xf32>
    %18 = arith.truncf %17 : vector<1x8x32xf32> to vector<1x8x32xbf16>
    "tpu.trace_start"() <{level = 10 : i32, message = "bqd,bkd->bqk"}> : () -> ()
    %cst_9 = arith.constant dense<0.000000e+00> : vector<1x8x8xf32>
    %19 = tpu.matmul %14, %16, %cst_9 {dimension_numbers = #tpu.dot_dimension_numbers<[2], [2], [1], [1], [0, 0, 0, 1, 1, 1], [0], [0]>} : vector<1x8x32xbf16>, vector<1x8x32xbf16>, vector<1x8x8xf32> -> vector<1x8x8xf32>
    "tpu.trace_stop"() : () -> ()
    %cst_10 = arith.constant 0.353553385 : f32
    %20 = vector.broadcast %cst_10 : f32 to vector<1x8x8xf32>
    %21 = arith.mulf %19, %20 : vector<1x8x8xf32>
    %cst_11 = arith.constant dense<0xFF800000> : vector<1x8xf32>
    %22 = vector.multi_reduction <maximumf>, %21, %cst_11 [2] : vector<1x8x8xf32> to vector<1x8xf32>
    %23 = vector.shape_cast %22 : vector<1x8xf32> to vector<1x8x1xf32>
    %24 = vector.broadcast %23 : vector<1x8x1xf32> to vector<1x8x8xf32>
    %25 = arith.subf %21, %24 : vector<1x8x8xf32>
    %26 = math.exp %25 : vector<1x8x8xf32>
    %cst_12 = arith.constant dense<0.000000e+00> : vector<1x8xf32>
    %27 = vector.multi_reduction <add>, %26, %cst_12 [2] : vector<1x8x8xf32> to vector<1x8xf32>
    %28 = vector.shape_cast %27 : vector<1x8xf32> to vector<1x8x1xf32>
    %29 = tpu.reciprocal %28 {approx = true} : vector<1x8x1xf32> -> vector<1x8x1xf32>
    %30 = vector.broadcast %29 : vector<1x8x1xf32> to vector<1x8x8xf32>
    %31 = arith.mulf %26, %30 : vector<1x8x8xf32>
    %32 = arith.truncf %31 : vector<1x8x8xf32> to vector<1x8x8xbf16>
    "tpu.trace_start"() <{level = 10 : i32, message = "bqk,bkd->bqd"}> : () -> ()
    %cst_13 = arith.constant dense<0.000000e+00> : vector<1x8x32xf32>
    %33 = tpu.matmul %32, %18, %cst_13 {dimension_numbers = #tpu.dot_dimension_numbers<[2], [1], [1], [2], [0, 0, 0, 1, 1, 2], [0], [0]>} : vector<1x8x8xbf16>, vector<1x8x32xbf16>, vector<1x8x32xf32> -> vector<1x8x32xf32>
    "tpu.trace_stop"() : () -> ()
    %34 = vector.shape_cast %33 : vector<1x8x32xf32> to vector<8x32xf32>
    %35 = arith.truncf %34 : vector<8x32xf32> to vector<8x32xbf16>
    %36 = vector.extract_strided_slice %8 {offsets = [0, 0], sizes = [32, 128], strides = [1, 1]} : vector<128x128xbf16> to vector<32x128xbf16>
    %cst_14 = arith.constant dense<0.000000e+00> : vector<8x128xf32>
    %37 = tpu.matmul %35, %36, %cst_14 {dimension_numbers = #tpu.dot_dimension_numbers<[1], [0], [0], [1], [0, 0, 1, 1], [], []>} : vector<8x32xbf16>, vector<32x128xbf16>, vector<8x128xf32> -> vector<8x128xf32>
    %38 = arith.addf %9, %37 : vector<8x128xf32>
    %39 = vector.extract_strided_slice %7 {offsets = [0, 32], sizes = [8, 32], strides = [1, 1]} : vector<8x384xf32> to vector<8x32xf32>
    %40 = vector.extract_strided_slice %7 {offsets = [0, 160], sizes = [8, 32], strides = [1, 1]} : vector<8x384xf32> to vector<8x32xf32>
    %41 = vector.extract_strided_slice %7 {offsets = [0, 288], sizes = [8, 32], strides = [1, 1]} : vector<8x384xf32> to vector<8x32xf32>
    %42 = vector.shape_cast %39 : vector<8x32xf32> to vector<1x8x32xf32>
    %43 = arith.truncf %42 : vector<1x8x32xf32> to vector<1x8x32xbf16>
    %44 = vector.shape_cast %40 : vector<8x32xf32> to vector<1x8x32xf32>
    %45 = arith.truncf %44 : vector<1x8x32xf32> to vector<1x8x32xbf16>
    %46 = vector.shape_cast %41 : vector<8x32xf32> to vector<1x8x32xf32>
    %47 = arith.truncf %46 : vector<1x8x32xf32> to vector<1x8x32xbf16>
    "tpu.trace_start"() <{level = 10 : i32, message = "bqd,bkd->bqk"}> : () -> ()
    %cst_15 = arith.constant dense<0.000000e+00> : vector<1x8x8xf32>
    %48 = tpu.matmul %43, %45, %cst_15 {dimension_numbers = #tpu.dot_dimension_numbers<[2], [2], [1], [1], [0, 0, 0, 1, 1, 1], [0], [0]>} : vector<1x8x32xbf16>, vector<1x8x32xbf16>, vector<1x8x8xf32> -> vector<1x8x8xf32>
    "tpu.trace_stop"() : () -> ()
    %cst_16 = arith.constant 0.353553385 : f32
    %49 = vector.broadcast %cst_16 : f32 to vector<1x8x8xf32>
    %50 = arith.mulf %48, %49 : vector<1x8x8xf32>
    %cst_17 = arith.constant dense<0xFF800000> : vector<1x8xf32>
    %51 = vector.multi_reduction <maximumf>, %50, %cst_17 [2] : vector<1x8x8xf32> to vector<1x8xf32>
    %52 = vector.shape_cast %51 : vector<1x8xf32> to vector<1x8x1xf32>
    %53 = vector.broadcast %52 : vector<1x8x1xf32> to vector<1x8x8xf32>
    %54 = arith.subf %50, %53 : vector<1x8x8xf32>
    %55 = math.exp %54 : vector<1x8x8xf32>
    %cst_18 = arith.constant dense<0.000000e+00> : vector<1x8xf32>
    %56 = vector.multi_reduction <add>, %55, %cst_18 [2] : vector<1x8x8xf32> to vector<1x8xf32>
    %57 = vector.shape_cast %56 : vector<1x8xf32> to vector<1x8x1xf32>
    %58 = tpu.reciprocal %57 {approx = true} : vector<1x8x1xf32> -> vector<1x8x1xf32>
    %59 = vector.broadcast %58 : vector<1x8x1xf32> to vector<1x8x8xf32>
    %60 = arith.mulf %55, %59 : vector<1x8x8xf32>
    %61 = arith.truncf %60 : vector<1x8x8xf32> to vector<1x8x8xbf16>
    "tpu.trace_start"() <{level = 10 : i32, message = "bqk,bkd->bqd"}> : () -> ()
    %cst_19 = arith.constant dense<0.000000e+00> : vector<1x8x32xf32>
    %62 = tpu.matmul %61, %47, %cst_19 {dimension_numbers = #tpu.dot_dimension_numbers<[2], [1], [1], [2], [0, 0, 0, 1, 1, 2], [0], [0]>} : vector<1x8x8xbf16>, vector<1x8x32xbf16>, vector<1x8x32xf32> -> vector<1x8x32xf32>
    "tpu.trace_stop"() : () -> ()
    %63 = vector.shape_cast %62 : vector<1x8x32xf32> to vector<8x32xf32>
    %64 = arith.truncf %63 : vector<8x32xf32> to vector<8x32xbf16>
    %65 = vector.extract_strided_slice %8 {offsets = [32, 0], sizes = [32, 128], strides = [1, 1]} : vector<128x128xbf16> to vector<32x128xbf16>
    %cst_20 = arith.constant dense<0.000000e+00> : vector<8x128xf32>
    %66 = tpu.matmul %64, %65, %cst_20 {dimension_numbers = #tpu.dot_dimension_numbers<[1], [0], [0], [1], [0, 0, 1, 1], [], []>} : vector<8x32xbf16>, vector<32x128xbf16>, vector<8x128xf32> -> vector<8x128xf32>
    %67 = arith.addf %38, %66 : vector<8x128xf32>
    %68 = vector.extract_strided_slice %7 {offsets = [0, 64], sizes = [8, 32], strides = [1, 1]} : vector<8x384xf32> to vector<8x32xf32>
    %69 = vector.extract_strided_slice %7 {offsets = [0, 192], sizes = [8, 32], strides = [1, 1]} : vector<8x384xf32> to vector<8x32xf32>
    %70 = vector.extract_strided_slice %7 {offsets = [0, 320], sizes = [8, 32], strides = [1, 1]} : vector<8x384xf32> to vector<8x32xf32>
    %71 = vector.shape_cast %68 : vector<8x32xf32> to vector<1x8x32xf32>
    %72 = arith.truncf %71 : vector<1x8x32xf32> to vector<1x8x32xbf16>
    %73 = vector.shape_cast %69 : vector<8x32xf32> to vector<1x8x32xf32>
    %74 = arith.truncf %73 : vector<1x8x32xf32> to vector<1x8x32xbf16>
    %75 = vector.shape_cast %70 : vector<8x32xf32> to vector<1x8x32xf32>
    %76 = arith.truncf %75 : vector<1x8x32xf32> to vector<1x8x32xbf16>
    "tpu.trace_start"() <{level = 10 : i32, message = "bqd,bkd->bqk"}> : () -> ()
    %cst_21 = arith.constant dense<0.000000e+00> : vector<1x8x8xf32>
    %77 = tpu.matmul %72, %74, %cst_21 {dimension_numbers = #tpu.dot_dimension_numbers<[2], [2], [1], [1], [0, 0, 0, 1, 1, 1], [0], [0]>} : vector<1x8x32xbf16>, vector<1x8x32xbf16>, vector<1x8x8xf32> -> vector<1x8x8xf32>
    "tpu.trace_stop"() : () -> ()
    %cst_22 = arith.constant 0.353553385 : f32
    %78 = vector.broadcast %cst_22 : f32 to vector<1x8x8xf32>
    %79 = arith.mulf %77, %78 : vector<1x8x8xf32>
    %cst_23 = arith.constant dense<0xFF800000> : vector<1x8xf32>
    %80 = vector.multi_reduction <maximumf>, %79, %cst_23 [2] : vector<1x8x8xf32> to vector<1x8xf32>
    %81 = vector.shape_cast %80 : vector<1x8xf32> to vector<1x8x1xf32>
    %82 = vector.broadcast %81 : vector<1x8x1xf32> to vector<1x8x8xf32>
    %83 = arith.subf %79, %82 : vector<1x8x8xf32>
    %84 = math.exp %83 : vector<1x8x8xf32>
    %cst_24 = arith.constant dense<0.000000e+00> : vector<1x8xf32>
    %85 = vector.multi_reduction <add>, %84, %cst_24 [2] : vector<1x8x8xf32> to vector<1x8xf32>
    %86 = vector.shape_cast %85 : vector<1x8xf32> to vector<1x8x1xf32>
    %87 = tpu.reciprocal %86 {approx = true} : vector<1x8x1xf32> -> vector<1x8x1xf32>
    %88 = vector.broadcast %87 : vector<1x8x1xf32> to vector<1x8x8xf32>
    %89 = arith.mulf %84, %88 : vector<1x8x8xf32>
    %90 = arith.truncf %89 : vector<1x8x8xf32> to vector<1x8x8xbf16>
    "tpu.trace_start"() <{level = 10 : i32, message = "bqk,bkd->bqd"}> : () -> ()
    %cst_25 = arith.constant dense<0.000000e+00> : vector<1x8x32xf32>
    %91 = tpu.matmul %90, %76, %cst_25 {dimension_numbers = #tpu.dot_dimension_numbers<[2], [1], [1], [2], [0, 0, 0, 1, 1, 2], [0], [0]>} : vector<1x8x8xbf16>, vector<1x8x32xbf16>, vector<1x8x32xf32> -> vector<1x8x32xf32>
    "tpu.trace_stop"() : () -> ()
    %92 = vector.shape_cast %91 : vector<1x8x32xf32> to vector<8x32xf32>
    %93 = arith.truncf %92 : vector<8x32xf32> to vector<8x32xbf16>
    %94 = vector.extract_strided_slice %8 {offsets = [64, 0], sizes = [32, 128], strides = [1, 1]} : vector<128x128xbf16> to vector<32x128xbf16>
    %cst_26 = arith.constant dense<0.000000e+00> : vector<8x128xf32>
    %95 = tpu.matmul %93, %94, %cst_26 {dimension_numbers = #tpu.dot_dimension_numbers<[1], [0], [0], [1], [0, 0, 1, 1], [], []>} : vector<8x32xbf16>, vector<32x128xbf16>, vector<8x128xf32> -> vector<8x128xf32>
    %96 = arith.addf %67, %95 : vector<8x128xf32>
    %97 = vector.extract_strided_slice %7 {offsets = [0, 96], sizes = [8, 32], strides = [1, 1]} : vector<8x384xf32> to vector<8x32xf32>
    %98 = vector.extract_strided_slice %7 {offsets = [0, 224], sizes = [8, 32], strides = [1, 1]} : vector<8x384xf32> to vector<8x32xf32>
    %99 = vector.extract_strided_slice %7 {offsets = [0, 352], sizes = [8, 32], strides = [1, 1]} : vector<8x384xf32> to vector<8x32xf32>
    %100 = vector.shape_cast %97 : vector<8x32xf32> to vector<1x8x32xf32>
    %101 = arith.truncf %100 : vector<1x8x32xf32> to vector<1x8x32xbf16>
    %102 = vector.shape_cast %98 : vector<8x32xf32> to vector<1x8x32xf32>
    %103 = arith.truncf %102 : vector<1x8x32xf32> to vector<1x8x32xbf16>
    %104 = vector.shape_cast %99 : vector<8x32xf32> to vector<1x8x32xf32>
    %105 = arith.truncf %104 : vector<1x8x32xf32> to vector<1x8x32xbf16>
    "tpu.trace_start"() <{level = 10 : i32, message = "bqd,bkd->bqk"}> : () -> ()
    %cst_27 = arith.constant dense<0.000000e+00> : vector<1x8x8xf32>
    %106 = tpu.matmul %101, %103, %cst_27 {dimension_numbers = #tpu.dot_dimension_numbers<[2], [2], [1], [1], [0, 0, 0, 1, 1, 1], [0], [0]>} : vector<1x8x32xbf16>, vector<1x8x32xbf16>, vector<1x8x8xf32> -> vector<1x8x8xf32>
    "tpu.trace_stop"() : () -> ()
    %cst_28 = arith.constant 0.353553385 : f32
    %107 = vector.broadcast %cst_28 : f32 to vector<1x8x8xf32>
    %108 = arith.mulf %106, %107 : vector<1x8x8xf32>
    %cst_29 = arith.constant dense<0xFF800000> : vector<1x8xf32>
    %109 = vector.multi_reduction <maximumf>, %108, %cst_29 [2] : vector<1x8x8xf32> to vector<1x8xf32>
    %110 = vector.shape_cast %109 : vector<1x8xf32> to vector<1x8x1xf32>
    %111 = vector.broadcast %110 : vector<1x8x1xf32> to vector<1x8x8xf32>
    %112 = arith.subf %108, %111 : vector<1x8x8xf32>
    %113 = math.exp %112 : vector<1x8x8xf32>
    %cst_30 = arith.constant dense<0.000000e+00> : vector<1x8xf32>
    %114 = vector.multi_reduction <add>, %113, %cst_30 [2] : vector<1x8x8xf32> to vector<1x8xf32>
    %115 = vector.shape_cast %114 : vector<1x8xf32> to vector<1x8x1xf32>
    %116 = tpu.reciprocal %115 {approx = true} : vector<1x8x1xf32> -> vector<1x8x1xf32>
    %117 = vector.broadcast %116 : vector<1x8x1xf32> to vector<1x8x8xf32>
    %118 = arith.mulf %113, %117 : vector<1x8x8xf32>
    %119 = arith.truncf %118 : vector<1x8x8xf32> to vector<1x8x8xbf16>
    "tpu.trace_start"() <{level = 10 : i32, message = "bqk,bkd->bqd"}> : () -> ()
    %cst_31 = arith.constant dense<0.000000e+00> : vector<1x8x32xf32>
    %120 = tpu.matmul %119, %105, %cst_31 {dimension_numbers = #tpu.dot_dimension_numbers<[2], [1], [1], [2], [0, 0, 0, 1, 1, 2], [0], [0]>} : vector<1x8x8xbf16>, vector<1x8x32xbf16>, vector<1x8x32xf32> -> vector<1x8x32xf32>
    "tpu.trace_stop"() : () -> ()
    %121 = vector.shape_cast %120 : vector<1x8x32xf32> to vector<8x32xf32>
    %122 = arith.truncf %121 : vector<8x32xf32> to vector<8x32xbf16>
    %123 = vector.extract_strided_slice %8 {offsets = [96, 0], sizes = [32, 128], strides = [1, 1]} : vector<128x128xbf16> to vector<32x128xbf16>
    %cst_32 = arith.constant dense<0.000000e+00> : vector<8x128xf32>
    %124 = tpu.matmul %122, %123, %cst_32 {dimension_numbers = #tpu.dot_dimension_numbers<[1], [0], [0], [1], [0, 0, 1, 1], [], []>} : vector<8x32xbf16>, vector<32x128xbf16>, vector<8x128xf32> -> vector<8x128xf32>
    %125 = arith.addf %96, %124 : vector<8x128xf32>
    %c0_33 = arith.constant 0 : index
    %c0_34 = arith.constant 0 : index
    %126 = vector.load %arg5[%c0_33, %c0_34] : memref<1x128xf32, #tpu.memory_space<vmem>>, vector<1x128xf32>
    %127 = vector.broadcast %126 : vector<1x128xf32> to vector<8x128xf32>
    %128 = arith.addf %125, %127 : vector<8x128xf32>
    %129 = arith.addf %1, %128 : vector<8x128xf32>
    %c0_35 = arith.constant 0 : index
    %c0_36 = arith.constant 0 : index
    %130 = vector.load %arg10[%c0_35, %c0_36] : memref<1x128xf32, #tpu.memory_space<vmem>>, vector<1x128xf32>
    %c0_37 = arith.constant 0 : index
    %c0_38 = arith.constant 0 : index
    %131 = vector.load %arg11[%c0_37, %c0_38] : memref<1x128xf32, #tpu.memory_space<vmem>>, vector<1x128xf32>
    %cst_39 = arith.constant dense<0.000000e+00> : vector<8xf32>
    %132 = vector.multi_reduction <add>, %129, %cst_39 [1] : vector<8x128xf32> to vector<8xf32>
    %133 = vector.shape_cast %132 : vector<8xf32> to vector<8x1xf32>
    %cst_40 = arith.constant 3.125000e-02 : f32
    %134 = vector.broadcast %cst_40 : f32 to vector<8x1xf32>
    %135 = arith.mulf %133, %134 : vector<8x1xf32>
    %136 = arith.mulf %129, %129 : vector<8x128xf32>
    %cst_41 = arith.constant dense<0.000000e+00> : vector<8xf32>
    %137 = vector.multi_reduction <add>, %136, %cst_41 [1] : vector<8x128xf32> to vector<8xf32>
    %138 = vector.shape_cast %137 : vector<8xf32> to vector<8x1xf32>
    %cst_42 = arith.constant 3.125000e-02 : f32
    %139 = vector.broadcast %cst_42 : f32 to vector<8x1xf32>
    %140 = arith.mulf %138, %139 : vector<8x1xf32>
    %141 = arith.mulf %135, %135 : vector<8x1xf32>
    %142 = arith.subf %140, %141 : vector<8x1xf32>
    %143 = vector.broadcast %135 : vector<8x1xf32> to vector<8x128xf32>
    %144 = arith.subf %129, %143 : vector<8x128xf32>
    %cst_43 = arith.constant 9.99999974E-6 : f32
    %145 = vector.broadcast %cst_43 : f32 to vector<8x1xf32>
    %146 = arith.addf %142, %145 : vector<8x1xf32>
    %147 = math.rsqrt %146 : vector<8x1xf32>
    %148 = vector.broadcast %147 : vector<8x1xf32> to vector<8x128xf32>
    %149 = arith.mulf %144, %148 : vector<8x128xf32>
    %150 = vector.broadcast %130 : vector<1x128xf32> to vector<8x128xf32>
    %151 = arith.mulf %149, %150 : vector<8x128xf32>
    %152 = vector.broadcast %131 : vector<1x128xf32> to vector<8x128xf32>
    %153 = arith.addf %151, %152 : vector<8x128xf32>
    %154 = arith.truncf %153 : vector<8x128xf32> to vector<8x128xbf16>
    %cst_44 = arith.constant 0.000000e+00 : f32
    %155 = vector.broadcast %cst_44 : f32 to vector<8x128xf32>
    %c0_45 = arith.constant 0 : index
    %c0_46 = arith.constant 0 : index
    %156 = vector.load %arg6[%c0_45, %c0_46] : memref<128x128xbf16, #tpu.memory_space<vmem>>, vector<128x128xbf16>
    %cst_47 = arith.constant dense<0.000000e+00> : vector<8x128xf32>
    %157 = tpu.matmul %154, %156, %cst_47 {dimension_numbers = #tpu.dot_dimension_numbers<[1], [0], [0], [1], [0, 0, 1, 1], [], []>} : vector<8x128xbf16>, vector<128x128xbf16>, vector<8x128xf32> -> vector<8x128xf32>
    %c0_48 = arith.constant 0 : index
    %c0_49 = arith.constant 0 : index
    %158 = vector.load %arg7[%c0_48, %c0_49] : memref<1x128xf32, #tpu.memory_space<vmem>>, vector<1x128xf32>
    %159 = vector.broadcast %158 : vector<1x128xf32> to vector<8x128xf32>
    %160 = arith.addf %157, %159 : vector<8x128xf32>
    %cst_50 = arith.constant 0.000000e+00 : f32
    %161 = vector.broadcast %cst_50 : f32 to vector<8x128xf32>
    %162 = arith.maximumf %160, %161 : vector<8x128xf32>
    %163 = arith.truncf %162 : vector<8x128xf32> to vector<8x128xbf16>
    %c0_51 = arith.constant 0 : index
    %c0_52 = arith.constant 0 : index
    %164 = vector.load %arg8[%c0_51, %c0_52] : memref<128x128xbf16, #tpu.memory_space<vmem>>, vector<128x128xbf16>
    %cst_53 = arith.constant dense<0.000000e+00> : vector<8x128xf32>
    %165 = tpu.matmul %163, %164, %cst_53 {dimension_numbers = #tpu.dot_dimension_numbers<[1], [0], [0], [1], [0, 0, 1, 1], [], []>} : vector<8x128xbf16>, vector<128x128xbf16>, vector<8x128xf32> -> vector<8x128xf32>
    %166 = arith.addf %155, %165 : vector<8x128xf32>
    %c0_54 = arith.constant 0 : index
    %c0_55 = arith.constant 0 : index
    %167 = vector.load %arg9[%c0_54, %c0_55] : memref<1x128xf32, #tpu.memory_space<vmem>>, vector<1x128xf32>
    %168 = vector.broadcast %167 : vector<1x128xf32> to vector<8x128xf32>
    %169 = arith.addf %166, %168 : vector<8x128xf32>
    %170 = arith.addf %153, %169 : vector<8x128xf32>
    %c0_56 = arith.constant 0 : index
    %c0_57 = arith.constant 0 : index
    %171 = vector.load %arg12[%c0_56, %c0_57] : memref<1x128xf32, #tpu.memory_space<vmem>>, vector<1x128xf32>
    %c0_58 = arith.constant 0 : index
    %c0_59 = arith.constant 0 : index
    %172 = vector.load %arg13[%c0_58, %c0_59] : memref<1x128xf32, #tpu.memory_space<vmem>>, vector<1x128xf32>
    %cst_60 = arith.constant dense<0.000000e+00> : vector<8xf32>
    %173 = vector.multi_reduction <add>, %170, %cst_60 [1] : vector<8x128xf32> to vector<8xf32>
    %174 = vector.shape_cast %173 : vector<8xf32> to vector<8x1xf32>
    %cst_61 = arith.constant 3.125000e-02 : f32
    %175 = vector.broadcast %cst_61 : f32 to vector<8x1xf32>
    %176 = arith.mulf %174, %175 : vector<8x1xf32>
    %177 = arith.mulf %170, %170 : vector<8x128xf32>
    %cst_62 = arith.constant dense<0.000000e+00> : vector<8xf32>
    %178 = vector.multi_reduction <add>, %177, %cst_62 [1] : vector<8x128xf32> to vector<8xf32>
    %179 = vector.shape_cast %178 : vector<8xf32> to vector<8x1xf32>
    %cst_63 = arith.constant 3.125000e-02 : f32
    %180 = vector.broadcast %cst_63 : f32 to vector<8x1xf32>
    %181 = arith.mulf %179, %180 : vector<8x1xf32>
    %182 = arith.mulf %176, %176 : vector<8x1xf32>
    %183 = arith.subf %181, %182 : vector<8x1xf32>
    %184 = vector.broadcast %176 : vector<8x1xf32> to vector<8x128xf32>
    %185 = arith.subf %170, %184 : vector<8x128xf32>
    %cst_64 = arith.constant 9.99999974E-6 : f32
    %186 = vector.broadcast %cst_64 : f32 to vector<8x1xf32>
    %187 = arith.addf %183, %186 : vector<8x1xf32>
    %188 = math.rsqrt %187 : vector<8x1xf32>
    %189 = vector.broadcast %188 : vector<8x1xf32> to vector<8x128xf32>
    %190 = arith.mulf %185, %189 : vector<8x128xf32>
    %191 = vector.broadcast %171 : vector<1x128xf32> to vector<8x128xf32>
    %192 = arith.mulf %190, %191 : vector<8x128xf32>
    %193 = vector.broadcast %172 : vector<1x128xf32> to vector<8x128xf32>
    %194 = arith.addf %192, %193 : vector<8x128xf32>
    %195 = vector.shape_cast %194 : vector<8x128xf32> to vector<1x8x128xf32>
    %c0_65 = arith.constant 0 : index
    %c0_66 = arith.constant 0 : index
    %c0_67 = arith.constant 0 : index
    %196 = vector.load %arg14[%c0_65, %c0_66, %c0_67] : memref<1x8x128xf32, #tpu.memory_space<vmem>>, vector<1x8x128xf32>
    tpu.vector_store %arg14[%c0_65, %c0_66, %c0_67], %195 {strides = array<i32>} : memref<1x8x128xf32, #tpu.memory_space<vmem>>, vector<1x8x128xf32>,
    return
  }
  func.func @transform_0(%arg0: i32) -> (i32, i32, i32) {
    %c0_i32 = arith.constant 0 : i32
    %c0_i32_0 = arith.constant 0 : i32
    %c0_i32_1 = arith.constant 0 : i32
    return %arg0, %c0_i32, %c0_i32_0 : i32, i32, i32
  }
  func.func @transform_1(%arg0: i32) -> (i32, i32) {
    %c0_i32 = arith.constant 0 : i32
    %c0_i32_0 = arith.constant 0 : i32
    %c0_i32_1 = arith.constant 0 : i32
    return %c0_i32, %c0_i32_0 : i32, i32
  }
  func.func @transform_2(%arg0: i32) -> (i32, i32) {
    %c0_i32 = arith.constant 0 : i32
    %c0_i32_0 = arith.constant 0 : i32
    %c0_i32_1 = arith.constant 0 : i32
    return %c0_i32, %c0_i32_0 : i32, i32
  }
  func.func @transform_3(%arg0: i32) -> (i32, i32) {
    %c0_i32 = arith.constant 0 : i32
    %c0_i32_0 = arith.constant 0 : i32
    %c0_i32_1 = arith.constant 0 : i32
    return %c0_i32, %c0_i32_0 : i32, i32
  }
  func.func @transform_4(%arg0: i32) -> (i32, i32) {
    %c0_i32 = arith.constant 0 : i32
    %c0_i32_0 = arith.constant 0 : i32
    %c0_i32_1 = arith.constant 0 : i32
    return %c0_i32, %c0_i32_0 : i32, i32
  }
  func.func @transform_5(%arg0: i32) -> (i32, i32) {
    %c0_i32 = arith.constant 0 : i32
    %c0_i32_0 = arith.constant 0 : i32
    %c0_i32_1 = arith.constant 0 : i32
    return %c0_i32, %c0_i32_0 : i32, i32
  }
  func.func @transform_6(%arg0: i32) -> (i32, i32) {
    %c0_i32 = arith.constant 0 : i32
    %c0_i32_0 = arith.constant 0 : i32
    %c0_i32_1 = arith.constant 0 : i32
    return %c0_i32, %c0_i32_0 : i32, i32
  }
  func.func @transform_7(%arg0: i32) -> (i32, i32) {
    %c0_i32 = arith.constant 0 : i32
    %c0_i32_0 = arith.constant 0 : i32
    %c0_i32_1 = arith.constant 0 : i32
    return %c0_i32, %c0_i32_0 : i32, i32
  }
  func.func @transform_8(%arg0: i32) -> (i32, i32) {
    %c0_i32 = arith.constant 0 : i32
    %c0_i32_0 = arith.constant 0 : i32
    %c0_i32_1 = arith.constant 0 : i32
    return %c0_i32, %c0_i32_0 : i32, i32
  }
  func.func @transform_9(%arg0: i32) -> (i32, i32) {
    %c0_i32 = arith.constant 0 : i32
    %c0_i32_0 = arith.constant 0 : i32
    %c0_i32_1 = arith.constant 0 : i32
    return %c0_i32, %c0_i32_0 : i32, i32
  }
  func.func @transform_10(%arg0: i32) -> (i32, i32) {
    %c0_i32 = arith.constant 0 : i32
    %c0_i32_0 = arith.constant 0 : i32
    %c0_i32_1 = arith.constant 0 : i32
    return %c0_i32, %c0_i32_0 : i32, i32
  }
  func.func @transform_11(%arg0: i32) -> (i32, i32) {
    %c0_i32 = arith.constant 0 : i32
    %c0_i32_0 = arith.constant 0 : i32
    %c0_i32_1 = arith.constant 0 : i32
    return %c0_i32, %c0_i32_0 : i32, i32
  }
  func.func @transform_12(%arg0: i32) -> (i32, i32) {
    %c0_i32 = arith.constant 0 : i32
    %c0_i32_0 = arith.constant 0 : i32
    %c0_i32_1 = arith.constant 0 : i32
    return %c0_i32, %c0_i32_0 : i32, i32
  }
  func.func @transform_13(%arg0: i32) -> (i32, i32, i32) {
    %c0_i32 = arith.constant 0 : i32
    %c0_i32_0 = arith.constant 0 : i32
    %c0_i32_1 = arith.constant 0 : i32
    return %arg0, %c0_i32, %c0_i32_0 : i32, i32, i32
  }
}

module attributes {stable_mosaic.version = 11 : i64} {
  func.func @encoder_block_kernel(%arg0: i32, %arg1: memref<1x8x128xf32, #tpu.memory_space<vmem>>, %arg2: memref<128x384xbf16, #tpu.memory_space<vmem>>, %arg3: memref<1x384xf32, #tpu.memory_space<vmem>>, %arg4: memref<128x128xbf16, #tpu.memory_space<vmem>>, %arg5: memref<1x128xf32, #tpu.memory_space<vmem>>, %arg6: memref<128x128xbf16, #tpu.memory_space<vmem>>, %arg7: memref<1x128xf32, #tpu.memory_space<vmem>>, %arg8: memref<128x128xbf16, #tpu.memory_space<vmem>>, %arg9: memref<1x128xf32, #tpu.memory_space<vmem>>, %arg10: memref<1x128xf32, #tpu.memory_space<vmem>>, %arg11: memref<1x128xf32, #tpu.memory_space<vmem>>, %arg12: memref<1x128xf32, #tpu.memory_space<vmem>>, %arg13: memref<1x128xf32, #tpu.memory_space<vmem>>, %arg14: memref<1x8x128xf32, #tpu.memory_space<vmem>>) attributes {dimension_semantics = [#tpu.dimension_semantics<parallel>], iteration_bounds = array<i64: 2>, scalar_prefetch = 0 : i64, scratch_operands = 0 : i64, tpu.core_type = #tpu.core_type<tc>, window_params = [{transform_indices = @transform_0, window_bounds = array<i64: 1, 8, 128>}, {pipeline_mode = #tpu.pipeline_mode<synchronous>, transform_indices = @transform_1, window_bounds = array<i64: 128, 384>}, {pipeline_mode = #tpu.pipeline_mode<synchronous>, transform_indices = @transform_2, window_bounds = array<i64: 1, 384>}, {pipeline_mode = #tpu.pipeline_mode<synchronous>, transform_indices = @transform_3, window_bounds = array<i64: 128, 128>}, {pipeline_mode = #tpu.pipeline_mode<synchronous>, transform_indices = @transform_4, window_bounds = array<i64: 1, 128>}, {pipeline_mode = #tpu.pipeline_mode<synchronous>, transform_indices = @transform_5, window_bounds = array<i64: 128, 128>}, {pipeline_mode = #tpu.pipeline_mode<synchronous>, transform_indices = @transform_6, window_bounds = array<i64: 1, 128>}, {pipeline_mode = #tpu.pipeline_mode<synchronous>, transform_indices = @transform_7, window_bounds = array<i64: 128, 128>}, {pipeline_mode = #tpu.pipeline_mode<synchronous>, transform_indices = @transform_8, window_bounds = array<i64: 1, 128>}, {pipeline_mode = #tpu.pipeline_mode<synchronous>, transform_indices = @transform_9, window_bounds = array<i64: 1, 128>}, {pipeline_mode = #tpu.pipeline_mode<synchronous>, transform_indices = @transform_10, window_bounds = array<i64: 1, 128>}, {pipeline_mode = #tpu.pipeline_mode<synchronous>, transform_indices = @transform_11, window_bounds = array<i64: 1, 128>}, {pipeline_mode = #tpu.pipeline_mode<synchronous>, transform_indices = @transform_12, window_bounds = array<i64: 1, 128>}, {transform_indices = @transform_13, window_bounds = array<i64: 1, 8, 128>}]} {
    %c0 = arith.constant 0 : index
    %c0_0 = arith.constant 0 : index
    %c0_1 = arith.constant 0 : index
    %0 = vector.load %arg1[%c0, %c0_0, %c0_1] : memref<1x8x128xf32, #tpu.memory_space<vmem>>, vector<1x8x128xf32>
    %1 = vector.shape_cast %0 : vector<1x8x128xf32> to vector<8x128xf32>
    %2 = arith.truncf %1 : vector<8x128xf32> to vector<8x128xbf16>
    %c0_2 = arith.constant 0 : index
    %c0_3 = arith.constant 0 : index
    %3 = vector.load %arg2[%c0_2, %c0_3] : memref<128x384xbf16, #tpu.memory_space<vmem>>, vector<128x384xbf16>
    %cst = arith.constant dense<0.000000e+00> : vector<8x384xf32>
    %4 = tpu.matmul %2, %3, %cst {dimension_numbers = #tpu.dot_dimension_numbers<[1], [0], [0], [1], [0, 0, 1, 1], [], []>} : vector<8x128xbf16>, vector<128x384xbf16>, vector<8x384xf32> -> vector<8x384xf32>
    %c0_4 = arith.constant 0 : index
    %c0_5 = arith.constant 0 : index
    %5 = vector.load %arg3[%c0_4, %c0_5] : memref<1x384xf32, #tpu.memory_space<vmem>>, vector<1x384xf32>
    %6 = vector.broadcast %5 : vector<1x384xf32> to vector<8x384xf32>
    %7 = arith.addf %4, %6 : vector<8x384xf32>
    %c0_6 = arith.constant 0 : index
    %c0_7 = arith.constant 0 : index
    %8 = vector.load %arg4[%c0_6, %c0_7] : memref<128x128xbf16, #tpu.memory_space<vmem>>, vector<128x128xbf16>
    %cst_8 = arith.constant 0.000000e+00 : f32
    %9 = vector.broadcast %cst_8 : f32 to vector<8x128xf32>
    %10 = vector.extract_strided_slice %7 {offsets = [0, 0], sizes = [8, 32], strides = [1, 1]} : vector<8x384xf32> to vector<8x32xf32>
    %11 = vector.extract_strided_slice %7 {offsets = [0, 128], sizes = [8, 32], strides = [1, 1]} : vector<8x384xf32> to vector<8x32xf32>
    %12 = vector.extract_strided_slice %7 {offsets = [0, 256], sizes = [8, 32], strides = [1, 1]} : vector<8x384xf32> to vector<8x32xf32>
    %13 = vector.shape_cast %10 : vector<8x32xf32> to vector<1x8x32xf32>
    %14 = arith.truncf %13 : vector<1x8x32xf32> to vector<1x8x32xbf16>
    %15 = vector.shape_cast %11 : vector<8x32xf32> to vector<1x8x32xf32>
    %16 = arith.truncf %15 : vector<1x8x32xf32> to vector<1x8x32xbf16>
    %17 = vector.shape_cast %12 : vector<8x32xf32> to vector<1x8x32xf32>
    %18 = arith.truncf %17 : vector<1x8x32xf32> to vector<1x8x32xbf16>
    "tpu.trace_start"() <{level = 10 : i32, message = "bqd,bkd->bqk"}> : () -> ()
    %cst_9 = arith.constant dense<0.000000e+00> : vector<1x8x8xf32>
    %19 = tpu.matmul %14, %16, %cst_9 {dimension_numbers = #tpu.dot_dimension_numbers<[2], [2], [1], [1], [0, 0, 0, 1, 1, 1], [0], [0]>} : vector<1x8x32xbf16>, vector<1x8x32xbf16>, vector<1x8x8xf32> -> vector<1x8x8xf32>
    "tpu.trace_stop"() : () -> ()
    %cst_10 = arith.constant 0.353553385 : f32
    %20 = vector.broadcast %cst_10 : f32 to vector<1x8x8xf32>
    %21 = arith.mulf %19, %20 : vector<1x8x8xf32>
    %cst_11 = arith.constant dense<0xFF800000> : vector<1x8xf32>
    %22 = vector.multi_reduction <maximumf>, %21, %cst_11 [2] : vector<1x8x8xf32> to vector<1x8xf32>
    %23 = vector.shape_cast %22 : vector<1x8xf32> to vector<1x8x1xf32>
    %24 = vector.broadcast %23 : vector<1x8x1xf32> to vector<1x8x8xf32>
    %25 = arith.subf %21, %24 : vector<1x8x8xf32>
    %26 = math.exp %25 : vector<1x8x8xf32>
    %cst_12 = arith.constant dense<0.000000e+00> : vector<1x8xf32>
    %27 = vector.multi_reduction <add>, %26, %cst_12 [2] : vector<1x8x8xf32> to vector<1x8xf32>
    %28 = vector.shape_cast %27 : vector<1x8xf32> to vector<1x8x1xf32>
    %29 = tpu.reciprocal %28 {approx = true} : vector<1x8x1xf32> -> vector<1x8x1xf32>
    %30 = vector.broadcast %29 : vector<1x8x1xf32> to vector<1x8x8xf32>
    %31 = arith.mulf %26, %30 : vector<1x8x8xf32>
    %32 = arith.truncf %31 : vector<1x8x8xf32> to vector<1x8x8xbf16>
    "tpu.trace_start"() <{level = 10 : i32, message = "bqk,bkd->bqd"}> : () -> ()
    %cst_13 = arith.constant dense<0.000000e+00> : vector<1x8x32xf32>
    %33 = tpu.matmul %32, %18, %cst_13 {dimension_numbers = #tpu.dot_dimension_numbers<[2], [1], [1], [2], [0, 0, 0, 1, 1, 2], [0], [0]>} : vector<1x8x8xbf16>, vector<1x8x32xbf16>, vector<1x8x32xf32> -> vector<1x8x32xf32>
    "tpu.trace_stop"() : () -> ()
    %34 = vector.shape_cast %33 : vector<1x8x32xf32> to vector<8x32xf32>
    %35 = arith.truncf %34 : vector<8x32xf32> to vector<8x32xbf16>
    %36 = vector.extract_strided_slice %8 {offsets = [0, 0], sizes = [32, 128], strides = [1, 1]} : vector<128x128xbf16> to vector<32x128xbf16>
    %cst_14 = arith.constant dense<0.000000e+00> : vector<8x128xf32>
    %37 = tpu.matmul %35, %36, %cst_14 {dimension_numbers = #tpu.dot_dimension_numbers<[1], [0], [0], [1], [0, 0, 1, 1], [], []>} : vector<8x32xbf16>, vector<32x128xbf16>, vector<8x128xf32> -> vector<8x128xf32>
    %38 = arith.addf %9, %37 : vector<8x128xf32>
    %39 = vector.extract_strided_slice %7 {offsets = [0, 32], sizes = [8, 32], strides = [1, 1]} : vector<8x384xf32> to vector<8x32xf32>
    %40 = vector.extract_strided_slice %7 {offsets = [0, 160], sizes = [8, 32], strides = [1, 1]} : vector<8x384xf32> to vector<8x32xf32>
    %41 = vector.extract_strided_slice %7 {offsets = [0, 288], sizes = [8, 32], strides = [1, 1]} : vector<8x384xf32> to vector<8x32xf32>
    %42 = vector.shape_cast %39 : vector<8x32xf32> to vector<1x8x32xf32>
    %43 = arith.truncf %42 : vector<1x8x32xf32> to vector<1x8x32xbf16>
    %44 = vector.shape_cast %40 : vector<8x32xf32> to vector<1x8x32xf32>
    %45 = arith.truncf %44 : vector<1x8x32xf32> to vector<1x8x32xbf16>
    %46 = vector.shape_cast %41 : vector<8x32xf32> to vector<1x8x32xf32>
    %47 = arith.truncf %46 : vector<1x8x32xf32> to vector<1x8x32xbf16>
    "tpu.trace_start"() <{level = 10 : i32, message = "bqd,bkd->bqk"}> : () -> ()
    %cst_15 = arith.constant dense<0.000000e+00> : vector<1x8x8xf32>
    %48 = tpu.matmul %43, %45, %cst_15 {dimension_numbers = #tpu.dot_dimension_numbers<[2], [2], [1], [1], [0, 0, 0, 1, 1, 1], [0], [0]>} : vector<1x8x32xbf16>, vector<1x8x32xbf16>, vector<1x8x8xf32> -> vector<1x8x8xf32>
    "tpu.trace_stop"() : () -> ()
    %cst_16 = arith.constant 0.353553385 : f32
    %49 = vector.broadcast %cst_16 : f32 to vector<1x8x8xf32>
    %50 = arith.mulf %48, %49 : vector<1x8x8xf32>
    %cst_17 = arith.constant dense<0xFF800000> : vector<1x8xf32>
    %51 = vector.multi_reduction <maximumf>, %50, %cst_17 [2] : vector<1x8x8xf32> to vector<1x8xf32>
    %52 = vector.shape_cast %51 : vector<1x8xf32> to vector<1x8x1xf32>
    %53 = vector.broadcast %52 : vector<1x8x1xf32> to vector<1x8x8xf32>
    %54 = arith.subf %50, %53 : vector<1x8x8xf32>
    %55 = math.exp %54 : vector<1x8x8xf32>
    %cst_18 = arith.constant dense<0.000000e+00> : vector<1x8xf32>
    %56 = vector.multi_reduction <add>, %55, %cst_18 [2] : vector<1x8x8xf32> to vector<1x8xf32>
    %57 = vector.shape_cast %56 : vector<1x8xf32> to vector<1x8x1xf32>
    %58 = tpu.reciprocal %57 {approx = true} : vector<1x8x1xf32> -> vector<1x8x1xf32>
    %59 = vector.broadcast %58 : vector<1x8x1xf32> to vector<1x8x8xf32>
    %60 = arith.mulf %55, %59 : vector<1x8x8xf32>
    %61 = arith.truncf %60 : vector<1x8x8xf32> to vector<1x8x8xbf16>
    "tpu.trace_start"() <{level = 10 : i32, message = "bqk,bkd->bqd"}> : () -> ()
    %cst_19 = arith.constant dense<0.000000e+00> : vector<1x8x32xf32>
    %62 = tpu.matmul %61, %47, %cst_19 {dimension_numbers = #tpu.dot_dimension_numbers<[2], [1], [1], [2], [0, 0, 0, 1, 1, 2], [0], [0]>} : vector<1x8x8xbf16>, vector<1x8x32xbf16>, vector<1x8x32xf32> -> vector<1x8x32xf32>
    "tpu.trace_stop"() : () -> ()
    %63 = vector.shape_cast %62 : vector<1x8x32xf32> to vector<8x32xf32>
    %64 = arith.truncf %63 : vector<8x32xf32> to vector<8x32xbf16>
    %65 = vector.extract_strided_slice %8 {offsets = [32, 0], sizes = [32, 128], strides = [1, 1]} : vector<128x128xbf16> to vector<32x128xbf16>
    %cst_20 = arith.constant dense<0.000000e+00> : vector<8x128xf32>
    %66 = tpu.matmul %64, %65, %cst_20 {dimension_numbers = #tpu.dot_dimension_numbers<[1], [0], [0], [1], [0, 0, 1, 1], [], []>} : vector<8x32xbf16>, vector<32x128xbf16>, vector<8x128xf32> -> vector<8x128xf32>
    %67 = arith.addf %38, %66 : vector<8x128xf32>
    %68 = vector.extract_strided_slice %7 {offsets = [0, 64], sizes = [8, 32], strides = [1, 1]} : vector<8x384xf32> to vector<8x32xf32>
    %69 = vector.extract_strided_slice %7 {offsets = [0, 192], sizes = [8, 32], strides = [1, 1]} : vector<8x384xf32> to vector<8x32xf32>
    %70 = vector.extract_strided_slice %7 {offsets = [0, 320], sizes = [8, 32], strides = [1, 1]} : vector<8x384xf32> to vector<8x32xf32>
    %71 = vector.shape_cast %68 : vector<8x32xf32> to vector<1x8x32xf32>
    %72 = arith.truncf %71 : vector<1x8x32xf32> to vector<1x8x32xbf16>
    %73 = vector.shape_cast %69 : vector<8x32xf32> to vector<1x8x32xf32>
    %74 = arith.truncf %73 : vector<1x8x32xf32> to vector<1x8x32xbf16>
    %75 = vector.shape_cast %70 : vector<8x32xf32> to vector<1x8x32xf32>
    %76 = arith.truncf %75 : vector<1x8x32xf32> to vector<1x8x32xbf16>
    "tpu.trace_start"() <{level = 10 : i32, message = "bqd,bkd->bqk"}> : () -> ()
    %cst_21 = arith.constant dense<0.000000e+00> : vector<1x8x8xf32>
    %77 = tpu.matmul %72, %74, %cst_21 {dimension_numbers = #tpu.dot_dimension_numbers<[2], [2], [1], [1], [0, 0, 0, 1, 1, 1], [0], [0]>} : vector<1x8x32xbf16>, vector<1x8x32xbf16>, vector<1x8x8xf32> -> vector<1x8x8xf32>
    "tpu.trace_stop"() : () -> ()
    %cst_22 = arith.constant 0.353553385 : f32
    %78 = vector.broadcast %cst_22 : f32 to vector<1x8x8xf32>
    %79 = arith.mulf %77, %78 : vector<1x8x8xf32>
    %cst_23 = arith.constant dense<0xFF800000> : vector<1x8xf32>
    %80 = vector.multi_reduction <maximumf>, %79, %cst_23 [2] : vector<1x8x8xf32> to vector<1x8xf32>
    %81 = vector.shape_cast %80 : vector<1x8xf32> to vector<1x8x1xf32>
    %82 = vector.broadcast %81 : vector<1x8x1xf32> to vector<1x8x8xf32>
    %83 = arith.subf %79, %82 : vector<1x8x8xf32>
    %84 = math.exp %83 : vector<1x8x8xf32>
    %cst_24 = arith.constant dense<0.000000e+00> : vector<1x8xf32>
    %85 = vector.multi_reduction <add>, %84, %cst_24 [2] : vector<1x8x8xf32> to vector<1x8xf32>
    %86 = vector.shape_cast %85 : vector<1x8xf32> to vector<1x8x1xf32>
    %87 = tpu.reciprocal %86 {approx = true} : vector<1x8x1xf32> -> vector<1x8x1xf32>
    %88 = vector.broadcast %87 : vector<1x8x1xf32> to vector<1x8x8xf32>
    %89 = arith.mulf %84, %88 : vector<1x8x8xf32>
    %90 = arith.truncf %89 : vector<1x8x8xf32> to vector<1x8x8xbf16>
    "tpu.trace_start"() <{level = 10 : i32, message = "bqk,bkd->bqd"}> : () -> ()
    %cst_25 = arith.constant dense<0.000000e+00> : vector<1x8x32xf32>
    %91 = tpu.matmul %90, %76, %cst_25 {dimension_numbers = #tpu.dot_dimension_numbers<[2], [1], [1], [2], [0, 0, 0, 1, 1, 2], [0], [0]>} : vector<1x8x8xbf16>, vector<1x8x32xbf16>, vector<1x8x32xf32> -> vector<1x8x32xf32>
    "tpu.trace_stop"() : () -> ()
    %92 = vector.shape_cast %91 : vector<1x8x32xf32> to vector<8x32xf32>
    %93 = arith.truncf %92 : vector<8x32xf32> to vector<8x32xbf16>
    %94 = vector.extract_strided_slice %8 {offsets = [64, 0], sizes = [32, 128], strides = [1, 1]} : vector<128x128xbf16> to vector<32x128xbf16>
    %cst_26 = arith.constant dense<0.000000e+00> : vector<8x128xf32>
    %95 = tpu.matmul %93, %94, %cst_26 {dimension_numbers = #tpu.dot_dimension_numbers<[1], [0], [0], [1], [0, 0, 1, 1], [], []>} : vector<8x32xbf16>, vector<32x128xbf16>, vector<8x128xf32> -> vector<8x128xf32>
    %96 = arith.addf %67, %95 : vector<8x128xf32>
    %97 = vector.extract_strided_slice %7 {offsets = [0, 96], sizes = [8, 32], strides = [1, 1]} : vector<8x384xf32> to vector<8x32xf32>
    %98 = vector.extract_strided_slice %7 {offsets = [0, 224], sizes = [8, 32], strides = [1, 1]} : vector<8x384xf32> to vector<8x32xf32>
    %99 = vector.extract_strided_slice %7 {offsets = [0, 352], sizes = [8, 32], strides = [1, 1]} : vector<8x384xf32> to vector<8x32xf32>
    %100 = vector.shape_cast %97 : vector<8x32xf32> to vector<1x8x32xf32>
    %101 = arith.truncf %100 : vector<1x8x32xf32> to vector<1x8x32xbf16>
    %102 = vector.shape_cast %98 : vector<8x32xf32> to vector<1x8x32xf32>
    %103 = arith.truncf %102 : vector<1x8x32xf32> to vector<1x8x32xbf16>
    %104 = vector.shape_cast %99 : vector<8x32xf32> to vector<1x8x32xf32>
    %105 = arith.truncf %104 : vector<1x8x32xf32> to vector<1x8x32xbf16>
    "tpu.trace_start"() <{level = 10 : i32, message = "bqd,bkd->bqk"}> : () -> ()
    %cst_27 = arith.constant dense<0.000000e+00> : vector<1x8x8xf32>
    %106 = tpu.matmul %101, %103, %cst_27 {dimension_numbers = #tpu.dot_dimension_numbers<[2], [2], [1], [1], [0, 0, 0, 1, 1, 1], [0], [0]>} : vector<1x8x32xbf16>, vector<1x8x32xbf16>, vector<1x8x8xf32> -> vector<1x8x8xf32>
    "tpu.trace_stop"() : () -> ()
    %cst_28 = arith.constant 0.353553385 : f32
    %107 = vector.broadcast %cst_28 : f32 to vector<1x8x8xf32>
    %108 = arith.mulf %106, %107 : vector<1x8x8xf32>
    %cst_29 = arith.constant dense<0xFF800000> : vector<1x8xf32>
    %109 = vector.multi_reduction <maximumf>, %108, %cst_29 [2] : vector<1x8x8xf32> to vector<1x8xf32>
    %110 = vector.shape_cast %109 : vector<1x8xf32> to vector<1x8x1xf32>
    %111 = vector.broadcast %110 : vector<1x8x1xf32> to vector<1x8x8xf32>
    %112 = arith.subf %108, %111 : vector<1x8x8xf32>
    %113 = math.exp %112 : vector<1x8x8xf32>
    %cst_30 = arith.constant dense<0.000000e+00> : vector<1x8xf32>
    %114 = vector.multi_reduction <add>, %113, %cst_30 [2] : vector<1x8x8xf32> to vector<1x8xf32>
    %115 = vector.shape_cast %114 : vector<1x8xf32> to vector<1x8x1xf32>
    %116 = tpu.reciprocal %115 {approx = true} : vector<1x8x1xf32> -> vector<1x8x1xf32>
    %117 = vector.broadcast %116 : vector<1x8x1xf32> to vector<1x8x8xf32>
    %118 = arith.mulf %113, %117 : vector<1x8x8xf32>
    %119 = arith.truncf %118 : vector<1x8x8xf32> to vector<1x8x8xbf16>
    "tpu.trace_start"() <{level = 10 : i32, message = "bqk,bkd->bqd"}> : () -> ()
    %cst_31 = arith.constant dense<0.000000e+00> : vector<1x8x32xf32>
    %120 = tpu.matmul %119, %105, %cst_31 {dimension_numbers = #tpu.dot_dimension_numbers<[2], [1], [1], [2], [0, 0, 0, 1, 1, 2], [0], [0]>} : vector<1x8x8xbf16>, vector<1x8x32xbf16>, vector<1x8x32xf32> -> vector<1x8x32xf32>
    "tpu.trace_stop"() : () -> ()
    %121 = vector.shape_cast %120 : vector<1x8x32xf32> to vector<8x32xf32>
    %122 = arith.truncf %121 : vector<8x32xf32> to vector<8x32xbf16>
    %123 = vector.extract_strided_slice %8 {offsets = [96, 0], sizes = [32, 128], strides = [1, 1]} : vector<128x128xbf16> to vector<32x128xbf16>
    %cst_32 = arith.constant dense<0.000000e+00> : vector<8x128xf32>
    %124 = tpu.matmul %122, %123, %cst_32 {dimension_numbers = #tpu.dot_dimension_numbers<[1], [0], [0], [1], [0, 0, 1, 1], [], []>} : vector<8x32xbf16>, vector<32x128xbf16>, vector<8x128xf32> -> vector<8x128xf32>
    %125 = arith.addf %96, %124 : vector<8x128xf32>
    %c0_33 = arith.constant 0 : index
    %c0_34 = arith.constant 0 : index
    %126 = vector.load %arg5[%c0_33, %c0_34] : memref<1x128xf32, #tpu.memory_space<vmem>>, vector<1x128xf32>
    %127 = vector.broadcast %126 : vector<1x128xf32> to vector<8x128xf32>
    %128 = arith.addf %125, %127 : vector<8x128xf32>
    %129 = arith.addf %1, %128 : vector<8x128xf32>
    %c0_35 = arith.constant 0 : index
    %c0_36 = arith.constant 0 : index
    %130 = vector.load %arg10[%c0_35, %c0_36] : memref<1x128xf32, #tpu.memory_space<vmem>>, vector<1x128xf32>
    %c0_37 = arith.constant 0 : index
    %c0_38 = arith.constant 0 : index
    %131 = vector.load %arg11[%c0_37, %c0_38] : memref<1x128xf32, #tpu.memory_space<vmem>>, vector<1x128xf32>
    %cst_39 = arith.constant dense<0.000000e+00> : vector<8xf32>
    %132 = vector.multi_reduction <add>, %129, %cst_39 [1] : vector<8x128xf32> to vector<8xf32>
    %133 = vector.shape_cast %132 : vector<8xf32> to vector<8x1xf32>
    %cst_40 = arith.constant 3.125000e-02 : f32
    %134 = vector.broadcast %cst_40 : f32 to vector<8x1xf32>
    %135 = arith.mulf %133, %134 : vector<8x1xf32>
    %136 = arith.mulf %129, %129 : vector<8x128xf32>
    %cst_41 = arith.constant dense<0.000000e+00> : vector<8xf32>
    %137 = vector.multi_reduction <add>, %136, %cst_41 [1] : vector<8x128xf32> to vector<8xf32>
    %138 = vector.shape_cast %137 : vector<8xf32> to vector<8x1xf32>
    %cst_42 = arith.constant 3.125000e-02 : f32
    %139 = vector.broadcast %cst_42 : f32 to vector<8x1xf32>
    %140 = arith.mulf %138, %139 : vector<8x1xf32>
    %141 = arith.mulf %135, %135 : vector<8x1xf32>
    %142 = arith.subf %140, %141 : vector<8x1xf32>
    %143 = vector.broadcast %135 : vector<8x1xf32> to vector<8x128xf32>
    %144 = arith.subf %129, %143 : vector<8x128xf32>
    %cst_43 = arith.constant 9.99999974E-6 : f32
    %145 = vector.broadcast %cst_43 : f32 to vector<8x1xf32>
    %146 = arith.addf %142, %145 : vector<8x1xf32>
    %147 = math.rsqrt %146 : vector<8x1xf32>
    %148 = vector.broadcast %147 : vector<8x1xf32> to vector<8x128xf32>
    %149 = arith.mulf %144, %148 : vector<8x128xf32>
    %150 = vector.broadcast %130 : vector<1x128xf32> to vector<8x128xf32>
    %151 = arith.mulf %149, %150 : vector<8x128xf32>
    %152 = vector.broadcast %131 : vector<1x128xf32> to vector<8x128xf32>
    %153 = arith.addf %151, %152 : vector<8x128xf32>
    %154 = arith.truncf %153 : vector<8x128xf32> to vector<8x128xbf16>
    %cst_44 = arith.constant 0.000000e+00 : f32
    %155 = vector.broadcast %cst_44 : f32 to vector<8x128xf32>
    %c0_45 = arith.constant 0 : index
    %c0_46 = arith.constant 0 : index
    %156 = vector.load %arg6[%c0_45, %c0_46] : memref<128x128xbf16, #tpu.memory_space<vmem>>, vector<128x128xbf16>
    %cst_47 = arith.constant dense<0.000000e+00> : vector<8x128xf32>
    %157 = tpu.matmul %154, %156, %cst_47 {dimension_numbers = #tpu.dot_dimension_numbers<[1], [0], [0], [1], [0, 0, 1, 1], [], []>} : vector<8x128xbf16>, vector<128x128xbf16>, vector<8x128xf32> -> vector<8x128xf32>
    %c0_48 = arith.constant 0 : index
    %c0_49 = arith.constant 0 : index
    %158 = vector.load %arg7[%c0_48, %c0_49] : memref<1x128xf32, #tpu.memory_space<vmem>>, vector<1x128xf32>
    %159 = vector.broadcast %158 : vector<1x128xf32> to vector<8x128xf32>
    %160 = arith.addf %157, %159 : vector<8x128xf32>
    %cst_50 = arith.constant 0.000000e+00 : f32
    %161 = vector.broadcast %cst_50 : f32 to vector<8x128xf32>
    %162 = arith.maximumf %160, %161 : vector<8x128xf32>
    %163 = arith.truncf %162 : vector<8x128xf32> to vector<8x128xbf16>
    %c0_51 = arith.constant 0 : index
    %c0_52 = arith.constant 0 : index
    %164 = vector.load %arg8[%c0_51, %c0_52] : memref<128x128xbf16, #tpu.memory_space<vmem>>, vector<128x128xbf16>
    %cst_53 = arith.constant dense<0.000000e+00> : vector<8x128xf32>
    %165 = tpu.matmul %163, %164, %cst_53 {dimension_numbers = #tpu.dot_dimension_numbers<[1], [0], [0], [1], [0, 0, 1, 1], [], []>} : vector<8x128xbf16>, vector<128x128xbf16>, vector<8x128xf32> -> vector<8x128xf32>
    %166 = arith.addf %155, %165 : vector<8x128xf32>
    %c0_54 = arith.constant 0 : index
    %c0_55 = arith.constant 0 : index
    %167 = vector.load %arg9[%c0_54, %c0_55] : memref<1x128xf32, #tpu.memory_space<vmem>>, vector<1x128xf32>
    %168 = vector.broadcast %167 : vector<1x128xf32> to vector<8x128xf32>
    %169 = arith.addf %166, %168 : vector<8x128xf32>
    %170 = arith.addf %153, %169 : vector<8x128xf32>
    %c0_56 = arith.constant 0 : index
    %c0_57 = arith.constant 0 : index
    %171 = vector.load %arg12[%c0_56, %c0_57] : memref<1x128xf32, #tpu.memory_space<vmem>>, vector<1x128xf32>
    %c0_58 = arith.constant 0 : index
    %c0_59 = arith.constant 0 : index
    %172 = vector.load %arg13[%c0_58, %c0_59] : memref<1x128xf32, #tpu.memory_space<vmem>>, vector<1x128xf32>
    %cst_60 = arith.constant dense<0.000000e+00> : vector<8xf32>
    %173 = vector.multi_reduction <add>, %170, %cst_60 [1] : vector<8x128xf32> to vector<8xf32>
    %174 = vector.shape_cast %173 : vector<8xf32> to vector<8x1xf32>
    %cst_61 = arith.constant 3.125000e-02 : f32
    %175 = vector.broadcast %cst_61 : f32 to vector<8x1xf32>
    %176 = arith.mulf %174, %175 : vector<8x1xf32>
    %177 = arith.mulf %170, %170 : vector<8x128xf32>
    %cst_62 = arith.constant dense<0.000000e+00> : vector<8xf32>
    %178 = vector.multi_reduction <add>, %177, %cst_62 [1] : vector<8x128xf32> to vector<8xf32>
    %179 = vector.shape_cast %178 : vector<8xf32> to vector<8x1xf32>
    %cst_63 = arith.constant 3.125000e-02 : f32
    %180 = vector.broadcast %cst_63 : f32 to vector<8x1xf32>
    %181 = arith.mulf %179, %180 : vector<8x1xf32>
    %182 = arith.mulf %176, %176 : vector<8x1xf32>
    %183 = arith.subf %181, %182 : vector<8x1xf32>
    %184 = vector.broadcast %176 : vector<8x1xf32> to vector<8x128xf32>
    %185 = arith.subf %170, %184 : vector<8x128xf32>
    %cst_64 = arith.constant 9.99999974E-6 : f32
    %186 = vector.broadcast %cst_64 : f32 to vector<8x1xf32>
    %187 = arith.addf %183, %186 : vector<8x1xf32>
    %188 = math.rsqrt %187 : vector<8x1xf32>
    %189 = vector.broadcast %188 : vector<8x1xf32> to vector<8x128xf32>
    %190 = arith.mulf %185, %189 : vector<8x128xf32>
    %191 = vector.broadcast %171 : vector<1x128xf32> to vector<8x128xf32>
    %192 = arith.mulf %190, %191 : vector<8x128xf32>
    %193 = vector.broadcast %172 : vector<1x128xf32> to vector<8x128xf32>
    %194 = arith.addf %192, %193 : vector<8x128xf32>
    %195 = vector.shape_cast %194 : vector<8x128xf32> to vector<1x8x128xf32>
    %c0_65 = arith.constant 0 : index
    %c0_66 = arith.constant 0 : index
    %c0_67 = arith.constant 0 : index
    %196 = vector.load %arg14[%c0_65, %c0_66, %c0_67] : memref<1x8x128xf32, #tpu.memory_space<vmem>>, vector<1x8x128xf32>
    tpu.vector_store %arg14[%c0_65, %c0_66, %c0_67], %195 {strides = array<i32>} : memref<1x8x128xf32, #tpu.memory_space<vmem>>, vector<1x8x128xf32>,
    return
  }
  func.func @transform_0(%arg0: i32) -> (i32, i32, i32) {
    %c0_i32 = arith.constant 0 : i32
    %c0_i32_0 = arith.constant 0 : i32
    %c0_i32_1 = arith.constant 0 : i32
    return %arg0, %c0_i32, %c0_i32_0 : i32, i32, i32
  }
  func.func @transform_1(%arg0: i32) -> (i32, i32) {
    %c0_i32 = arith.constant 0 : i32
    %c0_i32_0 = arith.constant 0 : i32
    %c0_i32_1 = arith.constant 0 : i32
    return %c0_i32, %c0_i32_0 : i32, i32
  }
  func.func @transform_2(%arg0: i32) -> (i32, i32) {
    %c0_i32 = arith.constant 0 : i32
    %c0_i32_0 = arith.constant 0 : i32
    %c0_i32_1 = arith.constant 0 : i32
    return %c0_i32, %c0_i32_0 : i32, i32
  }
  func.func @transform_3(%arg0: i32) -> (i32, i32) {
    %c0_i32 = arith.constant 0 : i32
    %c0_i32_0 = arith.constant 0 : i32
    %c0_i32_1 = arith.constant 0 : i32
    return %c0_i32, %c0_i32_0 : i32, i32
  }
  func.func @transform_4(%arg0: i32) -> (i32, i32) {
    %c0_i32 = arith.constant 0 : i32
    %c0_i32_0 = arith.constant 0 : i32
    %c0_i32_1 = arith.constant 0 : i32
    return %c0_i32, %c0_i32_0 : i32, i32
  }
  func.func @transform_5(%arg0: i32) -> (i32, i32) {
    %c0_i32 = arith.constant 0 : i32
    %c0_i32_0 = arith.constant 0 : i32
    %c0_i32_1 = arith.constant 0 : i32
    return %c0_i32, %c0_i32_0 : i32, i32
  }
  func.func @transform_6(%arg0: i32) -> (i32, i32) {
    %c0_i32 = arith.constant 0 : i32
    %c0_i32_0 = arith.constant 0 : i32
    %c0_i32_1 = arith.constant 0 : i32
    return %c0_i32, %c0_i32_0 : i32, i32
  }
  func.func @transform_7(%arg0: i32) -> (i32, i32) {
    %c0_i32 = arith.constant 0 : i32
    %c0_i32_0 = arith.constant 0 : i32
    %c0_i32_1 = arith.constant 0 : i32
    return %c0_i32, %c0_i32_0 : i32, i32
  }
  func.func @transform_8(%arg0: i32) -> (i32, i32) {
    %c0_i32 = arith.constant 0 : i32
    %c0_i32_0 = arith.constant 0 : i32
    %c0_i32_1 = arith.constant 0 : i32
    return %c0_i32, %c0_i32_0 : i32, i32
  }
  func.func @transform_9(%arg0: i32) -> (i32, i32) {
    %c0_i32 = arith.constant 0 : i32
    %c0_i32_0 = arith.constant 0 : i32
    %c0_i32_1 = arith.constant 0 : i32
    return %c0_i32, %c0_i32_0 : i32, i32
  }
  func.func @transform_10(%arg0: i32) -> (i32, i32) {
    %c0_i32 = arith.constant 0 : i32
    %c0_i32_0 = arith.constant 0 : i32
    %c0_i32_1 = arith.constant 0 : i32
    return %c0_i32, %c0_i32_0 : i32, i32
  }
  func.func @transform_11(%arg0: i32) -> (i32, i32) {
    %c0_i32 = arith.constant 0 : i32
    %c0_i32_0 = arith.constant 0 : i32
    %c0_i32_1 = arith.constant 0 : i32
    return %c0_i32, %c0_i32_0 : i32, i32
  }
  func.func @transform_12(%arg0: i32) -> (i32, i32) {
    %c0_i32 = arith.constant 0 : i32
    %c0_i32_0 = arith.constant 0 : i32
    %c0_i32_1 = arith.constant 0 : i32
    return %c0_i32, %c0_i32_0 : i32, i32
  }
  func.func @transform_13(%arg0: i32) -> (i32, i32, i32) {
    %c0_i32 = arith.constant 0 : i32
    %c0_i32_0 = arith.constant 0 : i32
    %c0_i32_1 = arith.constant 0 : i32
    return %arg0, %c0_i32, %c0_i32_0 : i32, i32, i32
  }
}

</mosaic_0001>

<llo_original>
// kernel: tpu_custom_call.1
$region0: #{tpu_custom_call.1}
  #allocation0 [shape = 'u32[]', space=smem, size = 0x4, offset = 0x4, fixed_abs, tag = 'smem constant byte address 0x4 - core index']
  #allocation1 [shape = 'u32[72,128]{1,0:T(1,128)}', space=vmem, size = 0x9000, scoped, tag = 'internal scratch']
  %s0 = inlined_call_operand.hbm [shape: f32[2,8,128], index: 0, kind: input, shape index: {}]
  %s1 = inlined_call_operand.hbm [shape: bf16[128,384], index: 1, kind: input, shape index: {}]
  %s2 = inlined_call_operand.hbm [shape: f32[1,384], index: 2, kind: input, shape index: {}]
  %s3 = inlined_call_operand.hbm [shape: bf16[128,128], index: 3, kind: input, shape index: {}]
  %s4 = inlined_call_operand.vmem [shape: f32[1,128], index: 4, kind: input, shape index: {}]
  %s5 = inlined_call_operand.hbm [shape: bf16[128,128], index: 5, kind: input, shape index: {}]
  %s6 = inlined_call_operand.vmem [shape: f32[1,128], index: 6, kind: input, shape index: {}]
  %s7 = inlined_call_operand.hbm [shape: bf16[128,128], index: 7, kind: input, shape index: {}]
  %s8 = inlined_call_operand.vmem [shape: f32[1,128], index: 8, kind: input, shape index: {}]
  %s9 = inlined_call_operand.vmem [shape: f32[1,128], index: 9, kind: input, shape index: {}]
  %s10 = inlined_call_operand.vmem [shape: f32[1,128], index: 10, kind: input, shape index: {}]
  %s11 = inlined_call_operand.vmem [shape: f32[1,128], index: 11, kind: input, shape index: {}]
  %s12 = inlined_call_operand.vmem [shape: f32[1,128], index: 12, kind: input, shape index: {}]
  %s13 = inlined_call_operand.hbm [shape: f32[2,8,128], index: 13, kind: output, shape index: {}]
  %s14 = sld [smem:[#allocation0]]
  $region109: #{tpu_custom_call.1} parent=0
    _
  %s16 = ssub.s32 1, %s14
  %s17 = scalar_select 0, %s16, %s14
  $region1: #{tpu_custom_call.1} parent=0
    #allocation2 [shape = 'u8[8192]{0}', space=vmem, size = 0x2000, scoped, tag = 'input window, operand 0']
    #allocation3 [shape = 's32[2]{0}', space=sflag, size = 0x8, scoped, tag = 'scoped memory for tpu_custom_call.1']
    #allocation4 [shape = 's32[2]{0}', space=sflag, size = 0x8, scoped, tag = 'scoped memory for tpu_custom_call.1']
    #allocation5 [shape = 'u8[98304]{0}', space=vmem, size = 0x18000, scoped, tag = 'input window, operand 1, single buffered']
    #allocation6 [shape = 's32[1]{0}', space=sflag, size = 0x4, scoped, tag = 'scoped memory for tpu_custom_call.1']
    #allocation7 [shape = 'u8[1536]{0}', space=vmem, size = 0x800, scoped, tag = 'input window, operand 2, single buffered']
    #allocation8 [shape = 'u8[32768]{0}', space=vmem, size = 0x8000, scoped, tag = 'input window, operand 3, single buffered']
    #allocation9 [shape = 's32[1]{0}', space=sflag, size = 0x4, scoped, tag = 'scoped memory for tpu_custom_call.1']
    #allocation10 [shape = 'u8[32768]{0}', space=vmem, size = 0x8000, scoped, tag = 'input window, operand 5, single buffered']
    #allocation11 [shape = 'u8[32768]{0}', space=vmem, size = 0x8000, scoped, tag = 'input window, operand 7, single buffered']
    #allocation12 [shape = 's32[1]{0}', space=sflag, size = 0x4, scoped, tag = 'scoped memory for tpu_custom_call.1']
    #allocation13 [shape = 'u8[8192]{0}', space=vmem, size = 0x2000, scoped, tag = 'output window, operand 0']
    %18 = vsyncpa [#allocation3], 0
    %s19 = scalar_lea.sflag [#allocation3], 1
    %20 = vsyncpa %s19, 0
    %21 = vsyncpa [#allocation6], 0
    %22 = vsyncpa [#allocation9], 0
    %23 = vsyncpa [#allocation12], 0
    %24 = vsyncpa [#allocation4], 0
    %s25 = scalar_lea.sflag [#allocation4], 1
    %26 = vsyncpa %s25, 0
    loop: start=0, step=1, limit=4
    $region2: #{tpu_custom_call.1} parent=1 // loop_pre_header
      _
    $region3: #{tpu_custom_call.1} parent=1 // loop_header
      %s28 = sphi 0, %s32
      %p29 = scmp.ge.s32.totalorder %s28, 4
      %s38 = sphi 0, %s40
      %s41 = sphi 0, %s38
      %s42 = sphi 0, %s41
      %s58 = sphi 0, %s42
      %s62 = sphi 0, %s62
      %s64 = sphi 0, %s62
      %s65 = sphi 0, %s64
      %s79 = sphi 0, %s65
      %s83 = sphi 0, %s83
      %s85 = sphi 0, %s83
      %s86 = sphi 0, %s85
      %s100 = sphi 0, %s86
      %s104 = sphi 0, %s104
      %s106 = sphi 0, %s104
      %s107 = sphi 0, %s106
      %s121 = sphi 0, %s107
      %s125 = sphi 0, %s125
      %s127 = sphi 0, %s125
      %s128 = sphi 0, %s127
      %s142 = sphi 0, %s128
      %s146 = sphi 0, %s146
      %s148 = sphi 0, %s146
      %s149 = sphi 0, %s148
      %s163 = sphi 0, %s149
      %s167 = sphi 0, %s167
      %s169 = sphi 0, %s167
      %s170 = sphi 0, %s169
      %s184 = sphi 0, %s170
      %s188 = sphi 0, %s188
      %s190 = sphi 0, %s188
      %s191 = sphi 0, %s190
      %s205 = sphi 0, %s191
      %s209 = sphi 0, %s209
      %s211 = sphi 0, %s209
      %s212 = sphi 0, %s211
      %s226 = sphi 0, %s212
      %s230 = sphi 0, %s230
      %s232 = sphi 0, %s230
      %s233 = sphi 0, %s232
      %s247 = sphi 0, %s233
      %s251 = sphi 0, %s251
      %s253 = sphi 0, %s251
      %s254 = sphi 0, %s253
      %s268 = sphi 0, %s254
      %s272 = sphi 0, %s272
      %s274 = sphi 0, %s272
      %s275 = sphi 0, %s274
      %s289 = sphi 0, %s275
      %s293 = sphi 0, %s293
      %s295 = sphi 0, %s293
      %s296 = sphi 0, %s295
      %s310 = sphi 0, %s296
      %s316 = sphi 0, %s318
      %s319 = sphi 0, %s316
      %s320 = sphi 0, %s319
      %s336 = sphi 0, %s320
    $region4: #{tpu_custom_call.1} parent=1 // loop_header_branch
      %31 = sbr.rel (%p29) target = $region8
    $region5: #{tpu_custom_call.1} parent=1 // loop_body
      %s33 = ssub.s32 %s28, 1
      %s34 = ssub.s32 %s28, 2
      %s35 = sadd.s32 %s28, 1
      %s36 = ssub.s32 %s28, %s35
      %p37 = scmp.eq.s32.totalorder %s36, 0
      %s39 = sadd.s32 %s38, 1
      %s40 = scalar_select %p37, %s38, %s39
      %p43 = pneg %p37
      %p44 = scmp.eq.s32.totalorder %s28, 1
      %p45 = por %p43, %p44
      %p46 = scmp.ne.s32.totalorder %s38, %s41
      %p47 = scmp.eq.s32.totalorder %s28, 0
      %p48 = por %p46, %p47
      %p49 = scmp.ne.s32.totalorder %s38, %s41
      %p50 = scmp.eq.s32.totalorder %s33, 1
      %p51 = por %p49, %p50
      %p52 = scmp.ne.s32.totalorder %s41, %s42
      %p53 = scmp.eq.s32.totalorder %s33, 0
      %p54 = por %p52, %p53
      %p55 = scmp.ne.s32.totalorder %s41, %s42
      %p56 = scmp.eq.s32.totalorder %s34, 1
      %p57 = por %p55, %p56
      %p59 = scmp.ne.s32.totalorder %s42, %s58
      %p60 = scmp.eq.s32.totalorder %s34, 0
      %p61 = por %p59, %p60
      %s63 = sadd.s32 %s62, 1
      %p66 = scmp.eq.s32.totalorder %s28, 1
      %p67 = scmp.ne.s32.totalorder %s62, %s64
      %p68 = scmp.eq.s32.totalorder %s28, 0
      %p69 = por %p67, %p68
      %p70 = scmp.ne.s32.totalorder %s62, %s64
      %p71 = scmp.eq.s32.totalorder %s33, 1
      %p72 = por %p70, %p71
      %p73 = scmp.ne.s32.totalorder %s64, %s65
      %p74 = scmp.eq.s32.totalorder %s33, 0
      %p75 = por %p73, %p74
      %p76 = scmp.ne.s32.totalorder %s64, %s65
      %p77 = scmp.eq.s32.totalorder %s34, 1
      %p78 = por %p76, %p77
      %p80 = scmp.ne.s32.totalorder %s65, %s79
      %p81 = scmp.eq.s32.totalorder %s34, 0
      %p82 = por %p80, %p81
      %s84 = sadd.s32 %s83, 1
      %p87 = scmp.eq.s32.totalorder %s28, 1
      %p88 = scmp.ne.s32.totalorder %s83, %s85
      %p89 = scmp.eq.s32.totalorder %s28, 0
      %p90 = por %p88, %p89
      %p91 = scmp.ne.s32.totalorder %s83, %s85
      %p92 = scmp.eq.s32.totalorder %s33, 1
      %p93 = por %p91, %p92
      %p94 = scmp.ne.s32.totalorder %s85, %s86
      %p95 = scmp.eq.s32.totalorder %s33, 0
      %p96 = por %p94, %p95
      %p97 = scmp.ne.s32.totalorder %s85, %s86
      %p98 = scmp.eq.s32.totalorder %s34, 1
      %p99 = por %p97, %p98
      %p101 = scmp.ne.s32.totalorder %s86, %s100
      %p102 = scmp.eq.s32.totalorder %s34, 0
      %p103 = por %p101, %p102
      %s105 = sadd.s32 %s104, 1
      %p108 = scmp.eq.s32.totalorder %s28, 1
      %p109 = scmp.ne.s32.totalorder %s104, %s106
      %p110 = scmp.eq.s32.totalorder %s28, 0
      %p111 = por %p109, %p110
      %p112 = scmp.ne.s32.totalorder %s104, %s106
      %p113 = scmp.eq.s32.totalorder %s33, 1
      %p114 = por %p112, %p113
      %p115 = scmp.ne.s32.totalorder %s106, %s107
      %p116 = scmp.eq.s32.totalorder %s33, 0
      %p117 = por %p115, %p116
      %p118 = scmp.ne.s32.totalorder %s106, %s107
      %p119 = scmp.eq.s32.totalorder %s34, 1
      %p120 = por %p118, %p119
      %p122 = scmp.ne.s32.totalorder %s107, %s121
      %p123 = scmp.eq.s32.totalorder %s34, 0
      %p124 = por %p122, %p123
      %s126 = sadd.s32 %s125, 1
      %p129 = scmp.eq.s32.totalorder %s28, 1
      %p130 = scmp.ne.s32.totalorder %s125, %s127
      %p131 = scmp.eq.s32.totalorder %s28, 0
      %p132 = por %p130, %p131
      %p133 = scmp.ne.s32.totalorder %s125, %s127
      %p134 = scmp.eq.s32.totalorder %s33, 1
      %p135 = por %p133, %p134
      %p136 = scmp.ne.s32.totalorder %s127, %s128
      %p137 = scmp.eq.s32.totalorder %s33, 0
      %p138 = por %p136, %p137
      %p139 = scmp.ne.s32.totalorder %s127, %s128
      %p140 = scmp.eq.s32.totalorder %s34, 1
      %p141 = por %p139, %p140
      %p143 = scmp.ne.s32.totalorder %s128, %s142
      %p144 = scmp.eq.s32.totalorder %s34, 0
      %p145 = por %p143, %p144
      %s147 = sadd.s32 %s146, 1
      %p150 = scmp.eq.s32.totalorder %s28, 1
      %p151 = scmp.ne.s32.totalorder %s146, %s148
      %p152 = scmp.eq.s32.totalorder %s28, 0
      %p153 = por %p151, %p152
      %p154 = scmp.ne.s32.totalorder %s146, %s148
      %p155 = scmp.eq.s32.totalorder %s33, 1
      %p156 = por %p154, %p155
      %p157 = scmp.ne.s32.totalorder %s148, %s149
      %p158 = scmp.eq.s32.totalorder %s33, 0
      %p159 = por %p157, %p158
      %p160 = scmp.ne.s32.totalorder %s148, %s149
      %p161 = scmp.eq.s32.totalorder %s34, 1
      %p162 = por %p160, %p161
      %p164 = scmp.ne.s32.totalorder %s149, %s163
      %p165 = scmp.eq.s32.totalorder %s34, 0
      %p166 = por %p164, %p165
      %s168 = sadd.s32 %s167, 1
      %p171 = scmp.eq.s32.totalorder %s28, 1
      %p172 = scmp.ne.s32.totalorder %s167, %s169
      %p173 = scmp.eq.s32.totalorder %s28, 0
      %p174 = por %p172, %p173
      %p175 = scmp.ne.s32.totalorder %s167, %s169
      %p176 = scmp.eq.s32.totalorder %s33, 1
      %p177 = por %p175, %p176
      %p178 = scmp.ne.s32.totalorder %s169, %s170
      %p179 = scmp.eq.s32.totalorder %s33, 0
      %p180 = por %p178, %p179
      %p181 = scmp.ne.s32.totalorder %s169, %s170
      %p182 = scmp.eq.s32.totalorder %s34, 1
      %p183 = por %p181, %p182
      %p185 = scmp.ne.s32.totalorder %s170, %s184
      %p186 = scmp.eq.s32.totalorder %s34, 0
      %p187 = por %p185, %p186
      %s189 = sadd.s32 %s188, 1
      %p192 = scmp.eq.s32.totalorder %s28, 1
      %p193 = scmp.ne.s32.totalorder %s188, %s190
      %p194 = scmp.eq.s32.totalorder %s28, 0
      %p195 = por %p193, %p194
      %p196 = scmp.ne.s32.totalorder %s188, %s190
      %p197 = scmp.eq.s32.totalorder %s33, 1
      %p198 = por %p196, %p197
      %p199 = scmp.ne.s32.totalorder %s190, %s191
      %p200 = scmp.eq.s32.totalorder %s33, 0
      %p201 = por %p199, %p200
      %p202 = scmp.ne.s32.totalorder %s190, %s191
      %p203 = scmp.eq.s32.totalorder %s34, 1
      %p204 = por %p202, %p203
      %p206 = scmp.ne.s32.totalorder %s191, %s205
      %p207 = scmp.eq.s32.totalorder %s34, 0
      %p208 = por %p206, %p207
      %s210 = sadd.s32 %s209, 1
      %p213 = scmp.eq.s32.totalorder %s28, 1
      %p214 = scmp.ne.s32.totalorder %s209, %s211
      %p215 = scmp.eq.s32.totalorder %s28, 0
      %p216 = por %p214, %p215
      %p217 = scmp.ne.s32.totalorder %s209, %s211
      %p218 = scmp.eq.s32.totalorder %s33, 1
      %p219 = por %p217, %p218
      %p220 = scmp.ne.s32.totalorder %s211, %s212
      %p221 = scmp.eq.s32.totalorder %s33, 0
      %p222 = por %p220, %p221
      %p223 = scmp.ne.s32.totalorder %s211, %s212
      %p224 = scmp.eq.s32.totalorder %s34, 1
      %p225 = por %p223, %p224
      %p227 = scmp.ne.s32.totalorder %s212, %s226
      %p228 = scmp.eq.s32.totalorder %s34, 0
      %p229 = por %p227, %p228
      %s231 = sadd.s32 %s230, 1
      %p234 = scmp.eq.s32.totalorder %s28, 1
      %p235 = scmp.ne.s32.totalorder %s230, %s232
      %p236 = scmp.eq.s32.totalorder %s28, 0
      %p237 = por %p235, %p236
      %p238 = scmp.ne.s32.totalorder %s230, %s232
      %p239 = scmp.eq.s32.totalorder %s33, 1
      %p240 = por %p238, %p239
      %p241 = scmp.ne.s32.totalorder %s232, %s233
      %p242 = scmp.eq.s32.totalorder %s33, 0
      %p243 = por %p241, %p242
      %p244 = scmp.ne.s32.totalorder %s232, %s233
      %p245 = scmp.eq.s32.totalorder %s34, 1
      %p246 = por %p244, %p245
      %p248 = scmp.ne.s32.totalorder %s233, %s247
      %p249 = scmp.eq.s32.totalorder %s34, 0
      %p250 = por %p248, %p249
      %s252 = sadd.s32 %s251, 1
      %p255 = scmp.eq.s32.totalorder %s28, 1
      %p256 = scmp.ne.s32.totalorder %s251, %s253
      %p257 = scmp.eq.s32.totalorder %s28, 0
      %p258 = por %p256, %p257
      %p259 = scmp.ne.s32.totalorder %s251, %s253
      %p260 = scmp.eq.s32.totalorder %s33, 1
      %p261 = por %p259, %p260
      %p262 = scmp.ne.s32.totalorder %s253, %s254
      %p263 = scmp.eq.s32.totalorder %s33, 0
      %p264 = por %p262, %p263
      %p265 = scmp.ne.s32.totalorder %s253, %s254
      %p266 = scmp.eq.s32.totalorder %s34, 1
      %p267 = por %p265, %p266
      %p269 = scmp.ne.s32.totalorder %s254, %s268
      %p270 = scmp.eq.s32.totalorder %s34, 0
      %p271 = por %p269, %p270
      %s273 = sadd.s32 %s272, 1
      %p276 = scmp.eq.s32.totalorder %s28, 1
      %p277 = scmp.ne.s32.totalorder %s272, %s274
      %p278 = scmp.eq.s32.totalorder %s28, 0
      %p279 = por %p277, %p278
      %p280 = scmp.ne.s32.totalorder %s272, %s274
      %p281 = scmp.eq.s32.totalorder %s33, 1
      %p282 = por %p280, %p281
      %p283 = scmp.ne.s32.totalorder %s274, %s275
      %p284 = scmp.eq.s32.totalorder %s33, 0
      %p285 = por %p283, %p284
      %p286 = scmp.ne.s32.totalorder %s274, %s275
      %p287 = scmp.eq.s32.totalorder %s34, 1
      %p288 = por %p286, %p287
      %p290 = scmp.ne.s32.totalorder %s275, %s289
      %p291 = scmp.eq.s32.totalorder %s34, 0
      %p292 = por %p290, %p291
      %s294 = sadd.s32 %s293, 1
      %p297 = scmp.eq.s32.totalorder %s28, 1
      %p298 = scmp.ne.s32.totalorder %s293, %s295
      %p299 = scmp.eq.s32.totalorder %s28, 0
      %p300 = por %p298, %p299
      %p301 = scmp.ne.s32.totalorder %s293, %s295
      %p302 = scmp.eq.s32.totalorder %s33, 1
      %p303 = por %p301, %p302
      %p304 = scmp.ne.s32.totalorder %s295, %s296
      %p305 = scmp.eq.s32.totalorder %s33, 0
      %p306 = por %p304, %p305
      %p307 = scmp.ne.s32.totalorder %s295, %s296
      %p308 = scmp.eq.s32.totalorder %s34, 1
      %p309 = por %p307, %p308
      %p311 = scmp.ne.s32.totalorder %s296, %s310
      %p312 = scmp.eq.s32.totalorder %s34, 0
      %p313 = por %p311, %p312
      %s314 = ssub.s32 %s28, %s35
      %p315 = scmp.eq.s32.totalorder %s314, 0
      %s317 = sadd.s32 %s316, 1
      %s318 = scalar_select %p315, %s316, %s317
      %p321 = pneg %p315
      %p322 = scmp.eq.s32.totalorder %s28, 1
      %p323 = por %p321, %p322
      %p324 = scmp.ne.s32.totalorder %s316, %s319
      %p325 = scmp.eq.s32.totalorder %s28, 0
      %p326 = por %p324, %p325
      %p327 = scmp.ne.s32.totalorder %s316, %s319
      %p328 = scmp.eq.s32.totalorder %s33, 1
      %p329 = por %p327, %p328
      %p330 = scmp.ne.s32.totalorder %s319, %s320
      %p331 = scmp.eq.s32.totalorder %s33, 0
      %p332 = por %p330, %p331
      %p333 = scmp.ne.s32.totalorder %s319, %s320
      %p334 = scmp.eq.s32.totalorder %s34, 1
      %p335 = por %p333, %p334
      %p337 = scmp.ne.s32.totalorder %s320, %s336
      %p338 = scmp.eq.s32.totalorder %s34, 0
      %p339 = por %p337, %p338
      %p340 = scmp.le.s32.totalorder 1, %s28
      %p341 = scmp.lt.s32.totalorder %s28, 3
      %p342 = pnand %p340, %p341
      %p343 = pneg %p342
      // Predicated region
      $region9: #{tpu_custom_call.1} parent=5 // pred_check
        _
      $region10: #{tpu_custom_call.1} parent=5 // pred_check_branch
        %345 = sbr.rel (%p342) target = $region12
      $region11: #{tpu_custom_call.1} parent=5 // pred_region
        %s346 = ssub.s32 %s28, 1
        // Predicated region
        $region13: #{tpu_custom_call.1} parent=11 // pred_check
          %p347 = pneg %p75
        $region14: #{tpu_custom_call.1} parent=11 // pred_check_branch
          %349 = sbr.rel (%p347) target = $region16
        $region15: #{tpu_custom_call.1} parent=11 // pred_region
          %351 = vsyncadd [#allocation6], 0
          %s352 = sshll.u32 %s1, 4
          %s353 = int_to_ptr.hbm [resolvable:$true] %s352
          %s354 = sshll.u32 [#allocation5], 4
          %s355 = int_to_ptr.vmem [resolvable:$true] %s354
          %360 = dma.hbm_to_vmem [thread:$0]  %s353, 3072, %s355, [#allocation6], 192, 192, 12
        $region16: #{tpu_custom_call.1} parent=11 // pred_fallthru
          _
        // Predicated region
        $region17: #{tpu_custom_call.1} parent=11 // pred_check
          %p361 = pneg %p96
        $region18: #{tpu_custom_call.1} parent=11 // pred_check_branch
          %363 = sbr.rel (%p361) target = $region20
        $region19: #{tpu_custom_call.1} parent=11 // pred_region
          %365 = vsyncadd [#allocation6], 0
          %s367 = sshll.u32 %s2, 4
          %s368 = int_to_ptr.hbm [resolvable:$true] %s367
          %s369 = sshll.u32 [#allocation7], 4
          %s370 = int_to_ptr.vmem [resolvable:$true] %s369
          %372 = dma.hbm_to_vmem [thread:$0]  %s368, 48, %s370, [#allocation6]
        $region20: #{tpu_custom_call.1} parent=11 // pred_fallthru
          _
        // Predicated region
        $region21: #{tpu_custom_call.1} parent=11 // pred_check
          %p373 = pneg %p117
        $region22: #{tpu_custom_call.1} parent=11 // pred_check_branch
          %375 = sbr.rel (%p373) target = $region24
        $region23: #{tpu_custom_call.1} parent=11 // pred_region
          %377 = vsyncadd [#allocation9], 0
          %s378 = sshll.u32 %s3, 4
          %s379 = int_to_ptr.hbm [resolvable:$true] %s378
          %s380 = sshll.u32 [#allocation8], 4
          %s381 = int_to_ptr.vmem [resolvable:$true] %s380
          %386 = dma.hbm_to_vmem [thread:$0]  %s379, 1024, %s381, [#allocation9], 64, 64, 4
        $region24: #{tpu_custom_call.1} parent=11 // pred_fallthru
          _
        // Predicated region
        $region25: #{tpu_custom_call.1} parent=11 // pred_check
          %p387 = pneg %p138
        $region26: #{tpu_custom_call.1} parent=11 // pred_check_branch
          %389 = sbr.rel (%p387) target = $region28
        $region27: #{tpu_custom_call.1} parent=11 // pred_region
          _
        $region28: #{tpu_custom_call.1} parent=11 // pred_fallthru
          _
        // Predicated region
        $region29: #{tpu_custom_call.1} parent=11 // pred_check
          %p390 = pneg %p159
        $region30: #{tpu_custom_call.1} parent=11 // pred_check_branch
          %392 = sbr.rel (%p390) target = $region32
        $region31: #{tpu_custom_call.1} parent=11 // pred_region
          %394 = vsyncadd [#allocation9], 0
          %s395 = sshll.u32 %s5, 4
          %s396 = int_to_ptr.hbm [resolvable:$true] %s395
          %s397 = sshll.u32 [#allocation10], 4
          %s398 = int_to_ptr.vmem [resolvable:$true] %s397
          %403 = dma.hbm_to_vmem [thread:$0]  %s396, 1024, %s398, [#allocation9], 64, 64, 4
        $region32: #{tpu_custom_call.1} parent=11 // pred_fallthru
          _
        // Predicated region
        $region33: #{tpu_custom_call.1} parent=11 // pred_check
          %p404 = pneg %p180
        $region34: #{tpu_custom_call.1} parent=11 // pred_check_branch
          %406 = sbr.rel (%p404) target = $region36
        $region35: #{tpu_custom_call.1} parent=11 // pred_region
          _
        $region36: #{tpu_custom_call.1} parent=11 // pred_fallthru
          _
        // Predicated region
        $region37: #{tpu_custom_call.1} parent=11 // pred_check
          %p407 = pneg %p201
        $region38: #{tpu_custom_call.1} parent=11 // pred_check_branch
          %409 = sbr.rel (%p407) target = $region40
        $region39: #{tpu_custom_call.1} parent=11 // pred_region
          %411 = vsyncadd [#allocation12], 0
          %s412 = sshll.u32 %s7, 4
          %s413 = int_to_ptr.hbm [resolvable:$true] %s412
          %s414 = sshll.u32 [#allocation11], 4
          %s415 = int_to_ptr.vmem [resolvable:$true] %s414
          %420 = dma.hbm_to_vmem [thread:$0]  %s413, 1024, %s415, [#allocation12], 64, 64, 4
        $region40: #{tpu_custom_call.1} parent=11 // pred_fallthru
          _
        // Predicated region
        $region41: #{tpu_custom_call.1} parent=11 // pred_check
          %p421 = pneg %p222
        $region42: #{tpu_custom_call.1} parent=11 // pred_check_branch
          %423 = sbr.rel (%p421) target = $region44
        $region43: #{tpu_custom_call.1} parent=11 // pred_region
          _
        $region44: #{tpu_custom_call.1} parent=11 // pred_fallthru
          _
        // Predicated region
        $region45: #{tpu_custom_call.1} parent=11 // pred_check
          %p424 = pneg %p243
        $region46: #{tpu_custom_call.1} parent=11 // pred_check_branch
          %426 = sbr.rel (%p424) target = $region48
        $region47: #{tpu_custom_call.1} parent=11 // pred_region
          _
        $region48: #{tpu_custom_call.1} parent=11 // pred_fallthru
          _
        // Predicated region
        $region49: #{tpu_custom_call.1} parent=11 // pred_check
          %p427 = pneg %p264
        $region50: #{tpu_custom_call.1} parent=11 // pred_check_branch
          %429 = sbr.rel (%p427) target = $region52
        $region51: #{tpu_custom_call.1} parent=11 // pred_region
          _
        $region52: #{tpu_custom_call.1} parent=11 // pred_fallthru
          _
        // Predicated region
        $region53: #{tpu_custom_call.1} parent=11 // pred_check
          %p430 = pneg %p285
        $region54: #{tpu_custom_call.1} parent=11 // pred_check_branch
          %432 = sbr.rel (%p430) target = $region56
        $region55: #{tpu_custom_call.1} parent=11 // pred_region
          _
        $region56: #{tpu_custom_call.1} parent=11 // pred_fallthru
          _
        // Predicated region
        $region57: #{tpu_custom_call.1} parent=11 // pred_check
          %p433 = pneg %p306
        $region58: #{tpu_custom_call.1} parent=11 // pred_check_branch
          %435 = sbr.rel (%p433) target = $region60
        $region59: #{tpu_custom_call.1} parent=11 // pred_region
          _
        $region60: #{tpu_custom_call.1} parent=11 // pred_fallthru
          _
      $region12: #{tpu_custom_call.1} parent=5 // pred_fallthru
        _
      %p436 = scmp.lt.s32.totalorder %s28, 2
      // Predicated region
      $region61: #{tpu_custom_call.1} parent=5 // pred_check
        %p437 = pneg %p436
      $region62: #{tpu_custom_call.1} parent=5 // pred_check_branch
        %439 = sbr.rel (%p437) target = $region64
      $region63: #{tpu_custom_call.1} parent=5 // pred_region
        // Predicated region
        $region65: #{tpu_custom_call.1} parent=63 // pred_check
          %p440 = pneg %p48
        $region66: #{tpu_custom_call.1} parent=63 // pred_check_branch
          %442 = sbr.rel (%p440) target = $region68
        $region67: #{tpu_custom_call.1} parent=63 // pred_region
          %s443 = sand.u32 %s38, 1
          %s444 = scalar_lea.sflag [#allocation3], %s443
          %s445 = sand.u32 %s38, 1
          %s446 = smul.addr %s445, 8
          %s447 = scalar_lea.vmem [#allocation2], %s446
          %449 = vsyncadd %s444, 0
          %s450 = smul.addr %s28, 8
          %s451 = scalar_lea.hbm %s0, %s450
          %s453 = sshll.u32 %s451, 4
          %s454 = int_to_ptr.hbm [resolvable:$true] %s453
          %s455 = sshll.u32 %s447, 4
          %s456 = int_to_ptr.vmem [resolvable:$true] %s455
          %458 = dma.hbm_to_vmem [thread:$0]  %s454, 128, %s456, %s444
        $region68: #{tpu_custom_call.1} parent=63 // pred_fallthru
          _
      $region64: #{tpu_custom_call.1} parent=5 // pred_fallthru
        _
      %p459 = scmp.le.s32.totalorder 1, %s28
      %p460 = scmp.lt.s32.totalorder %s28, 3
      %p461 = pnand %p459, %p460
      %p462 = pneg %p461
      // Predicated region
      $region69: #{tpu_custom_call.1} parent=5 // pred_check
        _
      $region70: #{tpu_custom_call.1} parent=5 // pred_check_branch
        %464 = sbr.rel (%p461) target = $region72
      $region71: #{tpu_custom_call.1} parent=5 // pred_region
        %s465 = ssub.s32 %s28, 1
        %s466 = sand.u32 %s41, 1
        %s467 = scalar_lea.sflag [#allocation3], %s466
        %s468 = sand.u32 %s41, 1
        %s469 = smul.addr %s468, 8
        %s470 = scalar_lea.vmem [#allocation2], %s469
        // Predicated region
        $region73: #{tpu_custom_call.1} parent=71 // pred_check
          %p471 = pneg %p54
        $region74: #{tpu_custom_call.1} parent=71 // pred_check_branch
          %473 = sbr.rel (%p471) target = $region76
        $region75: #{tpu_custom_call.1} parent=71 // pred_region
          %475 = dma.done %s467, 128
        $region76: #{tpu_custom_call.1} parent=71 // pred_fallthru
          _
        // Predicated region
        $region77: #{tpu_custom_call.1} parent=71 // pred_check
          %p476 = pneg %p75
        $region78: #{tpu_custom_call.1} parent=71 // pred_check_branch
          %478 = sbr.rel (%p476) target = $region80
        $region79: #{tpu_custom_call.1} parent=71 // pred_region
          %480 = dma.done [#allocation6], 3072
        $region80: #{tpu_custom_call.1} parent=71 // pred_fallthru
          _
        // Predicated region
        $region81: #{tpu_custom_call.1} parent=71 // pred_check
          %p481 = pneg %p96
        $region82: #{tpu_custom_call.1} parent=71 // pred_check_branch
          %483 = sbr.rel (%p481) target = $region84
        $region83: #{tpu_custom_call.1} parent=71 // pred_region
          %485 = dma.done [#allocation6], 48
        $region84: #{tpu_custom_call.1} parent=71 // pred_fallthru
          _
        // Predicated region
        $region85: #{tpu_custom_call.1} parent=71 // pred_check
          %p486 = pneg %p117
        $region86: #{tpu_custom_call.1} parent=71 // pred_check_branch
          %488 = sbr.rel (%p486) target = $region88
        $region87: #{tpu_custom_call.1} parent=71 // pred_region
          %490 = dma.done [#allocation9], 1024
        $region88: #{tpu_custom_call.1} parent=71 // pred_fallthru
          _
        // Predicated region
        $region89: #{tpu_custom_call.1} parent=71 // pred_check
          %p491 = pneg %p159
        $region90: #{tpu_custom_call.1} parent=71 // pred_check_branch
          %493 = sbr.rel (%p491) target = $region92
        $region91: #{tpu_custom_call.1} parent=71 // pred_region
          %495 = dma.done [#allocation9], 1024
        $region92: #{tpu_custom_call.1} parent=71 // pred_fallthru
          _
        // Predicated region
        $region93: #{tpu_custom_call.1} parent=71 // pred_check
          %p496 = pneg %p201
        $region94: #{tpu_custom_call.1} parent=71 // pred_check_branch
          %498 = sbr.rel (%p496) target = $region96
        $region95: #{tpu_custom_call.1} parent=71 // pred_region
          %500 = dma.done [#allocation12], 1024
        $region96: #{tpu_custom_call.1} parent=71 // pred_fallthru
          _
        %s501 = sand.u32 %s41, 1
        %s502 = scalar_lea.sflag [#allocation3], %s501
        %s503 = sand.u32 %s41, 1
        %s504 = smul.addr %s503, 8
        %s505 = scalar_lea.vmem [#allocation2], %s504
        %p506 = pneg %p54
        %p507 = pneg %p51
        %p508 = pneg %p75
        %p509 = pneg %p72
        %p510 = pneg %p96
        %p511 = pneg %p93
        %p512 = pneg %p117
        %p513 = pneg %p114
        %p514 = pneg %p138
        %p515 = pneg %p135
        %p516 = pneg %p159
        %p517 = pneg %p156
        %p518 = pneg %p180
        %p519 = pneg %p177
        %p520 = pneg %p201
        %p521 = pneg %p198
        %p522 = pneg %p222
        %p523 = pneg %p219
        %p524 = pneg %p243
        %p525 = pneg %p240
        %p526 = pneg %p264
        %p527 = pneg %p261
        %p528 = pneg %p285
        %p529 = pneg %p282
        %p530 = pneg %p306
        %p531 = pneg %p303
        %p532 = pneg %p332
        %p533 = pneg %p329
        %s534 = sand.u32 %s319, 1
        %s535 = scalar_lea.sflag [#allocation4], %s534
        %s536 = sand.u32 %s319, 1
        %s537 = smul.addr %s536, 8
        %s538 = scalar_lea.vmem [#allocation13], %s537
        %v540 = vld [vmem:[%s470] sm:$0xff]
        %v541 = vpack.c.bf16 %v540, %v540
        %v542 = vld [vmem:[#allocation5] sm:$0xff]
        %v543 = vld [vmem:[#allocation5 + $0x8] sm:$0xf]
        %v544 = vld [vmem:[#allocation5 + $0xc] sm:$0xff]
        %v545 = vld [vmem:[#allocation5 + $0x14] sm:$0xf]
        %v546 = vld [vmem:[#allocation5 + $0x18] sm:$0xff]
        %v547 = vld [vmem:[#allocation5 + $0x20] sm:$0xf]
        %v548 = vld [vmem:[#allocation5 + $0x24] sm:$0xff]
        %v549 = vld [vmem:[#allocation5 + $0x2c] sm:$0xf]
        %v550 = vld [vmem:[#allocation5 + $0x30] sm:$0xff]
        %v551 = vld [vmem:[#allocation5 + $0x38] sm:$0xf]
        %v552 = vld [vmem:[#allocation5 + $0x3c] sm:$0xff]
        %v553 = vld [vmem:[#allocation5 + $0x44] sm:$0xf]
        %v554 = vld [vmem:[#allocation5 + $0x48] sm:$0xff]
        %v555 = vld [vmem:[#allocation5 + $0x50] sm:$0xf]
        %v556 = vld [vmem:[#allocation5 + $0x54] sm:$0xff]
        %v557 = vld [vmem:[#allocation5 + $0x5c] sm:$0xf]
        %v558 = vld [vmem:[#allocation5 + $0x60] sm:$0xff]
        %v559 = vld [vmem:[#allocation5 + $0x68] sm:$0xf]
        %v560 = vld [vmem:[#allocation5 + $0x6c] sm:$0xff]
        %v561 = vld [vmem:[#allocation5 + $0x74] sm:$0xf]
        %v562 = vld [vmem:[#allocation5 + $0x78] sm:$0xff]
        %v563 = vld [vmem:[#allocation5 + $0x80] sm:$0xf]
        %v564 = vld [vmem:[#allocation5 + $0x84] sm:$0xff]
        %v565 = vld [vmem:[#allocation5 + $0x8c] sm:$0xf]
        %v566 = vld [vmem:[#allocation5 + $0x90] sm:$0xff]
        %v567 = vld [vmem:[#allocation5 + $0x98] sm:$0xf]
        %v568 = vld [vmem:[#allocation5 + $0x9c] sm:$0xff]
        %v569 = vld [vmem:[#allocation5 + $0xa4] sm:$0xf]
        %v570 = vld [vmem:[#allocation5 + $0xa8] sm:$0xff]
        %v571 = vld [vmem:[#allocation5 + $0xb0] sm:$0xf]
        %v572 = vld [vmem:[#allocation5 + $0xb4] sm:$0xff]
        %v573 = vld [vmem:[#allocation5 + $0xbc] sm:$0xf]
        %v574 = vld [vmem:[#allocation7] sm:$0x7]
        %v576 = vperm.slane %v574, 0
        %v577 = vperm.slane %v574, 1
        %v578 = vperm.slane %v574, 2
        %v614 = vunpack.c.l.b16 %v542
        %v615 = vunpack.c.h.b16 %v542
        %v616 = vunpack.c.l.b16 %v543
        %v617 = vunpack.c.l.b16 %v544
        %v618 = vunpack.c.h.b16 %v544
        %v619 = vunpack.c.l.b16 %v545
        %v620 = vunpack.c.l.b16 %v546
        %v621 = vunpack.c.h.b16 %v546
        %v622 = vunpack.c.l.b16 %v547
        %v623 = vunpack.c.l.b16 %v548
        %v624 = vunpack.c.h.b16 %v548
        %v625 = vunpack.c.l.b16 %v549
        %v626 = vunpack.c.l.b16 %v550
        %v627 = vunpack.c.h.b16 %v550
        %v628 = vunpack.c.l.b16 %v551
        %v629 = vunpack.c.l.b16 %v552
        %v630 = vunpack.c.h.b16 %v552
        %v631 = vunpack.c.l.b16 %v553
        %v632 = vunpack.c.l.b16 %v554
        %v633 = vunpack.c.h.b16 %v554
        %v634 = vunpack.c.l.b16 %v555
        %v635 = vunpack.c.l.b16 %v556
        %v636 = vunpack.c.h.b16 %v556
        %v637 = vunpack.c.l.b16 %v557
        %v638 = vunpack.c.l.b16 %v558
        %v639 = vunpack.c.h.b16 %v558
        %v640 = vunpack.c.l.b16 %v559
        %v641 = vunpack.c.l.b16 %v560
        %v642 = vunpack.c.h.b16 %v560
        %v643 = vunpack.c.l.b16 %v561
        %v644 = vunpack.c.l.b16 %v562
        %v645 = vunpack.c.h.b16 %v562
        %v646 = vunpack.c.l.b16 %v563
        %v647 = vunpack.c.l.b16 %v564
        %v648 = vunpack.c.h.b16 %v564
        %v649 = vunpack.c.l.b16 %v565
        %v650 = vunpack.c.l.b16 %v566
        %v651 = vunpack.c.h.b16 %v566
        %v652 = vunpack.c.l.b16 %v567
        %v653 = vunpack.c.l.b16 %v568
        %v654 = vunpack.c.h.b16 %v568
        %v655 = vunpack.c.l.b16 %v569
        %v656 = vunpack.c.l.b16 %v570
        %v657 = vunpack.c.h.b16 %v570
        %v658 = vunpack.c.l.b16 %v571
        %v659 = vunpack.c.l.b16 %v572
        %v660 = vunpack.c.h.b16 %v572
        %v661 = vunpack.c.l.b16 %v573
        %v662 = vpack.c.b16 %v617, %v614
        %v663 = vpack.c.b16 %v618, %v615
        %v664 = vpack.c.b16 %v619, %v616
        %v665 = vpack.c.b16 %v623, %v620
        %v666 = vpack.c.b16 %v624, %v621
        %v667 = vpack.c.b16 %v625, %v622
        %v668 = vpack.c.b16 %v629, %v626
        %v669 = vpack.c.b16 %v630, %v627
        %v670 = vpack.c.b16 %v631, %v628
        %v671 = vpack.c.b16 %v635, %v632
        %v672 = vpack.c.b16 %v636, %v633
        %v673 = vpack.c.b16 %v637, %v634
        %v674 = vpack.c.b16 %v641, %v638
        %v675 = vpack.c.b16 %v642, %v639
        %v676 = vpack.c.b16 %v643, %v640
        %v677 = vpack.c.b16 %v647, %v644
        %v678 = vpack.c.b16 %v648, %v645
        %v679 = vpack.c.b16 %v649, %v646
        %v680 = vpack.c.b16 %v653, %v650
        %v681 = vpack.c.b16 %v654, %v651
        %v682 = vpack.c.b16 %v655, %v652
        %v683 = vpack.c.b16 %v659, %v656
        %v684 = vpack.c.b16 %v660, %v657
        %v685 = vpack.c.b16 %v661, %v658
        %710 = vmatpush.bf16.msra.mxu0 %v683
        %711 = vmatpush.bf16.msra.mxu0 %v680
        %712 = vmatpush.bf16.msra.mxu0 %v677
        %713 = vmatpush.bf16.msra.mxu0 %v674
        %714 = vmatpush.bf16.msra.mxu0 %v671
        %715 = vmatpush.bf16.msra.mxu0 %v668
        %716 = vmatpush.bf16.msra.mxu0 %v665
        %717 = vmatpush.bf16.msra.mxu0 %v662
        %718 = vmatmul.bf16.gmra.mxu0 %v541
        %v719 = vpop.f32.mrf.mxu0
        %v720 = vadd.f32 %v576, %v719
        %v721 = vpop.f32.mrf.mxu0
        %722 = vdwg.mxu0
        %723 = vmatpush.bf16.msra.mxu0 %v684
        %724 = vmatpush.bf16.msra.mxu0 %v681
        %725 = vmatpush.bf16.msra.mxu0 %v678
        %726 = vmatpush.bf16.msra.mxu0 %v675
        %727 = vmatpush.bf16.msra.mxu0 %v672
        %728 = vmatpush.bf16.msra.mxu0 %v669
        %729 = vmatpush.bf16.msra.mxu0 %v666
        %730 = vmatpush.bf16.msra.mxu0 %v663
        %731 = vmatmul.bf16.gmra.mxu0 %v541
        %v732 = vpop.f32.mrf.mxu0
        %v733 = vadd.f32 %v577, %v732
        %v734 = vpop.f32.mrf.mxu0
        %735 = vdwg.mxu0
        %736 = vmatpush.bf16.msra.mxu0 %v685
        %737 = vmatpush.bf16.msra.mxu0 %v682
        %738 = vmatpush.bf16.msra.mxu0 %v679
        %739 = vmatpush.bf16.msra.mxu0 %v676
        %740 = vmatpush.bf16.msra.mxu0 %v673
        %741 = vmatpush.bf16.msra.mxu0 %v670
        %742 = vmatpush.bf16.msra.mxu0 %v667
        %743 = vmatpush.bf16.msra.mxu0 %v664
        %744 = vmatmul.bf16.gmra.mxu0 %v541
        %v745 = vpop.f32.mrf.mxu0
        %v746 = vadd.f32 %v578, %v745
        %v747 = vpop.f32.mrf.mxu0
        %748 = vdwg.mxu0
        %v749 = vld [vmem:[#allocation8] sm:$0xf]
        %v750 = vld [vmem:[#allocation8 + $0x4] sm:$0xf]
        %v751 = vld [vmem:[#allocation8 + $0x8] sm:$0xf]
        %v752 = vld [vmem:[#allocation8 + $0xc] sm:$0xf]
        %v753 = vld [vmem:[#allocation8 + $0x10] sm:$0xf]
        %v754 = vld [vmem:[#allocation8 + $0x14] sm:$0xf]
        %v755 = vld [vmem:[#allocation8 + $0x18] sm:$0xf]
        %v756 = vld [vmem:[#allocation8 + $0x1c] sm:$0xf]
        %v757 = vld [vmem:[#allocation8 + $0x20] sm:$0xf]
        %v758 = vld [vmem:[#allocation8 + $0x24] sm:$0xf]
        %v759 = vld [vmem:[#allocation8 + $0x28] sm:$0xf]
        %v760 = vld [vmem:[#allocation8 + $0x2c] sm:$0xf]
        %v761 = vld [vmem:[#allocation8 + $0x30] sm:$0xf]
        %v762 = vld [vmem:[#allocation8 + $0x34] sm:$0xf]
        %v763 = vld [vmem:[#allocation8 + $0x38] sm:$0xf]
        %v764 = vld [vmem:[#allocation8 + $0x3c] sm:$0xf]
        %v765 = vpack.c.bf16 %v720, %v720
        %v766 = vpack.c.bf16 %v733, %v733
        %v767 = vpack.c.bf16 %v746, %v746
        %vm768 = vcmask 261120
        %v770 = vsel %vm768, %v765, 0
        %v773 = vsel %vm768, %v766, 0
        %775 = vmatpush.bf16.xpose.msra.mxu0 0
        %776 = vmatpush.bf16.xpose.msra.mxu0 0
        %777 = vmatpush.bf16.xpose.msra.mxu0 0
        %778 = vmatpush.bf16.xpose.msra.mxu0 0
        %779 = vmatpush.bf16.xpose.msra.mxu0 0
        %780 = vmatpush.bf16.xpose.msra.mxu0 0
        %781 = vmatpush.bf16.xpose.msra.mxu0 0
        %782 = vmatpush.bf16.xpose.msra.mxu0 %v773
        %783 = vmatmul.bf16.gmra.mxu0 %v770
        %v784 = vpop.f32.mrf.mxu0
        %v785 = vadd.f32 0.0, %v784
        %v786 = vpop.f32.mrf.mxu0
        %787 = vdwg.mxu0
        %v788 = vmul.f32 %v785, 0.35355338
        %vm789 = vcmask 64512
        %v790 = vsel %vm789, %v788, -inf
        %791 = vmax.xlane.f32.xlu0 %v790
        %v792 = vpop.xlane.xlu0 %791
        %v793 = vsub.f32 %v788, %v792
        %v794 = vmul.f32 %v793, 1.442695
        %v795 = vpow.pop %v794
        %v796 = vsel %vm789, %v795, 0.0
        %797 = vadd.xlane.f32.xlu0 %v796
        %v798 = vpop.xlane.xlu0 %797
        %v799 = vrcp.pop %v798
        %v800 = vmul.f32 %v795, %v799
        %v801 = vpack.c.bf16 %v800, %v800
        %v803 = vsel %vm789, %v801, 0
        %vm805 = vcmask 1043456
        %v807 = vsel %vm805, %v767, 0
        %809 = vmatpush.bf16.msra.mxu0 0
        %810 = vmatpush.bf16.msra.mxu0 0
        %811 = vmatpush.bf16.msra.mxu0 0
        %812 = vmatpush.bf16.msra.mxu0 0
        %813 = vmatpush.bf16.msra.mxu0 0
        %814 = vmatpush.bf16.msra.mxu0 0
        %815 = vmatpush.bf16.msra.mxu0 0
        %816 = vmatpush.bf16.msra.mxu0 %v807
        %817 = vmatmul.bf16.gmra.mxu0 %v803
        %v818 = vpop.f32.mrf.mxu0
        %v819 = vadd.f32 0.0, %v818
        %v820 = vpop.f32.mrf.mxu0
        %821 = vdwg.mxu0
        %v822 = vpack.c.bf16 %v819, %v819
        %v824 = vunpack.c.l.b16 %v765
        %v825 = vpack.c.b16 %v824, %v824
        %826 = vrot.lane.b32.xlu0 %v825, 96
        %v827 = vpop.permute.xlu0 %826
        %v829 = vunpack.c.l.b16 %v766
        %v830 = vpack.c.b16 %v829, %v829
        %831 = vrot.lane.b32.xlu0 %v830, 96
        %v832 = vpop.permute.xlu0 %831
        %v834 = vsel %vm768, %v827, 0
        %v837 = vsel %vm768, %v832, 0
        %839 = vmatpush.bf16.xpose.msra.mxu0 0
        %840 = vmatpush.bf16.xpose.msra.mxu0 0
        %841 = vmatpush.bf16.xpose.msra.mxu0 0
        %842 = vmatpush.bf16.xpose.msra.mxu0 0
        %843 = vmatpush.bf16.xpose.msra.mxu0 0
        %844 = vmatpush.bf16.xpose.msra.mxu0 0
        %845 = vmatpush.bf16.xpose.msra.mxu0 0
        %846 = vmatpush.bf16.xpose.msra.mxu0 %v837
        %847 = vmatmul.bf16.gmra.mxu0 %v834
        %v848 = vpop.f32.mrf.mxu0
        %v849 = vadd.f32 0.0, %v848
        %v850 = vpop.f32.mrf.mxu0
        %851 = vdwg.mxu0
        %v852 = vmul.f32 %v849, 0.35355338
        %v853 = vsel %vm789, %v852, -inf
        %854 = vmax.xlane.f32.xlu0 %v853
        %v855 = vpop.xlane.xlu0 %854
        %v856 = vsub.f32 %v852, %v855
        %v857 = vmul.f32 %v856, 1.442695
        %v858 = vpow.pop %v857
        %v859 = vsel %vm789, %v858, 0.0
        %860 = vadd.xlane.f32.xlu0 %v859
        %v861 = vpop.xlane.xlu0 %860
        %v862 = vrcp.pop %v861
        %v863 = vmul.f32 %v858, %v862
        %v864 = vpack.c.bf16 %v863, %v863
        %v866 = vunpack.c.l.b16 %v767
        %v867 = vpack.c.b16 %v866, %v866
        %868 = vrot.lane.b32.xlu0 %v867, 96
        %v869 = vpop.permute.xlu0 %868
        %v871 = vsel %vm789, %v864, 0
        %v874 = vsel %vm805, %v869, 0
        %876 = vmatpush.bf16.msra.mxu0 0
        %877 = vmatpush.bf16.msra.mxu0 0
        %878 = vmatpush.bf16.msra.mxu0 0
        %879 = vmatpush.bf16.msra.mxu0 0
        %880 = vmatpush.bf16.msra.mxu0 0
        %881 = vmatpush.bf16.msra.mxu0 0
        %882 = vmatpush.bf16.msra.mxu0 0
        %883 = vmatpush.bf16.msra.mxu0 %v874
        %884 = vmatmul.bf16.gmra.mxu0 %v871
        %v885 = vpop.f32.mrf.mxu0
        %v886 = vadd.f32 0.0, %v885
        %v887 = vpop.f32.mrf.mxu0
        %888 = vdwg.mxu0
        %v889 = vpack.c.bf16 %v886, %v886
        %v894 = vunpack.c.l.b16 %v753
        %v895 = vunpack.c.l.b16 %v754
        %v896 = vunpack.c.l.b16 %v755
        %v897 = vunpack.c.l.b16 %v756
        %v898 = vpack.c.b16 %v895, %v894
        %v899 = vpack.c.b16 %v897, %v896
        %v903 = vsel %vm768, %v889, 0
        %905 = vmatpush.bf16.msra.mxu0 0
        %906 = vmatpush.bf16.msra.mxu0 0
        %907 = vmatpush.bf16.msra.mxu0 0
        %908 = vmatpush.bf16.msra.mxu0 0
        %909 = vmatpush.bf16.msra.mxu0 0
        %910 = vmatpush.bf16.msra.mxu0 0
        %911 = vmatpush.bf16.msra.mxu0 %v899
        %912 = vmatpush.bf16.msra.mxu0 %v898
        %913 = vmatmul.bf16.gmra.mxu0 %v903
        %v914 = vpop.f32.mrf.mxu0
        %v915 = vadd.f32 0.0, %v914
        %v916 = vpop.f32.mrf.mxu0
        %917 = vdwg.mxu0
        %v922 = vunpack.c.l.b16 %v749
        %v923 = vunpack.c.l.b16 %v750
        %v924 = vunpack.c.l.b16 %v751
        %v925 = vunpack.c.l.b16 %v752
        %v926 = vpack.c.b16 %v923, %v922
        %v927 = vpack.c.b16 %v925, %v924
        %v931 = vsel %vm768, %v822, 0
        %933 = vmatpush.bf16.msra.mxu0 0
        %934 = vmatpush.bf16.msra.mxu0 0
        %935 = vmatpush.bf16.msra.mxu0 0
        %936 = vmatpush.bf16.msra.mxu0 0
        %937 = vmatpush.bf16.msra.mxu0 0
        %938 = vmatpush.bf16.msra.mxu0 0
        %939 = vmatpush.bf16.msra.mxu0 %v927
        %940 = vmatpush.bf16.msra.mxu0 %v926
        %941 = vmatmul.bf16.gmra.mxu0 %v931
        %v942 = vpop.f32.mrf.mxu0
        %v943 = vadd.f32 %v915, %v942
        %v944 = vpop.f32.mrf.mxu0
        %945 = vdwg.mxu0
        %946 = vrot.lane.b32.xlu0 %v825, 64
        %v947 = vpop.permute.xlu0 %946
        %948 = vrot.lane.b32.xlu0 %v830, 64
        %v949 = vpop.permute.xlu0 %948
        %v951 = vsel %vm768, %v947, 0
        %v954 = vsel %vm768, %v949, 0
        %956 = vmatpush.bf16.xpose.msra.mxu0 0
        %957 = vmatpush.bf16.xpose.msra.mxu0 0
        %958 = vmatpush.bf16.xpose.msra.mxu0 0
        %959 = vmatpush.bf16.xpose.msra.mxu0 0
        %960 = vmatpush.bf16.xpose.msra.mxu0 0
        %961 = vmatpush.bf16.xpose.msra.mxu0 0
        %962 = vmatpush.bf16.xpose.msra.mxu0 0
        %963 = vmatpush.bf16.xpose.msra.mxu0 %v954
        %964 = vmatmul.bf16.gmra.mxu0 %v951
        %v965 = vpop.f32.mrf.mxu0
        %v966 = vadd.f32 0.0, %v965
        %v967 = vpop.f32.mrf.mxu0
        %968 = vdwg.mxu0
        %v969 = vmul.f32 %v966, 0.35355338
        %v970 = vsel %vm789, %v969, -inf
        %971 = vmax.xlane.f32.xlu0 %v970
        %v972 = vpop.xlane.xlu0 %971
        %v973 = vsub.f32 %v969, %v972
        %v974 = vmul.f32 %v973, 1.442695
        %v975 = vpow.pop %v974
        %v976 = vsel %vm789, %v975, 0.0
        %977 = vadd.xlane.f32.xlu0 %v976
        %v978 = vpop.xlane.xlu0 %977
        %v979 = vrcp.pop %v978
        %v980 = vmul.f32 %v975, %v979
        %v981 = vpack.c.bf16 %v980, %v980
        %982 = vrot.lane.b32.xlu0 %v867, 64
        %v983 = vpop.permute.xlu0 %982
        %v985 = vsel %vm789, %v981, 0
        %v988 = vsel %vm805, %v983, 0
        %990 = vmatpush.bf16.msra.mxu0 0
        %991 = vmatpush.bf16.msra.mxu0 0
        %992 = vmatpush.bf16.msra.mxu0 0
        %993 = vmatpush.bf16.msra.mxu0 0
        %994 = vmatpush.bf16.msra.mxu0 0
        %995 = vmatpush.bf16.msra.mxu0 0
        %996 = vmatpush.bf16.msra.mxu0 0
        %997 = vmatpush.bf16.msra.mxu0 %v988
        %998 = vmatmul.bf16.gmra.mxu0 %v985
        %v999 = vpop.f32.mrf.mxu0
        %v1000 = vadd.f32 0.0, %v999
        %v1001 = vpop.f32.mrf.mxu0
        %1002 = vdwg.mxu0
        %v1003 = vpack.c.bf16 %v1000, %v1000
        %v1008 = vunpack.c.l.b16 %v757
        %v1009 = vunpack.c.l.b16 %v758
        %v1010 = vunpack.c.l.b16 %v759
        %v1011 = vunpack.c.l.b16 %v760
        %v1012 = vpack.c.b16 %v1009, %v1008
        %v1013 = vpack.c.b16 %v1011, %v1010
        %v1017 = vsel %vm768, %v1003, 0
        %1019 = vmatpush.bf16.msra.mxu0 0
        %1020 = vmatpush.bf16.msra.mxu0 0
        %1021 = vmatpush.bf16.msra.mxu0 0
        %1022 = vmatpush.bf16.msra.mxu0 0
        %1023 = vmatpush.bf16.msra.mxu0 0
        %1024 = vmatpush.bf16.msra.mxu0 0
        %1025 = vmatpush.bf16.msra.mxu0 %v1013
        %1026 = vmatpush.bf16.msra.mxu0 %v1012
        %1027 = vmatmul.bf16.gmra.mxu0 %v1017
        %v1028 = vpop.f32.mrf.mxu0
        %v1029 = vadd.f32 0.0, %v1028
        %v1030 = vpop.f32.mrf.mxu0
        %1031 = vdwg.mxu0
        %v1032 = vadd.f32 %v943, %v1029
        %1033 = vrot.lane.b32.xlu0 %v825, 32
        %v1034 = vpop.permute.xlu0 %1033
        %1035 = vrot.lane.b32.xlu0 %v830, 32
        %v1036 = vpop.permute.xlu0 %1035
        %v1038 = vsel %vm768, %v1034, 0
        %v1041 = vsel %vm768, %v1036, 0
        %1043 = vmatpush.bf16.xpose.msra.mxu0 0
        %1044 = vmatpush.bf16.xpose.msra.mxu0 0
        %1045 = vmatpush.bf16.xpose.msra.mxu0 0
        %1046 = vmatpush.bf16.xpose.msra.mxu0 0
        %1047 = vmatpush.bf16.xpose.msra.mxu0 0
        %1048 = vmatpush.bf16.xpose.msra.mxu0 0
        %1049 = vmatpush.bf16.xpose.msra.mxu0 0
        %1050 = vmatpush.bf16.xpose.msra.mxu0 %v1041
        %1051 = vmatmul.bf16.gmra.mxu0 %v1038
        %v1052 = vpop.f32.mrf.mxu0
        %v1053 = vadd.f32 0.0, %v1052
        %v1054 = vpop.f32.mrf.mxu0
        %1055 = vdwg.mxu0
        %v1056 = vmul.f32 %v1053, 0.35355338
        %v1057 = vsel %vm789, %v1056, -inf
        %1058 = vmax.xlane.f32.xlu0 %v1057
        %v1059 = vpop.xlane.xlu0 %1058
        %v1060 = vsub.f32 %v1056, %v1059
        %v1061 = vmul.f32 %v1060, 1.442695
        %v1062 = vpow.pop %v1061
        %v1063 = vsel %vm789, %v1062, 0.0
        %1064 = vadd.xlane.f32.xlu0 %v1063
        %v1065 = vpop.xlane.xlu0 %1064
        %v1066 = vrcp.pop %v1065
        %v1067 = vmul.f32 %v1062, %v1066
        %v1068 = vpack.c.bf16 %v1067, %v1067
        %1069 = vrot.lane.b32.xlu0 %v867, 32
        %v1070 = vpop.permute.xlu0 %1069
        %v1072 = vsel %vm789, %v1068, 0
        %v1075 = vsel %vm805, %v1070, 0
        %1077 = vmatpush.bf16.msra.mxu0 0
        %1078 = vmatpush.bf16.msra.mxu0 0
        %1079 = vmatpush.bf16.msra.mxu0 0
        %1080 = vmatpush.bf16.msra.mxu0 0
        %1081 = vmatpush.bf16.msra.mxu0 0
        %1082 = vmatpush.bf16.msra.mxu0 0
        %1083 = vmatpush.bf16.msra.mxu0 0
        %1084 = vmatpush.bf16.msra.mxu0 %v1075
        %1085 = vmatmul.bf16.gmra.mxu0 %v1072
        %v1086 = vpop.f32.mrf.mxu0
        %v1087 = vadd.f32 0.0, %v1086
        %v1088 = vpop.f32.mrf.mxu0
        %1089 = vdwg.mxu0
        %v1090 = vpack.c.bf16 %v1087, %v1087
        %v1095 = vunpack.c.l.b16 %v761
        %v1096 = vunpack.c.l.b16 %v762
        %v1097 = vunpack.c.l.b16 %v763
        %v1098 = vunpack.c.l.b16 %v764
        %v1099 = vpack.c.b16 %v1096, %v1095
        %v1100 = vpack.c.b16 %v1098, %v1097
        %v1104 = vsel %vm768, %v1090, 0
        %1106 = vmatpush.bf16.msra.mxu0 0
        %1107 = vmatpush.bf16.msra.mxu0 0
        %1108 = vmatpush.bf16.msra.mxu0 0
        %1109 = vmatpush.bf16.msra.mxu0 0
        %1110 = vmatpush.bf16.msra.mxu0 0
        %1111 = vmatpush.bf16.msra.mxu0 0
        %1112 = vmatpush.bf16.msra.mxu0 %v1100
        %1113 = vmatpush.bf16.msra.mxu0 %v1099
        %1114 = vmatmul.bf16.gmra.mxu0 %v1104
        %v1115 = vpop.f32.mrf.mxu0
        %v1116 = vadd.f32 0.0, %v1115
        %v1117 = vpop.f32.mrf.mxu0
        %1118 = vdwg.mxu0
        %v1119 = vadd.f32 %v1032, %v1116
        %v1120 = vld [vmem:[%s4] sm:$0x1]
        %v1122 = vperm.slane %v1120, 0
        %v1124 = vadd.f32 %v1119, %v1122
        %v1125 = vadd.f32 %v540, %v1124
        %v1126 = vld [vmem:[%s9] sm:$0x1]
        %v1127 = vld [vmem:[%s10] sm:$0x1]
        %1128 = vadd.xlane.f32.xlu0 %v1125
        %v1129 = vpop.xlane.xlu0 %1128
        %v1130 = vmul.f32 %v1129, 0.03125
        %v1131 = vmul.f32 %v1125, %v1125
        %1132 = vadd.xlane.f32.xlu0 %v1131
        %v1133 = vpop.xlane.xlu0 %1132
        %v1134 = vmul.f32 %v1133, 0.03125
        %v1135 = vmul.f32 %v1130, %v1130
        %v1136 = vsub.f32 %v1134, %v1135
        %v1137 = vsub.f32 %v1125, %v1130
        %v1138 = vadd.f32 %v1136, 1e-05
        %v1139 = vrsqrt.pop %v1138
        %v1140 = vmul.f32 %v1139, %v1138
        %v1141 = vmul.f32 %v1140, %v1139
        %v1142 = vmul.f32 0.5, %v1141
        %v1143 = vsub.f32 1.5, %v1142
        %v1144 = vmul.f32 %v1139, %v1143
        %vm1145 = vweird.f32 %v1138
        %vm1146 = vweird.f32 %v1139
        %vm1147 = vmor %vm1145, %vm1146
        %v1148 = vsel %vm1147, %v1139, %v1144
        %v1149 = vmul.f32 %v1137, %v1148
        %v1151 = vperm.slane %v1126, 0
        %v1153 = vmul.f32 %v1149, %v1151
        %v1155 = vperm.slane %v1127, 0
        %v1157 = vadd.f32 %v1153, %v1155
        %v1158 = vpack.c.bf16 %v1157, %v1157
        %v1159 = vld [vmem:[#allocation10] sm:$0xf]
        %v1160 = vld [vmem:[#allocation10 + $0x4] sm:$0xf]
        %v1161 = vld [vmem:[#allocation10 + $0x8] sm:$0xf]
        %v1162 = vld [vmem:[#allocation10 + $0xc] sm:$0xf]
        %v1163 = vld [vmem:[#allocation10 + $0x10] sm:$0xf]
        %v1164 = vld [vmem:[#allocation10 + $0x14] sm:$0xf]
        %v1165 = vld [vmem:[#allocation10 + $0x18] sm:$0xf]
        %v1166 = vld [vmem:[#allocation10 + $0x1c] sm:$0xf]
        %v1167 = vld [vmem:[#allocation10 + $0x20] sm:$0xf]
        %v1168 = vld [vmem:[#allocation10 + $0x24] sm:$0xf]
        %v1169 = vld [vmem:[#allocation10 + $0x28] sm:$0xf]
        %v1170 = vld [vmem:[#allocation10 + $0x2c] sm:$0xf]
        %v1171 = vld [vmem:[#allocation10 + $0x30] sm:$0xf]
        %v1172 = vld [vmem:[#allocation10 + $0x34] sm:$0xf]
        %v1173 = vld [vmem:[#allocation10 + $0x38] sm:$0xf]
        %v1174 = vld [vmem:[#allocation10 + $0x3c] sm:$0xf]
        %v1175 = vld [vmem:[%s6] sm:$0x1]
        %v1177 = vperm.slane %v1175, 0
        %v1195 = vunpack.c.l.b16 %v1159
        %v1196 = vunpack.c.l.b16 %v1160
        %v1197 = vunpack.c.l.b16 %v1161
        %v1198 = vunpack.c.l.b16 %v1162
        %v1199 = vunpack.c.l.b16 %v1163
        %v1200 = vunpack.c.l.b16 %v1164
        %v1201 = vunpack.c.l.b16 %v1165
        %v1202 = vunpack.c.l.b16 %v1166
        %v1203 = vunpack.c.l.b16 %v1167
        %v1204 = vunpack.c.l.b16 %v1168
        %v1205 = vunpack.c.l.b16 %v1169
        %v1206 = vunpack.c.l.b16 %v1170
        %v1207 = vunpack.c.l.b16 %v1171
        %v1208 = vunpack.c.l.b16 %v1172
        %v1209 = vunpack.c.l.b16 %v1173
        %v1210 = vunpack.c.l.b16 %v1174
        %v1211 = vpack.c.b16 %v1196, %v1195
        %v1212 = vpack.c.b16 %v1198, %v1197
        %v1213 = vpack.c.b16 %v1200, %v1199
        %v1214 = vpack.c.b16 %v1202, %v1201
        %v1215 = vpack.c.b16 %v1204, %v1203
        %v1216 = vpack.c.b16 %v1206, %v1205
        %v1217 = vpack.c.b16 %v1208, %v1207
        %v1218 = vpack.c.b16 %v1210, %v1209
        %1227 = vmatpush.bf16.msra.mxu0 %v1218
        %1228 = vmatpush.bf16.msra.mxu0 %v1217
        %1229 = vmatpush.bf16.msra.mxu0 %v1216
        %1230 = vmatpush.bf16.msra.mxu0 %v1215
        %1231 = vmatpush.bf16.msra.mxu0 %v1214
        %1232 = vmatpush.bf16.msra.mxu0 %v1213
        %1233 = vmatpush.bf16.msra.mxu0 %v1212
        %1234 = vmatpush.bf16.msra.mxu0 %v1211
        %1235 = vmatmul.bf16.gmra.mxu0 %v1158
        %v1236 = vpop.f32.mrf.mxu0
        %v1237 = vadd.f32 %v1177, %v1236
        %v1238 = vpop.f32.mrf.mxu0
        %1239 = vdwg.mxu0
        %v1240 = vmax.f32 %v1237, 0.0
        %v1241 = vpack.c.bf16 %v1240, %v1240
        %v1242 = vld [vmem:[#allocation11] sm:$0xf]
        %v1243 = vld [vmem:[#allocation11 + $0x4] sm:$0xf]
        %v1244 = vld [vmem:[#allocation11 + $0x8] sm:$0xf]
        %v1245 = vld [vmem:[#allocation11 + $0xc] sm:$0xf]
        %v1246 = vld [vmem:[#allocation11 + $0x10] sm:$0xf]
        %v1247 = vld [vmem:[#allocation11 + $0x14] sm:$0xf]
        %v1248 = vld [vmem:[#allocation11 + $0x18] sm:$0xf]
        %v1249 = vld [vmem:[#allocation11 + $0x1c] sm:$0xf]
        %v1250 = vld [vmem:[#allocation11 + $0x20] sm:$0xf]
        %v1251 = vld [vmem:[#allocation11 + $0x24] sm:$0xf]
        %v1252 = vld [vmem:[#allocation11 + $0x28] sm:$0xf]
        %v1253 = vld [vmem:[#allocation11 + $0x2c] sm:$0xf]
        %v1254 = vld [vmem:[#allocation11 + $0x30] sm:$0xf]
        %v1255 = vld [vmem:[#allocation11 + $0x34] sm:$0xf]
        %v1256 = vld [vmem:[#allocation11 + $0x38] sm:$0xf]
        %v1257 = vld [vmem:[#allocation11 + $0x3c] sm:$0xf]
        %v1258 = vld [vmem:[%s8] sm:$0x1]
        %v1260 = vperm.slane %v1258, 0
        %v1278 = vunpack.c.l.b16 %v1242
        %v1279 = vunpack.c.l.b16 %v1243
        %v1280 = vunpack.c.l.b16 %v1244
        %v1281 = vunpack.c.l.b16 %v1245
        %v1282 = vunpack.c.l.b16 %v1246
        %v1283 = vunpack.c.l.b16 %v1247
        %v1284 = vunpack.c.l.b16 %v1248
        %v1285 = vunpack.c.l.b16 %v1249
        %v1286 = vunpack.c.l.b16 %v1250
        %v1287 = vunpack.c.l.b16 %v1251
        %v1288 = vunpack.c.l.b16 %v1252
        %v1289 = vunpack.c.l.b16 %v1253
        %v1290 = vunpack.c.l.b16 %v1254
        %v1291 = vunpack.c.l.b16 %v1255
        %v1292 = vunpack.c.l.b16 %v1256
        %v1293 = vunpack.c.l.b16 %v1257
        %v1294 = vpack.c.b16 %v1279, %v1278
        %v1295 = vpack.c.b16 %v1281, %v1280
        %v1296 = vpack.c.b16 %v1283, %v1282
        %v1297 = vpack.c.b16 %v1285, %v1284
        %v1298 = vpack.c.b16 %v1287, %v1286
        %v1299 = vpack.c.b16 %v1289, %v1288
        %v1300 = vpack.c.b16 %v1291, %v1290
        %v1301 = vpack.c.b16 %v1293, %v1292
        %1310 = vmatpush.bf16.msra.mxu0 %v1301
        %1311 = vmatpush.bf16.msra.mxu0 %v1300
        %1312 = vmatpush.bf16.msra.mxu0 %v1299
        %1313 = vmatpush.bf16.msra.mxu0 %v1298
        %1314 = vmatpush.bf16.msra.mxu0 %v1297
        %1315 = vmatpush.bf16.msra.mxu0 %v1296
        %1316 = vmatpush.bf16.msra.mxu0 %v1295
        %1317 = vmatpush.bf16.msra.mxu0 %v1294
        %1318 = vmatmul.bf16.gmra.mxu0 %v1241
        %v1319 = vpop.f32.mrf.mxu0
        %v1320 = vadd.f32 %v1260, %v1319
        %v1321 = vpop.f32.mrf.mxu0
        %1322 = vdwg.mxu0
        %v1323 = vadd.f32 %v1157, %v1320
        %v1324 = vld [vmem:[%s11] sm:$0x1]
        %v1325 = vld [vmem:[%s12] sm:$0x1]
        %1326 = vadd.xlane.f32.xlu0 %v1323
        %v1327 = vpop.xlane.xlu0 %1326
        %v1328 = vmul.f32 %v1327, 0.03125
        %v1329 = vmul.f32 %v1323, %v1323
        %1330 = vadd.xlane.f32.xlu0 %v1329
        %v1331 = vpop.xlane.xlu0 %1330
        %v1332 = vmul.f32 %v1331, 0.03125
        %v1333 = vmul.f32 %v1328, %v1328
        %v1334 = vsub.f32 %v1332, %v1333
        %v1335 = vsub.f32 %v1323, %v1328
        %v1336 = vadd.f32 %v1334, 1e-05
        %v1337 = vrsqrt.pop %v1336
        %v1338 = vmul.f32 %v1337, %v1336
        %v1339 = vmul.f32 %v1338, %v1337
        %v1340 = vmul.f32 0.5, %v1339
        %v1341 = vsub.f32 1.5, %v1340
        %v1342 = vmul.f32 %v1337, %v1341
        %vm1343 = vweird.f32 %v1336
        %vm1344 = vweird.f32 %v1337
        %vm1345 = vmor %vm1343, %vm1344
        %v1346 = vsel %vm1345, %v1337, %v1342
        %v1347 = vmul.f32 %v1335, %v1346
        %v1349 = vperm.slane %v1324, 0
        %v1351 = vmul.f32 %v1347, %v1349
        %v1353 = vperm.slane %v1325, 0
        %v1355 = vadd.f32 %v1351, %v1353
        %1356 = vst [vmem:[%s538] sm:$0xff] %v1355
        %s1357 = sand.u32 %s319, 1
        %s1358 = scalar_lea.sflag [#allocation4], %s1357
        %s1359 = sand.u32 %s319, 1
        %s1360 = smul.addr %s1359, 8
        %s1361 = scalar_lea.vmem [#allocation13], %s1360
        // Predicated region
        $region97: #{tpu_custom_call.1} parent=71 // pred_check
          %p1362 = pneg %p329
        $region98: #{tpu_custom_call.1} parent=71 // pred_check_branch
          %1364 = sbr.rel (%p1362) target = $region100
        $region99: #{tpu_custom_call.1} parent=71 // pred_region
          %1366 = vsyncadd %s1358, 0
          %s1367 = smul.addr %s33, 8
          %s1368 = scalar_lea.hbm %s13, %s1367
          %s1370 = sshll.u32 %s1361, 4
          %s1371 = int_to_ptr.vmem [resolvable:$true] %s1370
          %s1372 = sshll.u32 %s1368, 4
          %s1373 = int_to_ptr.hbm [resolvable:$true] %s1372
          %1375 = dma.vmem_to_hbm [thread:$0]  %s1371, 128, %s1373, %s1358
        $region100: #{tpu_custom_call.1} parent=71 // pred_fallthru
          _
      $region72: #{tpu_custom_call.1} parent=5 // pred_fallthru
        _
      %p1376 = scmp.le.s32.totalorder 2, %s28
      // Predicated region
      $region101: #{tpu_custom_call.1} parent=5 // pred_check
        %p1377 = pneg %p1376
      $region102: #{tpu_custom_call.1} parent=5 // pred_check_branch
        %1379 = sbr.rel (%p1377) target = $region104
      $region103: #{tpu_custom_call.1} parent=5 // pred_region
        %s1380 = ssub.s32 %s28, 2
        // Predicated region
        $region105: #{tpu_custom_call.1} parent=103 // pred_check
          %p1381 = pneg %p335
        $region106: #{tpu_custom_call.1} parent=103 // pred_check_branch
          %1383 = sbr.rel (%p1381) target = $region108
        $region107: #{tpu_custom_call.1} parent=103 // pred_region
          %s1384 = sand.u32 %s320, 1
          %s1385 = scalar_lea.sflag [#allocation4], %s1384
          %s1386 = sand.u32 %s320, 1
          %s1387 = smul.addr %s1386, 8
          %s1388 = scalar_lea.vmem [#allocation13], %s1387
          %1390 = dma.done %s1385, 128
        $region108: #{tpu_custom_call.1} parent=103 // pred_fallthru
          _
      $region104: #{tpu_custom_call.1} parent=5 // pred_fallthru
        _
    $region6: #{tpu_custom_call.1} parent=1 // loop_footer
      %s32 = sadd.s32 1, %s28
    $region7: #{tpu_custom_call.1} parent=1 // loop_footer_branch
      %27 = sbr.rel target = $region3
    $region8: #{tpu_custom_call.1} parent=1 // loop_exit
      _
    %1391 = vsyncpa [#allocation3], 1
    %s1392 = scalar_lea.sflag [#allocation3], 1
    %1393 = vsyncpa %s1392, 1
    %1394 = vsyncpa [#allocation6], 1
    %1395 = vsyncpa [#allocation9], 1
    %1396 = vsyncpa [#allocation12], 1
    %1397 = vsyncpa [#allocation4], 1
    %s1398 = scalar_lea.sflag [#allocation4], 1
    %1399 = vsyncpa %s1398, 1

// kernel: tpu_custom_call.1
$region0: #{tpu_custom_call.1}
  #allocation0 [shape = 'u32[]', space=smem, size = 0x4, offset = 0x4, fixed_abs, tag = 'smem constant byte address 0x4 - core index']
  #allocation1 [shape = 'u32[72,128]{1,0:T(1,128)}', space=vmem, size = 0x9000, scoped, tag = 'internal scratch']
  %s0 = inlined_call_operand.hbm [shape: f32[2,8,128], index: 0, kind: input, shape index: {}]
  %s1 = inlined_call_operand.hbm [shape: bf16[128,384], index: 1, kind: input, shape index: {}]
  %s2 = inlined_call_operand.hbm [shape: f32[1,384], index: 2, kind: input, shape index: {}]
  %s3 = inlined_call_operand.hbm [shape: bf16[128,128], index: 3, kind: input, shape index: {}]
  %s4 = inlined_call_operand.vmem [shape: f32[1,128], index: 4, kind: input, shape index: {}]
  %s5 = inlined_call_operand.hbm [shape: bf16[128,128], index: 5, kind: input, shape index: {}]
  %s6 = inlined_call_operand.vmem [shape: f32[1,128], index: 6, kind: input, shape index: {}]
  %s7 = inlined_call_operand.hbm [shape: bf16[128,128], index: 7, kind: input, shape index: {}]
  %s8 = inlined_call_operand.vmem [shape: f32[1,128], index: 8, kind: input, shape index: {}]
  %s9 = inlined_call_operand.vmem [shape: f32[1,128], index: 9, kind: input, shape index: {}]
  %s10 = inlined_call_operand.vmem [shape: f32[1,128], index: 10, kind: input, shape index: {}]
  %s11 = inlined_call_operand.vmem [shape: f32[1,128], index: 11, kind: input, shape index: {}]
  %s12 = inlined_call_operand.vmem [shape: f32[1,128], index: 12, kind: input, shape index: {}]
  %s13 = inlined_call_operand.hbm [shape: f32[2,8,128], index: 13, kind: output, shape index: {}]
  %s14 = sld [smem:[#allocation0]]
  $region109: #{tpu_custom_call.1} parent=0
    _
  %s16 = ssub.s32 1, %s14
  %s17 = scalar_select 0, %s16, %s14
  $region1: #{tpu_custom_call.1} parent=0
    #allocation2 [shape = 'u8[8192]{0}', space=vmem, size = 0x2000, scoped, tag = 'input window, operand 0']
    #allocation3 [shape = 's32[2]{0}', space=sflag, size = 0x8, scoped, tag = 'scoped memory for tpu_custom_call.1']
    #allocation4 [shape = 's32[2]{0}', space=sflag, size = 0x8, scoped, tag = 'scoped memory for tpu_custom_call.1']
    #allocation5 [shape = 'u8[98304]{0}', space=vmem, size = 0x18000, scoped, tag = 'input window, operand 1, single buffered']
    #allocation6 [shape = 's32[1]{0}', space=sflag, size = 0x4, scoped, tag = 'scoped memory for tpu_custom_call.1']
    #allocation7 [shape = 'u8[1536]{0}', space=vmem, size = 0x800, scoped, tag = 'input window, operand 2, single buffered']
    #allocation8 [shape = 'u8[32768]{0}', space=vmem, size = 0x8000, scoped, tag = 'input window, operand 3, single buffered']
    #allocation9 [shape = 's32[1]{0}', space=sflag, size = 0x4, scoped, tag = 'scoped memory for tpu_custom_call.1']
    #allocation10 [shape = 'u8[32768]{0}', space=vmem, size = 0x8000, scoped, tag = 'input window, operand 5, single buffered']
    #allocation11 [shape = 'u8[32768]{0}', space=vmem, size = 0x8000, scoped, tag = 'input window, operand 7, single buffered']
    #allocation12 [shape = 's32[1]{0}', space=sflag, size = 0x4, scoped, tag = 'scoped memory for tpu_custom_call.1']
    #allocation13 [shape = 'u8[8192]{0}', space=vmem, size = 0x2000, scoped, tag = 'output window, operand 0']
    %18 = vsyncpa [#allocation3], 0
    %s19 = scalar_lea.sflag [#allocation3], 1
    %20 = vsyncpa %s19, 0
    %21 = vsyncpa [#allocation6], 0
    %22 = vsyncpa [#allocation9], 0
    %23 = vsyncpa [#allocation12], 0
    %24 = vsyncpa [#allocation4], 0
    %s25 = scalar_lea.sflag [#allocation4], 1
    %26 = vsyncpa %s25, 0
    loop: start=0, step=1, limit=4
    $region2: #{tpu_custom_call.1} parent=1 // loop_pre_header
      _
    $region3: #{tpu_custom_call.1} parent=1 // loop_header
      %s28 = sphi 0, %s32
      %p29 = scmp.ge.s32.totalorder %s28, 4
      %s38 = sphi 0, %s40
      %s41 = sphi 0, %s38
      %s42 = sphi 0, %s41
      %s58 = sphi 0, %s42
      %s62 = sphi 0, %s62
      %s64 = sphi 0, %s62
      %s65 = sphi 0, %s64
      %s79 = sphi 0, %s65
      %s83 = sphi 0, %s83
      %s85 = sphi 0, %s83
      %s86 = sphi 0, %s85
      %s100 = sphi 0, %s86
      %s104 = sphi 0, %s104
      %s106 = sphi 0, %s104
      %s107 = sphi 0, %s106
      %s121 = sphi 0, %s107
      %s125 = sphi 0, %s125
      %s127 = sphi 0, %s125
      %s128 = sphi 0, %s127
      %s142 = sphi 0, %s128
      %s146 = sphi 0, %s146
      %s148 = sphi 0, %s146
      %s149 = sphi 0, %s148
      %s163 = sphi 0, %s149
      %s167 = sphi 0, %s167
      %s169 = sphi 0, %s167
      %s170 = sphi 0, %s169
      %s184 = sphi 0, %s170
      %s188 = sphi 0, %s188
      %s190 = sphi 0, %s188
      %s191 = sphi 0, %s190
      %s205 = sphi 0, %s191
      %s209 = sphi 0, %s209
      %s211 = sphi 0, %s209
      %s212 = sphi 0, %s211
      %s226 = sphi 0, %s212
      %s230 = sphi 0, %s230
      %s232 = sphi 0, %s230
      %s233 = sphi 0, %s232
      %s247 = sphi 0, %s233
      %s251 = sphi 0, %s251
      %s253 = sphi 0, %s251
      %s254 = sphi 0, %s253
      %s268 = sphi 0, %s254
      %s272 = sphi 0, %s272
      %s274 = sphi 0, %s272
      %s275 = sphi 0, %s274
      %s289 = sphi 0, %s275
      %s293 = sphi 0, %s293
      %s295 = sphi 0, %s293
      %s296 = sphi 0, %s295
      %s310 = sphi 0, %s296
      %s316 = sphi 0, %s318
      %s319 = sphi 0, %s316
      %s320 = sphi 0, %s319
      %s336 = sphi 0, %s320
    $region4: #{tpu_custom_call.1} parent=1 // loop_header_branch
      %31 = sbr.rel (%p29) target = $region8
    $region5: #{tpu_custom_call.1} parent=1 // loop_body
      %s33 = ssub.s32 %s28, 1
      %s34 = ssub.s32 %s28, 2
      %s35 = sadd.s32 %s28, 1
      %s36 = ssub.s32 %s28, %s35
      %p37 = scmp.eq.s32.totalorder %s36, 0
      %s39 = sadd.s32 %s38, 1
      %s40 = scalar_select %p37, %s38, %s39
      %p43 = pneg %p37
      %p44 = scmp.eq.s32.totalorder %s28, 1
      %p45 = por %p43, %p44
      %p46 = scmp.ne.s32.totalorder %s38, %s41
      %p47 = scmp.eq.s32.totalorder %s28, 0
      %p48 = por %p46, %p47
      %p49 = scmp.ne.s32.totalorder %s38, %s41
      %p50 = scmp.eq.s32.totalorder %s33, 1
      %p51 = por %p49, %p50
      %p52 = scmp.ne.s32.totalorder %s41, %s42
      %p53 = scmp.eq.s32.totalorder %s33, 0
      %p54 = por %p52, %p53
      %p55 = scmp.ne.s32.totalorder %s41, %s42
      %p56 = scmp.eq.s32.totalorder %s34, 1
      %p57 = por %p55, %p56
      %p59 = scmp.ne.s32.totalorder %s42, %s58
      %p60 = scmp.eq.s32.totalorder %s34, 0
      %p61 = por %p59, %p60
      %s63 = sadd.s32 %s62, 1
      %p66 = scmp.eq.s32.totalorder %s28, 1
      %p67 = scmp.ne.s32.totalorder %s62, %s64
      %p68 = scmp.eq.s32.totalorder %s28, 0
      %p69 = por %p67, %p68
      %p70 = scmp.ne.s32.totalorder %s62, %s64
      %p71 = scmp.eq.s32.totalorder %s33, 1
      %p72 = por %p70, %p71
      %p73 = scmp.ne.s32.totalorder %s64, %s65
      %p74 = scmp.eq.s32.totalorder %s33, 0
      %p75 = por %p73, %p74
      %p76 = scmp.ne.s32.totalorder %s64, %s65
      %p77 = scmp.eq.s32.totalorder %s34, 1
      %p78 = por %p76, %p77
      %p80 = scmp.ne.s32.totalorder %s65, %s79
      %p81 = scmp.eq.s32.totalorder %s34, 0
      %p82 = por %p80, %p81
      %s84 = sadd.s32 %s83, 1
      %p87 = scmp.eq.s32.totalorder %s28, 1
      %p88 = scmp.ne.s32.totalorder %s83, %s85
      %p89 = scmp.eq.s32.totalorder %s28, 0
      %p90 = por %p88, %p89
      %p91 = scmp.ne.s32.totalorder %s83, %s85
      %p92 = scmp.eq.s32.totalorder %s33, 1
      %p93 = por %p91, %p92
      %p94 = scmp.ne.s32.totalorder %s85, %s86
      %p95 = scmp.eq.s32.totalorder %s33, 0
      %p96 = por %p94, %p95
      %p97 = scmp.ne.s32.totalorder %s85, %s86
      %p98 = scmp.eq.s32.totalorder %s34, 1
      %p99 = por %p97, %p98
      %p101 = scmp.ne.s32.totalorder %s86, %s100
      %p102 = scmp.eq.s32.totalorder %s34, 0
      %p103 = por %p101, %p102
      %s105 = sadd.s32 %s104, 1
      %p108 = scmp.eq.s32.totalorder %s28, 1
      %p109 = scmp.ne.s32.totalorder %s104, %s106
      %p110 = scmp.eq.s32.totalorder %s28, 0
      %p111 = por %p109, %p110
      %p112 = scmp.ne.s32.totalorder %s104, %s106
      %p113 = scmp.eq.s32.totalorder %s33, 1
      %p114 = por %p112, %p113
      %p115 = scmp.ne.s32.totalorder %s106, %s107
      %p116 = scmp.eq.s32.totalorder %s33, 0
      %p117 = por %p115, %p116
      %p118 = scmp.ne.s32.totalorder %s106, %s107
      %p119 = scmp.eq.s32.totalorder %s34, 1
      %p120 = por %p118, %p119
      %p122 = scmp.ne.s32.totalorder %s107, %s121
      %p123 = scmp.eq.s32.totalorder %s34, 0
      %p124 = por %p122, %p123
      %s126 = sadd.s32 %s125, 1
      %p129 = scmp.eq.s32.totalorder %s28, 1
      %p130 = scmp.ne.s32.totalorder %s125, %s127
      %p131 = scmp.eq.s32.totalorder %s28, 0
      %p132 = por %p130, %p131
      %p133 = scmp.ne.s32.totalorder %s125, %s127
      %p134 = scmp.eq.s32.totalorder %s33, 1
      %p135 = por %p133, %p134
      %p136 = scmp.ne.s32.totalorder %s127, %s128
      %p137 = scmp.eq.s32.totalorder %s33, 0
      %p138 = por %p136, %p137
      %p139 = scmp.ne.s32.totalorder %s127, %s128
      %p140 = scmp.eq.s32.totalorder %s34, 1
      %p141 = por %p139, %p140
      %p143 = scmp.ne.s32.totalorder %s128, %s142
      %p144 = scmp.eq.s32.totalorder %s34, 0
      %p145 = por %p143, %p144
      %s147 = sadd.s32 %s146, 1
      %p150 = scmp.eq.s32.totalorder %s28, 1
      %p151 = scmp.ne.s32.totalorder %s146, %s148
      %p152 = scmp.eq.s32.totalorder %s28, 0
      %p153 = por %p151, %p152
      %p154 = scmp.ne.s32.totalorder %s146, %s148
      %p155 = scmp.eq.s32.totalorder %s33, 1
      %p156 = por %p154, %p155
      %p157 = scmp.ne.s32.totalorder %s148, %s149
      %p158 = scmp.eq.s32.totalorder %s33, 0
      %p159 = por %p157, %p158
      %p160 = scmp.ne.s32.totalorder %s148, %s149
      %p161 = scmp.eq.s32.totalorder %s34, 1
      %p162 = por %p160, %p161
      %p164 = scmp.ne.s32.totalorder %s149, %s163
      %p165 = scmp.eq.s32.totalorder %s34, 0
      %p166 = por %p164, %p165
      %s168 = sadd.s32 %s167, 1
      %p171 = scmp.eq.s32.totalorder %s28, 1
      %p172 = scmp.ne.s32.totalorder %s167, %s169
      %p173 = scmp.eq.s32.totalorder %s28, 0
      %p174 = por %p172, %p173
      %p175 = scmp.ne.s32.totalorder %s167, %s169
      %p176 = scmp.eq.s32.totalorder %s33, 1
      %p177 = por %p175, %p176
      %p178 = scmp.ne.s32.totalorder %s169, %s170
      %p179 = scmp.eq.s32.totalorder %s33, 0
      %p180 = por %p178, %p179
      %p181 = scmp.ne.s32.totalorder %s169, %s170
      %p182 = scmp.eq.s32.totalorder %s34, 1
      %p183 = por %p181, %p182
      %p185 = scmp.ne.s32.totalorder %s170, %s184
      %p186 = scmp.eq.s32.totalorder %s34, 0
      %p187 = por %p185, %p186
      %s189 = sadd.s32 %s188, 1
      %p192 = scmp.eq.s32.totalorder %s28, 1
      %p193 = scmp.ne.s32.totalorder %s188, %s190
      %p194 = scmp.eq.s32.totalorder %s28, 0
      %p195 = por %p193, %p194
      %p196 = scmp.ne.s32.totalorder %s188, %s190
      %p197 = scmp.eq.s32.totalorder %s33, 1
      %p198 = por %p196, %p197
      %p199 = scmp.ne.s32.totalorder %s190, %s191
      %p200 = scmp.eq.s32.totalorder %s33, 0
      %p201 = por %p199, %p200
      %p202 = scmp.ne.s32.totalorder %s190, %s191
      %p203 = scmp.eq.s32.totalorder %s34, 1
      %p204 = por %p202, %p203
      %p206 = scmp.ne.s32.totalorder %s191, %s205
      %p207 = scmp.eq.s32.totalorder %s34, 0
      %p208 = por %p206, %p207
      %s210 = sadd.s32 %s209, 1
      %p213 = scmp.eq.s32.totalorder %s28, 1
      %p214 = scmp.ne.s32.totalorder %s209, %s211
      %p215 = scmp.eq.s32.totalorder %s28, 0
      %p216 = por %p214, %p215
      %p217 = scmp.ne.s32.totalorder %s209, %s211
      %p218 = scmp.eq.s32.totalorder %s33, 1
      %p219 = por %p217, %p218
      %p220 = scmp.ne.s32.totalorder %s211, %s212
      %p221 = scmp.eq.s32.totalorder %s33, 0
      %p222 = por %p220, %p221
      %p223 = scmp.ne.s32.totalorder %s211, %s212
      %p224 = scmp.eq.s32.totalorder %s34, 1
      %p225 = por %p223, %p224
      %p227 = scmp.ne.s32.totalorder %s212, %s226
      %p228 = scmp.eq.s32.totalorder %s34, 0
      %p229 = por %p227, %p228
      %s231 = sadd.s32 %s230, 1
      %p234 = scmp.eq.s32.totalorder %s28, 1
      %p235 = scmp.ne.s32.totalorder %s230, %s232
      %p236 = scmp.eq.s32.totalorder %s28, 0
      %p237 = por %p235, %p236
      %p238 = scmp.ne.s32.totalorder %s230, %s232
      %p239 = scmp.eq.s32.totalorder %s33, 1
      %p240 = por %p238, %p239
      %p241 = scmp.ne.s32.totalorder %s232, %s233
      %p242 = scmp.eq.s32.totalorder %s33, 0
      %p243 = por %p241, %p242
      %p244 = scmp.ne.s32.totalorder %s232, %s233
      %p245 = scmp.eq.s32.totalorder %s34, 1
      %p246 = por %p244, %p245
      %p248 = scmp.ne.s32.totalorder %s233, %s247
      %p249 = scmp.eq.s32.totalorder %s34, 0
      %p250 = por %p248, %p249
      %s252 = sadd.s32 %s251, 1
      %p255 = scmp.eq.s32.totalorder %s28, 1
      %p256 = scmp.ne.s32.totalorder %s251, %s253
      %p257 = scmp.eq.s32.totalorder %s28, 0
      %p258 = por %p256, %p257
      %p259 = scmp.ne.s32.totalorder %s251, %s253
      %p260 = scmp.eq.s32.totalorder %s33, 1
      %p261 = por %p259, %p260
      %p262 = scmp.ne.s32.totalorder %s253, %s254
      %p263 = scmp.eq.s32.totalorder %s33, 0
      %p264 = por %p262, %p263
      %p265 = scmp.ne.s32.totalorder %s253, %s254
      %p266 = scmp.eq.s32.totalorder %s34, 1
      %p267 = por %p265, %p266
      %p269 = scmp.ne.s32.totalorder %s254, %s268
      %p270 = scmp.eq.s32.totalorder %s34, 0
      %p271 = por %p269, %p270
      %s273 = sadd.s32 %s272, 1
      %p276 = scmp.eq.s32.totalorder %s28, 1
      %p277 = scmp.ne.s32.totalorder %s272, %s274
      %p278 = scmp.eq.s32.totalorder %s28, 0
      %p279 = por %p277, %p278
      %p280 = scmp.ne.s32.totalorder %s272, %s274
      %p281 = scmp.eq.s32.totalorder %s33, 1
      %p282 = por %p280, %p281
      %p283 = scmp.ne.s32.totalorder %s274, %s275
      %p284 = scmp.eq.s32.totalorder %s33, 0
      %p285 = por %p283, %p284
      %p286 = scmp.ne.s32.totalorder %s274, %s275
      %p287 = scmp.eq.s32.totalorder %s34, 1
      %p288 = por %p286, %p287
      %p290 = scmp.ne.s32.totalorder %s275, %s289
      %p291 = scmp.eq.s32.totalorder %s34, 0
      %p292 = por %p290, %p291
      %s294 = sadd.s32 %s293, 1
      %p297 = scmp.eq.s32.totalorder %s28, 1
      %p298 = scmp.ne.s32.totalorder %s293, %s295
      %p299 = scmp.eq.s32.totalorder %s28, 0
      %p300 = por %p298, %p299
      %p301 = scmp.ne.s32.totalorder %s293, %s295
      %p302 = scmp.eq.s32.totalorder %s33, 1
      %p303 = por %p301, %p302
      %p304 = scmp.ne.s32.totalorder %s295, %s296
      %p305 = scmp.eq.s32.totalorder %s33, 0
      %p306 = por %p304, %p305
      %p307 = scmp.ne.s32.totalorder %s295, %s296
      %p308 = scmp.eq.s32.totalorder %s34, 1
      %p309 = por %p307, %p308
      %p311 = scmp.ne.s32.totalorder %s296, %s310
      %p312 = scmp.eq.s32.totalorder %s34, 0
      %p313 = por %p311, %p312
      %s314 = ssub.s32 %s28, %s35
      %p315 = scmp.eq.s32.totalorder %s314, 0
      %s317 = sadd.s32 %s316, 1
      %s318 = scalar_select %p315, %s316, %s317
      %p321 = pneg %p315
      %p322 = scmp.eq.s32.totalorder %s28, 1
      %p323 = por %p321, %p322
      %p324 = scmp.ne.s32.totalorder %s316, %s319
      %p325 = scmp.eq.s32.totalorder %s28, 0
      %p326 = por %p324, %p325
      %p327 = scmp.ne.s32.totalorder %s316, %s319
      %p328 = scmp.eq.s32.totalorder %s33, 1
      %p329 = por %p327, %p328
      %p330 = scmp.ne.s32.totalorder %s319, %s320
      %p331 = scmp.eq.s32.totalorder %s33, 0
      %p332 = por %p330, %p331
      %p333 = scmp.ne.s32.totalorder %s319, %s320
      %p334 = scmp.eq.s32.totalorder %s34, 1
      %p335 = por %p333, %p334
      %p337 = scmp.ne.s32.totalorder %s320, %s336
      %p338 = scmp.eq.s32.totalorder %s34, 0
      %p339 = por %p337, %p338
      %p340 = scmp.le.s32.totalorder 1, %s28
      %p341 = scmp.lt.s32.totalorder %s28, 3
      %p342 = pnand %p340, %p341
      %p343 = pneg %p342
      // Predicated region
      $region9: #{tpu_custom_call.1} parent=5 // pred_check
        _
      $region10: #{tpu_custom_call.1} parent=5 // pred_check_branch
        %345 = sbr.rel (%p342) target = $region12
      $region11: #{tpu_custom_call.1} parent=5 // pred_region
        %s346 = ssub.s32 %s28, 1
        // Predicated region
        $region13: #{tpu_custom_call.1} parent=11 // pred_check
          %p347 = pneg %p75
        $region14: #{tpu_custom_call.1} parent=11 // pred_check_branch
          %349 = sbr.rel (%p347) target = $region16
        $region15: #{tpu_custom_call.1} parent=11 // pred_region
          %351 = vsyncadd [#allocation6], 0
          %s352 = sshll.u32 %s1, 4
          %s353 = int_to_ptr.hbm [resolvable:$true] %s352
          %s354 = sshll.u32 [#allocation5], 4
          %s355 = int_to_ptr.vmem [resolvable:$true] %s354
          %360 = dma.hbm_to_vmem [thread:$0]  %s353, 3072, %s355, [#allocation6], 192, 192, 12
        $region16: #{tpu_custom_call.1} parent=11 // pred_fallthru
          _
        // Predicated region
        $region17: #{tpu_custom_call.1} parent=11 // pred_check
          %p361 = pneg %p96
        $region18: #{tpu_custom_call.1} parent=11 // pred_check_branch
          %363 = sbr.rel (%p361) target = $region20
        $region19: #{tpu_custom_call.1} parent=11 // pred_region
          %365 = vsyncadd [#allocation6], 0
          %s367 = sshll.u32 %s2, 4
          %s368 = int_to_ptr.hbm [resolvable:$true] %s367
          %s369 = sshll.u32 [#allocation7], 4
          %s370 = int_to_ptr.vmem [resolvable:$true] %s369
          %372 = dma.hbm_to_vmem [thread:$0]  %s368, 48, %s370, [#allocation6]
        $region20: #{tpu_custom_call.1} parent=11 // pred_fallthru
          _
        // Predicated region
        $region21: #{tpu_custom_call.1} parent=11 // pred_check
          %p373 = pneg %p117
        $region22: #{tpu_custom_call.1} parent=11 // pred_check_branch
          %375 = sbr.rel (%p373) target = $region24
        $region23: #{tpu_custom_call.1} parent=11 // pred_region
          %377 = vsyncadd [#allocation9], 0
          %s378 = sshll.u32 %s3, 4
          %s379 = int_to_ptr.hbm [resolvable:$true] %s378
          %s380 = sshll.u32 [#allocation8], 4
          %s381 = int_to_ptr.vmem [resolvable:$true] %s380
          %386 = dma.hbm_to_vmem [thread:$0]  %s379, 1024, %s381, [#allocation9], 64, 64, 4
        $region24: #{tpu_custom_call.1} parent=11 // pred_fallthru
          _
        // Predicated region
        $region25: #{tpu_custom_call.1} parent=11 // pred_check
          %p387 = pneg %p138
        $region26: #{tpu_custom_call.1} parent=11 // pred_check_branch
          %389 = sbr.rel (%p387) target = $region28
        $region27: #{tpu_custom_call.1} parent=11 // pred_region
          _
        $region28: #{tpu_custom_call.1} parent=11 // pred_fallthru
          _
        // Predicated region
        $region29: #{tpu_custom_call.1} parent=11 // pred_check
          %p390 = pneg %p159
        $region30: #{tpu_custom_call.1} parent=11 // pred_check_branch
          %392 = sbr.rel (%p390) target = $region32
        $region31: #{tpu_custom_call.1} parent=11 // pred_region
          %394 = vsyncadd [#allocation9], 0
          %s395 = sshll.u32 %s5, 4
          %s396 = int_to_ptr.hbm [resolvable:$true] %s395
          %s397 = sshll.u32 [#allocation10], 4
          %s398 = int_to_ptr.vmem [resolvable:$true] %s397
          %403 = dma.hbm_to_vmem [thread:$0]  %s396, 1024, %s398, [#allocation9], 64, 64, 4
        $region32: #{tpu_custom_call.1} parent=11 // pred_fallthru
          _
        // Predicated region
        $region33: #{tpu_custom_call.1} parent=11 // pred_check
          %p404 = pneg %p180
        $region34: #{tpu_custom_call.1} parent=11 // pred_check_branch
          %406 = sbr.rel (%p404) target = $region36
        $region35: #{tpu_custom_call.1} parent=11 // pred_region
          _
        $region36: #{tpu_custom_call.1} parent=11 // pred_fallthru
          _
        // Predicated region
        $region37: #{tpu_custom_call.1} parent=11 // pred_check
          %p407 = pneg %p201
        $region38: #{tpu_custom_call.1} parent=11 // pred_check_branch
          %409 = sbr.rel (%p407) target = $region40
        $region39: #{tpu_custom_call.1} parent=11 // pred_region
          %411 = vsyncadd [#allocation12], 0
          %s412 = sshll.u32 %s7, 4
          %s413 = int_to_ptr.hbm [resolvable:$true] %s412
          %s414 = sshll.u32 [#allocation11], 4
          %s415 = int_to_ptr.vmem [resolvable:$true] %s414
          %420 = dma.hbm_to_vmem [thread:$0]  %s413, 1024, %s415, [#allocation12], 64, 64, 4
        $region40: #{tpu_custom_call.1} parent=11 // pred_fallthru
          _
        // Predicated region
        $region41: #{tpu_custom_call.1} parent=11 // pred_check
          %p421 = pneg %p222
        $region42: #{tpu_custom_call.1} parent=11 // pred_check_branch
          %423 = sbr.rel (%p421) target = $region44
        $region43: #{tpu_custom_call.1} parent=11 // pred_region
          _
        $region44: #{tpu_custom_call.1} parent=11 // pred_fallthru
          _
        // Predicated region
        $region45: #{tpu_custom_call.1} parent=11 // pred_check
          %p424 = pneg %p243
        $region46: #{tpu_custom_call.1} parent=11 // pred_check_branch
          %426 = sbr.rel (%p424) target = $region48
        $region47: #{tpu_custom_call.1} parent=11 // pred_region
          _
        $region48: #{tpu_custom_call.1} parent=11 // pred_fallthru
          _
        // Predicated region
        $region49: #{tpu_custom_call.1} parent=11 // pred_check
          %p427 = pneg %p264
        $region50: #{tpu_custom_call.1} parent=11 // pred_check_branch
          %429 = sbr.rel (%p427) target = $region52
        $region51: #{tpu_custom_call.1} parent=11 // pred_region
          _
        $region52: #{tpu_custom_call.1} parent=11 // pred_fallthru
          _
        // Predicated region
        $region53: #{tpu_custom_call.1} parent=11 // pred_check
          %p430 = pneg %p285
        $region54: #{tpu_custom_call.1} parent=11 // pred_check_branch
          %432 = sbr.rel (%p430) target = $region56
        $region55: #{tpu_custom_call.1} parent=11 // pred_region
          _
        $region56: #{tpu_custom_call.1} parent=11 // pred_fallthru
          _
        // Predicated region
        $region57: #{tpu_custom_call.1} parent=11 // pred_check
          %p433 = pneg %p306
        $region58: #{tpu_custom_call.1} parent=11 // pred_check_branch
          %435 = sbr.rel (%p433) target = $region60
        $region59: #{tpu_custom_call.1} parent=11 // pred_region
          _
        $region60: #{tpu_custom_call.1} parent=11 // pred_fallthru
          _
      $region12: #{tpu_custom_call.1} parent=5 // pred_fallthru
        _
      %p436 = scmp.lt.s32.totalorder %s28, 2
      // Predicated region
      $region61: #{tpu_custom_call.1} parent=5 // pred_check
        %p437 = pneg %p436
      $region62: #{tpu_custom_call.1} parent=5 // pred_check_branch
        %439 = sbr.rel (%p437) target = $region64
      $region63: #{tpu_custom_call.1} parent=5 // pred_region
        // Predicated region
        $region65: #{tpu_custom_call.1} parent=63 // pred_check
          %p440 = pneg %p48
        $region66: #{tpu_custom_call.1} parent=63 // pred_check_branch
          %442 = sbr.rel (%p440) target = $region68
        $region67: #{tpu_custom_call.1} parent=63 // pred_region
          %s443 = sand.u32 %s38, 1
          %s444 = scalar_lea.sflag [#allocation3], %s443
          %s445 = sand.u32 %s38, 1
          %s446 = smul.addr %s445, 8
          %s447 = scalar_lea.vmem [#allocation2], %s446
          %449 = vsyncadd %s444, 0
          %s450 = smul.addr %s28, 8
          %s451 = scalar_lea.hbm %s0, %s450
          %s453 = sshll.u32 %s451, 4
          %s454 = int_to_ptr.hbm [resolvable:$true] %s453
          %s455 = sshll.u32 %s447, 4
          %s456 = int_to_ptr.vmem [resolvable:$true] %s455
          %458 = dma.hbm_to_vmem [thread:$0]  %s454, 128, %s456, %s444
        $region68: #{tpu_custom_call.1} parent=63 // pred_fallthru
          _
      $region64: #{tpu_custom_call.1} parent=5 // pred_fallthru
        _
      %p459 = scmp.le.s32.totalorder 1, %s28
      %p460 = scmp.lt.s32.totalorder %s28, 3
      %p461 = pnand %p459, %p460
      %p462 = pneg %p461
      // Predicated region
      $region69: #{tpu_custom_call.1} parent=5 // pred_check
        _
      $region70: #{tpu_custom_call.1} parent=5 // pred_check_branch
        %464 = sbr.rel (%p461) target = $region72
      $region71: #{tpu_custom_call.1} parent=5 // pred_region
        %s465 = ssub.s32 %s28, 1
        %s466 = sand.u32 %s41, 1
        %s467 = scalar_lea.sflag [#allocation3], %s466
        %s468 = sand.u32 %s41, 1
        %s469 = smul.addr %s468, 8
        %s470 = scalar_lea.vmem [#allocation2], %s469
        // Predicated region
        $region73: #{tpu_custom_call.1} parent=71 // pred_check
          %p471 = pneg %p54
        $region74: #{tpu_custom_call.1} parent=71 // pred_check_branch
          %473 = sbr.rel (%p471) target = $region76
        $region75: #{tpu_custom_call.1} parent=71 // pred_region
          %475 = dma.done %s467, 128
        $region76: #{tpu_custom_call.1} parent=71 // pred_fallthru
          _
        // Predicated region
        $region77: #{tpu_custom_call.1} parent=71 // pred_check
          %p476 = pneg %p75
        $region78: #{tpu_custom_call.1} parent=71 // pred_check_branch
          %478 = sbr.rel (%p476) target = $region80
        $region79: #{tpu_custom_call.1} parent=71 // pred_region
          %480 = dma.done [#allocation6], 3072
        $region80: #{tpu_custom_call.1} parent=71 // pred_fallthru
          _
        // Predicated region
        $region81: #{tpu_custom_call.1} parent=71 // pred_check
          %p481 = pneg %p96
        $region82: #{tpu_custom_call.1} parent=71 // pred_check_branch
          %483 = sbr.rel (%p481) target = $region84
        $region83: #{tpu_custom_call.1} parent=71 // pred_region
          %485 = dma.done [#allocation6], 48
        $region84: #{tpu_custom_call.1} parent=71 // pred_fallthru
          _
        // Predicated region
        $region85: #{tpu_custom_call.1} parent=71 // pred_check
          %p486 = pneg %p117
        $region86: #{tpu_custom_call.1} parent=71 // pred_check_branch
          %488 = sbr.rel (%p486) target = $region88
        $region87: #{tpu_custom_call.1} parent=71 // pred_region
          %490 = dma.done [#allocation9], 1024
        $region88: #{tpu_custom_call.1} parent=71 // pred_fallthru
          _
        // Predicated region
        $region89: #{tpu_custom_call.1} parent=71 // pred_check
          %p491 = pneg %p159
        $region90: #{tpu_custom_call.1} parent=71 // pred_check_branch
          %493 = sbr.rel (%p491) target = $region92
        $region91: #{tpu_custom_call.1} parent=71 // pred_region
          %495 = dma.done [#allocation9], 1024
        $region92: #{tpu_custom_call.1} parent=71 // pred_fallthru
          _
        // Predicated region
        $region93: #{tpu_custom_call.1} parent=71 // pred_check
          %p496 = pneg %p201
        $region94: #{tpu_custom_call.1} parent=71 // pred_check_branch
          %498 = sbr.rel (%p496) target = $region96
        $region95: #{tpu_custom_call.1} parent=71 // pred_region
          %500 = dma.done [#allocation12], 1024
        $region96: #{tpu_custom_call.1} parent=71 // pred_fallthru
          _
        %s501 = sand.u32 %s41, 1
        %s502 = scalar_lea.sflag [#allocation3], %s501
        %s503 = sand.u32 %s41, 1
        %s504 = smul.addr %s503, 8
        %s505 = scalar_lea.vmem [#allocation2], %s504
        %p506 = pneg %p54
        %p507 = pneg %p51
        %p508 = pneg %p75
        %p509 = pneg %p72
        %p510 = pneg %p96
        %p511 = pneg %p93
        %p512 = pneg %p117
        %p513 = pneg %p114
        %p514 = pneg %p138
        %p515 = pneg %p135
        %p516 = pneg %p159
        %p517 = pneg %p156
        %p518 = pneg %p180
        %p519 = pneg %p177
        %p520 = pneg %p201
        %p521 = pneg %p198
        %p522 = pneg %p222
        %p523 = pneg %p219
        %p524 = pneg %p243
        %p525 = pneg %p240
        %p526 = pneg %p264
        %p527 = pneg %p261
        %p528 = pneg %p285
        %p529 = pneg %p282
        %p530 = pneg %p306
        %p531 = pneg %p303
        %p532 = pneg %p332
        %p533 = pneg %p329
        %s534 = sand.u32 %s319, 1
        %s535 = scalar_lea.sflag [#allocation4], %s534
        %s536 = sand.u32 %s319, 1
        %s537 = smul.addr %s536, 8
        %s538 = scalar_lea.vmem [#allocation13], %s537
        %v540 = vld [vmem:[%s470] sm:$0xff]
        %v541 = vpack.c.bf16 %v540, %v540
        %v542 = vld [vmem:[#allocation5] sm:$0xff]
        %v543 = vld [vmem:[#allocation5 + $0x8] sm:$0xf]
        %v544 = vld [vmem:[#allocation5 + $0xc] sm:$0xff]
        %v545 = vld [vmem:[#allocation5 + $0x14] sm:$0xf]
        %v546 = vld [vmem:[#allocation5 + $0x18] sm:$0xff]
        %v547 = vld [vmem:[#allocation5 + $0x20] sm:$0xf]
        %v548 = vld [vmem:[#allocation5 + $0x24] sm:$0xff]
        %v549 = vld [vmem:[#allocation5 + $0x2c] sm:$0xf]
        %v550 = vld [vmem:[#allocation5 + $0x30] sm:$0xff]
        %v551 = vld [vmem:[#allocation5 + $0x38] sm:$0xf]
        %v552 = vld [vmem:[#allocation5 + $0x3c] sm:$0xff]
        %v553 = vld [vmem:[#allocation5 + $0x44] sm:$0xf]
        %v554 = vld [vmem:[#allocation5 + $0x48] sm:$0xff]
        %v555 = vld [vmem:[#allocation5 + $0x50] sm:$0xf]
        %v556 = vld [vmem:[#allocation5 + $0x54] sm:$0xff]
        %v557 = vld [vmem:[#allocation5 + $0x5c] sm:$0xf]
        %v558 = vld [vmem:[#allocation5 + $0x60] sm:$0xff]
        %v559 = vld [vmem:[#allocation5 + $0x68] sm:$0xf]
        %v560 = vld [vmem:[#allocation5 + $0x6c] sm:$0xff]
        %v561 = vld [vmem:[#allocation5 + $0x74] sm:$0xf]
        %v562 = vld [vmem:[#allocation5 + $0x78] sm:$0xff]
        %v563 = vld [vmem:[#allocation5 + $0x80] sm:$0xf]
        %v564 = vld [vmem:[#allocation5 + $0x84] sm:$0xff]
        %v565 = vld [vmem:[#allocation5 + $0x8c] sm:$0xf]
        %v566 = vld [vmem:[#allocation5 + $0x90] sm:$0xff]
        %v567 = vld [vmem:[#allocation5 + $0x98] sm:$0xf]
        %v568 = vld [vmem:[#allocation5 + $0x9c] sm:$0xff]
        %v569 = vld [vmem:[#allocation5 + $0xa4] sm:$0xf]
        %v570 = vld [vmem:[#allocation5 + $0xa8] sm:$0xff]
        %v571 = vld [vmem:[#allocation5 + $0xb0] sm:$0xf]
        %v572 = vld [vmem:[#allocation5 + $0xb4] sm:$0xff]
        %v573 = vld [vmem:[#allocation5 + $0xbc] sm:$0xf]
        %v574 = vld [vmem:[#allocation7] sm:$0x7]
        %v576 = vperm.slane %v574, 0
        %v577 = vperm.slane %v574, 1
        %v578 = vperm.slane %v574, 2
        %v614 = vunpack.c.l.b16 %v542
        %v615 = vunpack.c.h.b16 %v542
        %v616 = vunpack.c.l.b16 %v543
        %v617 = vunpack.c.l.b16 %v544
        %v618 = vunpack.c.h.b16 %v544
        %v619 = vunpack.c.l.b16 %v545
        %v620 = vunpack.c.l.b16 %v546
        %v621 = vunpack.c.h.b16 %v546
        %v622 = vunpack.c.l.b16 %v547
        %v623 = vunpack.c.l.b16 %v548
        %v624 = vunpack.c.h.b16 %v548
        %v625 = vunpack.c.l.b16 %v549
        %v626 = vunpack.c.l.b16 %v550
        %v627 = vunpack.c.h.b16 %v550
        %v628 = vunpack.c.l.b16 %v551
        %v629 = vunpack.c.l.b16 %v552
        %v630 = vunpack.c.h.b16 %v552
        %v631 = vunpack.c.l.b16 %v553
        %v632 = vunpack.c.l.b16 %v554
        %v633 = vunpack.c.h.b16 %v554
        %v634 = vunpack.c.l.b16 %v555
        %v635 = vunpack.c.l.b16 %v556
        %v636 = vunpack.c.h.b16 %v556
        %v637 = vunpack.c.l.b16 %v557
        %v638 = vunpack.c.l.b16 %v558
        %v639 = vunpack.c.h.b16 %v558
        %v640 = vunpack.c.l.b16 %v559
        %v641 = vunpack.c.l.b16 %v560
        %v642 = vunpack.c.h.b16 %v560
        %v643 = vunpack.c.l.b16 %v561
        %v644 = vunpack.c.l.b16 %v562
        %v645 = vunpack.c.h.b16 %v562
        %v646 = vunpack.c.l.b16 %v563
        %v647 = vunpack.c.l.b16 %v564
        %v648 = vunpack.c.h.b16 %v564
        %v649 = vunpack.c.l.b16 %v565
        %v650 = vunpack.c.l.b16 %v566
        %v651 = vunpack.c.h.b16 %v566
        %v652 = vunpack.c.l.b16 %v567
        %v653 = vunpack.c.l.b16 %v568
        %v654 = vunpack.c.h.b16 %v568
        %v655 = vunpack.c.l.b16 %v569
        %v656 = vunpack.c.l.b16 %v570
        %v657 = vunpack.c.h.b16 %v570
        %v658 = vunpack.c.l.b16 %v571
        %v659 = vunpack.c.l.b16 %v572
        %v660 = vunpack.c.h.b16 %v572
        %v661 = vunpack.c.l.b16 %v573
        %v662 = vpack.c.b16 %v617, %v614
        %v663 = vpack.c.b16 %v618, %v615
        %v664 = vpack.c.b16 %v619, %v616
        %v665 = vpack.c.b16 %v623, %v620
        %v666 = vpack.c.b16 %v624, %v621
        %v667 = vpack.c.b16 %v625, %v622
        %v668 = vpack.c.b16 %v629, %v626
        %v669 = vpack.c.b16 %v630, %v627
        %v670 = vpack.c.b16 %v631, %v628
        %v671 = vpack.c.b16 %v635, %v632
        %v672 = vpack.c.b16 %v636, %v633
        %v673 = vpack.c.b16 %v637, %v634
        %v674 = vpack.c.b16 %v641, %v638
        %v675 = vpack.c.b16 %v642, %v639
        %v676 = vpack.c.b16 %v643, %v640
        %v677 = vpack.c.b16 %v647, %v644
        %v678 = vpack.c.b16 %v648, %v645
        %v679 = vpack.c.b16 %v649, %v646
        %v680 = vpack.c.b16 %v653, %v650
        %v681 = vpack.c.b16 %v654, %v651
        %v682 = vpack.c.b16 %v655, %v652
        %v683 = vpack.c.b16 %v659, %v656
        %v684 = vpack.c.b16 %v660, %v657
        %v685 = vpack.c.b16 %v661, %v658
        %710 = vmatpush.bf16.msra.mxu0 %v683
        %711 = vmatpush.bf16.msra.mxu0 %v680
        %712 = vmatpush.bf16.msra.mxu0 %v677
        %713 = vmatpush.bf16.msra.mxu0 %v674
        %714 = vmatpush.bf16.msra.mxu0 %v671
        %715 = vmatpush.bf16.msra.mxu0 %v668
        %716 = vmatpush.bf16.msra.mxu0 %v665
        %717 = vmatpush.bf16.msra.mxu0 %v662
        %718 = vmatmul.bf16.gmra.mxu0 %v541
        %v719 = vpop.f32.mrf.mxu0
        %v720 = vadd.f32 %v576, %v719
        %v721 = vpop.f32.mrf.mxu0
        %722 = vdwg.mxu0
        %723 = vmatpush.bf16.msra.mxu0 %v684
        %724 = vmatpush.bf16.msra.mxu0 %v681
        %725 = vmatpush.bf16.msra.mxu0 %v678
        %726 = vmatpush.bf16.msra.mxu0 %v675
        %727 = vmatpush.bf16.msra.mxu0 %v672
        %728 = vmatpush.bf16.msra.mxu0 %v669
        %729 = vmatpush.bf16.msra.mxu0 %v666
        %730 = vmatpush.bf16.msra.mxu0 %v663
        %731 = vmatmul.bf16.gmra.mxu0 %v541
        %v732 = vpop.f32.mrf.mxu0
        %v733 = vadd.f32 %v577, %v732
        %v734 = vpop.f32.mrf.mxu0
        %735 = vdwg.mxu0
        %736 = vmatpush.bf16.msra.mxu0 %v685
        %737 = vmatpush.bf16.msra.mxu0 %v682
        %738 = vmatpush.bf16.msra.mxu0 %v679
        %739 = vmatpush.bf16.msra.mxu0 %v676
        %740 = vmatpush.bf16.msra.mxu0 %v673
        %741 = vmatpush.bf16.msra.mxu0 %v670
        %742 = vmatpush.bf16.msra.mxu0 %v667
        %743 = vmatpush.bf16.msra.mxu0 %v664
        %744 = vmatmul.bf16.gmra.mxu0 %v541
        %v745 = vpop.f32.mrf.mxu0
        %v746 = vadd.f32 %v578, %v745
        %v747 = vpop.f32.mrf.mxu0
        %748 = vdwg.mxu0
        %v749 = vld [vmem:[#allocation8] sm:$0xf]
        %v750 = vld [vmem:[#allocation8 + $0x4] sm:$0xf]
        %v751 = vld [vmem:[#allocation8 + $0x8] sm:$0xf]
        %v752 = vld [vmem:[#allocation8 + $0xc] sm:$0xf]
        %v753 = vld [vmem:[#allocation8 + $0x10] sm:$0xf]
        %v754 = vld [vmem:[#allocation8 + $0x14] sm:$0xf]
        %v755 = vld [vmem:[#allocation8 + $0x18] sm:$0xf]
        %v756 = vld [vmem:[#allocation8 + $0x1c] sm:$0xf]
        %v757 = vld [vmem:[#allocation8 + $0x20] sm:$0xf]
        %v758 = vld [vmem:[#allocation8 + $0x24] sm:$0xf]
        %v759 = vld [vmem:[#allocation8 + $0x28] sm:$0xf]
        %v760 = vld [vmem:[#allocation8 + $0x2c] sm:$0xf]
        %v761 = vld [vmem:[#allocation8 + $0x30] sm:$0xf]
        %v762 = vld [vmem:[#allocation8 + $0x34] sm:$0xf]
        %v763 = vld [vmem:[#allocation8 + $0x38] sm:$0xf]
        %v764 = vld [vmem:[#allocation8 + $0x3c] sm:$0xf]
        %v765 = vpack.c.bf16 %v720, %v720
        %v766 = vpack.c.bf16 %v733, %v733
        %v767 = vpack.c.bf16 %v746, %v746
        %vm768 = vcmask 261120
        %v770 = vsel %vm768, %v765, 0
        %v773 = vsel %vm768, %v766, 0
        %775 = vmatpush.bf16.xpose.msra.mxu0 0
        %776 = vmatpush.bf16.xpose.msra.mxu0 0
        %777 = vmatpush.bf16.xpose.msra.mxu0 0
        %778 = vmatpush.bf16.xpose.msra.mxu0 0
        %779 = vmatpush.bf16.xpose.msra.mxu0 0
        %780 = vmatpush.bf16.xpose.msra.mxu0 0
        %781 = vmatpush.bf16.xpose.msra.mxu0 0
        %782 = vmatpush.bf16.xpose.msra.mxu0 %v773
        %783 = vmatmul.bf16.gmra.mxu0 %v770
        %v784 = vpop.f32.mrf.mxu0
        %v785 = vadd.f32 0.0, %v784
        %v786 = vpop.f32.mrf.mxu0
        %787 = vdwg.mxu0
        %v788 = vmul.f32 %v785, 0.35355338
        %vm789 = vcmask 64512
        %v790 = vsel %vm789, %v788, -inf
        %791 = vmax.xlane.f32.xlu0 %v790
        %v792 = vpop.xlane.xlu0 %791
        %v793 = vsub.f32 %v788, %v792
        %v794 = vmul.f32 %v793, 1.442695
        %v795 = vpow.pop %v794
        %v796 = vsel %vm789, %v795, 0.0
        %797 = vadd.xlane.f32.xlu0 %v796
        %v798 = vpop.xlane.xlu0 %797
        %v799 = vrcp.pop %v798
        %v800 = vmul.f32 %v795, %v799
        %v801 = vpack.c.bf16 %v800, %v800
        %v803 = vsel %vm789, %v801, 0
        %vm805 = vcmask 1043456
        %v807 = vsel %vm805, %v767, 0
        %809 = vmatpush.bf16.msra.mxu0 0
        %810 = vmatpush.bf16.msra.mxu0 0
        %811 = vmatpush.bf16.msra.mxu0 0
        %812 = vmatpush.bf16.msra.mxu0 0
        %813 = vmatpush.bf16.msra.mxu0 0
        %814 = vmatpush.bf16.msra.mxu0 0
        %815 = vmatpush.bf16.msra.mxu0 0
        %816 = vmatpush.bf16.msra.mxu0 %v807
        %817 = vmatmul.bf16.gmra.mxu0 %v803
        %v818 = vpop.f32.mrf.mxu0
        %v819 = vadd.f32 0.0, %v818
        %v820 = vpop.f32.mrf.mxu0
        %821 = vdwg.mxu0
        %v822 = vpack.c.bf16 %v819, %v819
        %v824 = vunpack.c.l.b16 %v765
        %v825 = vpack.c.b16 %v824, %v824
        %826 = vrot.lane.b32.xlu0 %v825, 96
        %v827 = vpop.permute.xlu0 %826
        %v829 = vunpack.c.l.b16 %v766
        %v830 = vpack.c.b16 %v829, %v829
        %831 = vrot.lane.b32.xlu0 %v830, 96
        %v832 = vpop.permute.xlu0 %831
        %v834 = vsel %vm768, %v827, 0
        %v837 = vsel %vm768, %v832, 0
        %839 = vmatpush.bf16.xpose.msra.mxu0 0
        %840 = vmatpush.bf16.xpose.msra.mxu0 0
        %841 = vmatpush.bf16.xpose.msra.mxu0 0
        %842 = vmatpush.bf16.xpose.msra.mxu0 0
        %843 = vmatpush.bf16.xpose.msra.mxu0 0
        %844 = vmatpush.bf16.xpose.msra.mxu0 0
        %845 = vmatpush.bf16.xpose.msra.mxu0 0
        %846 = vmatpush.bf16.xpose.msra.mxu0 %v837
        %847 = vmatmul.bf16.gmra.mxu0 %v834
        %v848 = vpop.f32.mrf.mxu0
        %v849 = vadd.f32 0.0, %v848
        %v850 = vpop.f32.mrf.mxu0
        %851 = vdwg.mxu0
        %v852 = vmul.f32 %v849, 0.35355338
        %v853 = vsel %vm789, %v852, -inf
        %854 = vmax.xlane.f32.xlu0 %v853
        %v855 = vpop.xlane.xlu0 %854
        %v856 = vsub.f32 %v852, %v855
        %v857 = vmul.f32 %v856, 1.442695
        %v858 = vpow.pop %v857
        %v859 = vsel %vm789, %v858, 0.0
        %860 = vadd.xlane.f32.xlu0 %v859
        %v861 = vpop.xlane.xlu0 %860
        %v862 = vrcp.pop %v861
        %v863 = vmul.f32 %v858, %v862
        %v864 = vpack.c.bf16 %v863, %v863
        %v866 = vunpack.c.l.b16 %v767
        %v867 = vpack.c.b16 %v866, %v866
        %868 = vrot.lane.b32.xlu0 %v867, 96
        %v869 = vpop.permute.xlu0 %868
        %v871 = vsel %vm789, %v864, 0
        %v874 = vsel %vm805, %v869, 0
        %876 = vmatpush.bf16.msra.mxu0 0
        %877 = vmatpush.bf16.msra.mxu0 0
        %878 = vmatpush.bf16.msra.mxu0 0
        %879 = vmatpush.bf16.msra.mxu0 0
        %880 = vmatpush.bf16.msra.mxu0 0
        %881 = vmatpush.bf16.msra.mxu0 0
        %882 = vmatpush.bf16.msra.mxu0 0
        %883 = vmatpush.bf16.msra.mxu0 %v874
        %884 = vmatmul.bf16.gmra.mxu0 %v871
        %v885 = vpop.f32.mrf.mxu0
        %v886 = vadd.f32 0.0, %v885
        %v887 = vpop.f32.mrf.mxu0
        %888 = vdwg.mxu0
        %v889 = vpack.c.bf16 %v886, %v886
        %v894 = vunpack.c.l.b16 %v753
        %v895 = vunpack.c.l.b16 %v754
        %v896 = vunpack.c.l.b16 %v755
        %v897 = vunpack.c.l.b16 %v756
        %v898 = vpack.c.b16 %v895, %v894
        %v899 = vpack.c.b16 %v897, %v896
        %v903 = vsel %vm768, %v889, 0
        %905 = vmatpush.bf16.msra.mxu0 0
        %906 = vmatpush.bf16.msra.mxu0 0
        %907 = vmatpush.bf16.msra.mxu0 0
        %908 = vmatpush.bf16.msra.mxu0 0
        %909 = vmatpush.bf16.msra.mxu0 0
        %910 = vmatpush.bf16.msra.mxu0 0
        %911 = vmatpush.bf16.msra.mxu0 %v899
        %912 = vmatpush.bf16.msra.mxu0 %v898
        %913 = vmatmul.bf16.gmra.mxu0 %v903
        %v914 = vpop.f32.mrf.mxu0
        %v915 = vadd.f32 0.0, %v914
        %v916 = vpop.f32.mrf.mxu0
        %917 = vdwg.mxu0
        %v922 = vunpack.c.l.b16 %v749
        %v923 = vunpack.c.l.b16 %v750
        %v924 = vunpack.c.l.b16 %v751
        %v925 = vunpack.c.l.b16 %v752
        %v926 = vpack.c.b16 %v923, %v922
        %v927 = vpack.c.b16 %v925, %v924
        %v931 = vsel %vm768, %v822, 0
        %933 = vmatpush.bf16.msra.mxu0 0
        %934 = vmatpush.bf16.msra.mxu0 0
        %935 = vmatpush.bf16.msra.mxu0 0
        %936 = vmatpush.bf16.msra.mxu0 0
        %937 = vmatpush.bf16.msra.mxu0 0
        %938 = vmatpush.bf16.msra.mxu0 0
        %939 = vmatpush.bf16.msra.mxu0 %v927
        %940 = vmatpush.bf16.msra.mxu0 %v926
        %941 = vmatmul.bf16.gmra.mxu0 %v931
        %v942 = vpop.f32.mrf.mxu0
        %v943 = vadd.f32 %v915, %v942
        %v944 = vpop.f32.mrf.mxu0
        %945 = vdwg.mxu0
        %946 = vrot.lane.b32.xlu0 %v825, 64
        %v947 = vpop.permute.xlu0 %946
        %948 = vrot.lane.b32.xlu0 %v830, 64
        %v949 = vpop.permute.xlu0 %948
        %v951 = vsel %vm768, %v947, 0
        %v954 = vsel %vm768, %v949, 0
        %956 = vmatpush.bf16.xpose.msra.mxu0 0
        %957 = vmatpush.bf16.xpose.msra.mxu0 0
        %958 = vmatpush.bf16.xpose.msra.mxu0 0
        %959 = vmatpush.bf16.xpose.msra.mxu0 0
        %960 = vmatpush.bf16.xpose.msra.mxu0 0
        %961 = vmatpush.bf16.xpose.msra.mxu0 0
        %962 = vmatpush.bf16.xpose.msra.mxu0 0
        %963 = vmatpush.bf16.xpose.msra.mxu0 %v954
        %964 = vmatmul.bf16.gmra.mxu0 %v951
        %v965 = vpop.f32.mrf.mxu0
        %v966 = vadd.f32 0.0, %v965
        %v967 = vpop.f32.mrf.mxu0
        %968 = vdwg.mxu0
        %v969 = vmul.f32 %v966, 0.35355338
        %v970 = vsel %vm789, %v969, -inf
        %971 = vmax.xlane.f32.xlu0 %v970
        %v972 = vpop.xlane.xlu0 %971
        %v973 = vsub.f32 %v969, %v972
        %v974 = vmul.f32 %v973, 1.442695
        %v975 = vpow.pop %v974
        %v976 = vsel %vm789, %v975, 0.0
        %977 = vadd.xlane.f32.xlu0 %v976
        %v978 = vpop.xlane.xlu0 %977
        %v979 = vrcp.pop %v978
        %v980 = vmul.f32 %v975, %v979
        %v981 = vpack.c.bf16 %v980, %v980
        %982 = vrot.lane.b32.xlu0 %v867, 64
        %v983 = vpop.permute.xlu0 %982
        %v985 = vsel %vm789, %v981, 0
        %v988 = vsel %vm805, %v983, 0
        %990 = vmatpush.bf16.msra.mxu0 0
        %991 = vmatpush.bf16.msra.mxu0 0
        %992 = vmatpush.bf16.msra.mxu0 0
        %993 = vmatpush.bf16.msra.mxu0 0
        %994 = vmatpush.bf16.msra.mxu0 0
        %995 = vmatpush.bf16.msra.mxu0 0
        %996 = vmatpush.bf16.msra.mxu0 0
        %997 = vmatpush.bf16.msra.mxu0 %v988
        %998 = vmatmul.bf16.gmra.mxu0 %v985
        %v999 = vpop.f32.mrf.mxu0
        %v1000 = vadd.f32 0.0, %v999
        %v1001 = vpop.f32.mrf.mxu0
        %1002 = vdwg.mxu0
        %v1003 = vpack.c.bf16 %v1000, %v1000
        %v1008 = vunpack.c.l.b16 %v757
        %v1009 = vunpack.c.l.b16 %v758
        %v1010 = vunpack.c.l.b16 %v759
        %v1011 = vunpack.c.l.b16 %v760
        %v1012 = vpack.c.b16 %v1009, %v1008
        %v1013 = vpack.c.b16 %v1011, %v1010
        %v1017 = vsel %vm768, %v1003, 0
        %1019 = vmatpush.bf16.msra.mxu0 0
        %1020 = vmatpush.bf16.msra.mxu0 0
        %1021 = vmatpush.bf16.msra.mxu0 0
        %1022 = vmatpush.bf16.msra.mxu0 0
        %1023 = vmatpush.bf16.msra.mxu0 0
        %1024 = vmatpush.bf16.msra.mxu0 0
        %1025 = vmatpush.bf16.msra.mxu0 %v1013
        %1026 = vmatpush.bf16.msra.mxu0 %v1012
        %1027 = vmatmul.bf16.gmra.mxu0 %v1017
        %v1028 = vpop.f32.mrf.mxu0
        %v1029 = vadd.f32 0.0, %v1028
        %v1030 = vpop.f32.mrf.mxu0
        %1031 = vdwg.mxu0
        %v1032 = vadd.f32 %v943, %v1029
        %1033 = vrot.lane.b32.xlu0 %v825, 32
        %v1034 = vpop.permute.xlu0 %1033
        %1035 = vrot.lane.b32.xlu0 %v830, 32
        %v1036 = vpop.permute.xlu0 %1035
        %v1038 = vsel %vm768, %v1034, 0
        %v1041 = vsel %vm768, %v1036, 0
        %1043 = vmatpush.bf16.xpose.msra.mxu0 0
        %1044 = vmatpush.bf16.xpose.msra.mxu0 0
        %1045 = vmatpush.bf16.xpose.msra.mxu0 0
        %1046 = vmatpush.bf16.xpose.msra.mxu0 0
        %1047 = vmatpush.bf16.xpose.msra.mxu0 0
        %1048 = vmatpush.bf16.xpose.msra.mxu0 0
        %1049 = vmatpush.bf16.xpose.msra.mxu0 0
        %1050 = vmatpush.bf16.xpose.msra.mxu0 %v1041
        %1051 = vmatmul.bf16.gmra.mxu0 %v1038
        %v1052 = vpop.f32.mrf.mxu0
        %v1053 = vadd.f32 0.0, %v1052
        %v1054 = vpop.f32.mrf.mxu0
        %1055 = vdwg.mxu0
        %v1056 = vmul.f32 %v1053, 0.35355338
        %v1057 = vsel %vm789, %v1056, -inf
        %1058 = vmax.xlane.f32.xlu0 %v1057
        %v1059 = vpop.xlane.xlu0 %1058
        %v1060 = vsub.f32 %v1056, %v1059
        %v1061 = vmul.f32 %v1060, 1.442695
        %v1062 = vpow.pop %v1061
        %v1063 = vsel %vm789, %v1062, 0.0
        %1064 = vadd.xlane.f32.xlu0 %v1063
        %v1065 = vpop.xlane.xlu0 %1064
        %v1066 = vrcp.pop %v1065
        %v1067 = vmul.f32 %v1062, %v1066
        %v1068 = vpack.c.bf16 %v1067, %v1067
        %1069 = vrot.lane.b32.xlu0 %v867, 32
        %v1070 = vpop.permute.xlu0 %1069
        %v1072 = vsel %vm789, %v1068, 0
        %v1075 = vsel %vm805, %v1070, 0
        %1077 = vmatpush.bf16.msra.mxu0 0
        %1078 = vmatpush.bf16.msra.mxu0 0
        %1079 = vmatpush.bf16.msra.mxu0 0
        %1080 = vmatpush.bf16.msra.mxu0 0
        %1081 = vmatpush.bf16.msra.mxu0 0
        %1082 = vmatpush.bf16.msra.mxu0 0
        %1083 = vmatpush.bf16.msra.mxu0 0
        %1084 = vmatpush.bf16.msra.mxu0 %v1075
        %1085 = vmatmul.bf16.gmra.mxu0 %v1072
        %v1086 = vpop.f32.mrf.mxu0
        %v1087 = vadd.f32 0.0, %v1086
        %v1088 = vpop.f32.mrf.mxu0
        %1089 = vdwg.mxu0
        %v1090 = vpack.c.bf16 %v1087, %v1087
        %v1095 = vunpack.c.l.b16 %v761
        %v1096 = vunpack.c.l.b16 %v762
        %v1097 = vunpack.c.l.b16 %v763
        %v1098 = vunpack.c.l.b16 %v764
        %v1099 = vpack.c.b16 %v1096, %v1095
        %v1100 = vpack.c.b16 %v1098, %v1097
        %v1104 = vsel %vm768, %v1090, 0
        %1106 = vmatpush.bf16.msra.mxu0 0
        %1107 = vmatpush.bf16.msra.mxu0 0
        %1108 = vmatpush.bf16.msra.mxu0 0
        %1109 = vmatpush.bf16.msra.mxu0 0
        %1110 = vmatpush.bf16.msra.mxu0 0
        %1111 = vmatpush.bf16.msra.mxu0 0
        %1112 = vmatpush.bf16.msra.mxu0 %v1100
        %1113 = vmatpush.bf16.msra.mxu0 %v1099
        %1114 = vmatmul.bf16.gmra.mxu0 %v1104
        %v1115 = vpop.f32.mrf.mxu0
        %v1116 = vadd.f32 0.0, %v1115
        %v1117 = vpop.f32.mrf.mxu0
        %1118 = vdwg.mxu0
        %v1119 = vadd.f32 %v1032, %v1116
        %v1120 = vld [vmem:[%s4] sm:$0x1]
        %v1122 = vperm.slane %v1120, 0
        %v1124 = vadd.f32 %v1119, %v1122
        %v1125 = vadd.f32 %v540, %v1124
        %v1126 = vld [vmem:[%s9] sm:$0x1]
        %v1127 = vld [vmem:[%s10] sm:$0x1]
        %1128 = vadd.xlane.f32.xlu0 %v1125
        %v1129 = vpop.xlane.xlu0 %1128
        %v1130 = vmul.f32 %v1129, 0.03125
        %v1131 = vmul.f32 %v1125, %v1125
        %1132 = vadd.xlane.f32.xlu0 %v1131
        %v1133 = vpop.xlane.xlu0 %1132
        %v1134 = vmul.f32 %v1133, 0.03125
        %v1135 = vmul.f32 %v1130, %v1130
        %v1136 = vsub.f32 %v1134, %v1135
        %v1137 = vsub.f32 %v1125, %v1130
        %v1138 = vadd.f32 %v1136, 1e-05
        %v1139 = vrsqrt.pop %v1138
        %v1140 = vmul.f32 %v1139, %v1138
        %v1141 = vmul.f32 %v1140, %v1139
        %v1142 = vmul.f32 0.5, %v1141
        %v1143 = vsub.f32 1.5, %v1142
        %v1144 = vmul.f32 %v1139, %v1143
        %vm1145 = vweird.f32 %v1138
        %vm1146 = vweird.f32 %v1139
        %vm1147 = vmor %vm1145, %vm1146
        %v1148 = vsel %vm1147, %v1139, %v1144
        %v1149 = vmul.f32 %v1137, %v1148
        %v1151 = vperm.slane %v1126, 0
        %v1153 = vmul.f32 %v1149, %v1151
        %v1155 = vperm.slane %v1127, 0
        %v1157 = vadd.f32 %v1153, %v1155
        %v1158 = vpack.c.bf16 %v1157, %v1157
        %v1159 = vld [vmem:[#allocation10] sm:$0xf]
        %v1160 = vld [vmem:[#allocation10 + $0x4] sm:$0xf]
        %v1161 = vld [vmem:[#allocation10 + $0x8] sm:$0xf]
        %v1162 = vld [vmem:[#allocation10 + $0xc] sm:$0xf]
        %v1163 = vld [vmem:[#allocation10 + $0x10] sm:$0xf]
        %v1164 = vld [vmem:[#allocation10 + $0x14] sm:$0xf]
        %v1165 = vld [vmem:[#allocation10 + $0x18] sm:$0xf]
        %v1166 = vld [vmem:[#allocation10 + $0x1c] sm:$0xf]
        %v1167 = vld [vmem:[#allocation10 + $0x20] sm:$0xf]
        %v1168 = vld [vmem:[#allocation10 + $0x24] sm:$0xf]
        %v1169 = vld [vmem:[#allocation10 + $0x28] sm:$0xf]
        %v1170 = vld [vmem:[#allocation10 + $0x2c] sm:$0xf]
        %v1171 = vld [vmem:[#allocation10 + $0x30] sm:$0xf]
        %v1172 = vld [vmem:[#allocation10 + $0x34] sm:$0xf]
        %v1173 = vld [vmem:[#allocation10 + $0x38] sm:$0xf]
        %v1174 = vld [vmem:[#allocation10 + $0x3c] sm:$0xf]
        %v1175 = vld [vmem:[%s6] sm:$0x1]
        %v1177 = vperm.slane %v1175, 0
        %v1195 = vunpack.c.l.b16 %v1159
        %v1196 = vunpack.c.l.b16 %v1160
        %v1197 = vunpack.c.l.b16 %v1161
        %v1198 = vunpack.c.l.b16 %v1162
        %v1199 = vunpack.c.l.b16 %v1163
        %v1200 = vunpack.c.l.b16 %v1164
        %v1201 = vunpack.c.l.b16 %v1165
        %v1202 = vunpack.c.l.b16 %v1166
        %v1203 = vunpack.c.l.b16 %v1167
        %v1204 = vunpack.c.l.b16 %v1168
        %v1205 = vunpack.c.l.b16 %v1169
        %v1206 = vunpack.c.l.b16 %v1170
        %v1207 = vunpack.c.l.b16 %v1171
        %v1208 = vunpack.c.l.b16 %v1172
        %v1209 = vunpack.c.l.b16 %v1173
        %v1210 = vunpack.c.l.b16 %v1174
        %v1211 = vpack.c.b16 %v1196, %v1195
        %v1212 = vpack.c.b16 %v1198, %v1197
        %v1213 = vpack.c.b16 %v1200, %v1199
        %v1214 = vpack.c.b16 %v1202, %v1201
        %v1215 = vpack.c.b16 %v1204, %v1203
        %v1216 = vpack.c.b16 %v1206, %v1205
        %v1217 = vpack.c.b16 %v1208, %v1207
        %v1218 = vpack.c.b16 %v1210, %v1209
        %1227 = vmatpush.bf16.msra.mxu0 %v1218
        %1228 = vmatpush.bf16.msra.mxu0 %v1217
        %1229 = vmatpush.bf16.msra.mxu0 %v1216
        %1230 = vmatpush.bf16.msra.mxu0 %v1215
        %1231 = vmatpush.bf16.msra.mxu0 %v1214
        %1232 = vmatpush.bf16.msra.mxu0 %v1213
        %1233 = vmatpush.bf16.msra.mxu0 %v1212
        %1234 = vmatpush.bf16.msra.mxu0 %v1211
        %1235 = vmatmul.bf16.gmra.mxu0 %v1158
        %v1236 = vpop.f32.mrf.mxu0
        %v1237 = vadd.f32 %v1177, %v1236
        %v1238 = vpop.f32.mrf.mxu0
        %1239 = vdwg.mxu0
        %v1240 = vmax.f32 %v1237, 0.0
        %v1241 = vpack.c.bf16 %v1240, %v1240
        %v1242 = vld [vmem:[#allocation11] sm:$0xf]
        %v1243 = vld [vmem:[#allocation11 + $0x4] sm:$0xf]
        %v1244 = vld [vmem:[#allocation11 + $0x8] sm:$0xf]
        %v1245 = vld [vmem:[#allocation11 + $0xc] sm:$0xf]
        %v1246 = vld [vmem:[#allocation11 + $0x10] sm:$0xf]
        %v1247 = vld [vmem:[#allocation11 + $0x14] sm:$0xf]
        %v1248 = vld [vmem:[#allocation11 + $0x18] sm:$0xf]
        %v1249 = vld [vmem:[#allocation11 + $0x1c] sm:$0xf]
        %v1250 = vld [vmem:[#allocation11 + $0x20] sm:$0xf]
        %v1251 = vld [vmem:[#allocation11 + $0x24] sm:$0xf]
        %v1252 = vld [vmem:[#allocation11 + $0x28] sm:$0xf]
        %v1253 = vld [vmem:[#allocation11 + $0x2c] sm:$0xf]
        %v1254 = vld [vmem:[#allocation11 + $0x30] sm:$0xf]
        %v1255 = vld [vmem:[#allocation11 + $0x34] sm:$0xf]
        %v1256 = vld [vmem:[#allocation11 + $0x38] sm:$0xf]
        %v1257 = vld [vmem:[#allocation11 + $0x3c] sm:$0xf]
        %v1258 = vld [vmem:[%s8] sm:$0x1]
        %v1260 = vperm.slane %v1258, 0
        %v1278 = vunpack.c.l.b16 %v1242
        %v1279 = vunpack.c.l.b16 %v1243
        %v1280 = vunpack.c.l.b16 %v1244
        %v1281 = vunpack.c.l.b16 %v1245
        %v1282 = vunpack.c.l.b16 %v1246
        %v1283 = vunpack.c.l.b16 %v1247
        %v1284 = vunpack.c.l.b16 %v1248
        %v1285 = vunpack.c.l.b16 %v1249
        %v1286 = vunpack.c.l.b16 %v1250
        %v1287 = vunpack.c.l.b16 %v1251
        %v1288 = vunpack.c.l.b16 %v1252
        %v1289 = vunpack.c.l.b16 %v1253
        %v1290 = vunpack.c.l.b16 %v1254
        %v1291 = vunpack.c.l.b16 %v1255
        %v1292 = vunpack.c.l.b16 %v1256
        %v1293 = vunpack.c.l.b16 %v1257
        %v1294 = vpack.c.b16 %v1279, %v1278
        %v1295 = vpack.c.b16 %v1281, %v1280
        %v1296 = vpack.c.b16 %v1283, %v1282
        %v1297 = vpack.c.b16 %v1285, %v1284
        %v1298 = vpack.c.b16 %v1287, %v1286
        %v1299 = vpack.c.b16 %v1289, %v1288
        %v1300 = vpack.c.b16 %v1291, %v1290
        %v1301 = vpack.c.b16 %v1293, %v1292
        %1310 = vmatpush.bf16.msra.mxu0 %v1301
        %1311 = vmatpush.bf16.msra.mxu0 %v1300
        %1312 = vmatpush.bf16.msra.mxu0 %v1299
        %1313 = vmatpush.bf16.msra.mxu0 %v1298
        %1314 = vmatpush.bf16.msra.mxu0 %v1297
        %1315 = vmatpush.bf16.msra.mxu0 %v1296
        %1316 = vmatpush.bf16.msra.mxu0 %v1295
        %1317 = vmatpush.bf16.msra.mxu0 %v1294
        %1318 = vmatmul.bf16.gmra.mxu0 %v1241
        %v1319 = vpop.f32.mrf.mxu0
        %v1320 = vadd.f32 %v1260, %v1319
        %v1321 = vpop.f32.mrf.mxu0
        %1322 = vdwg.mxu0
        %v1323 = vadd.f32 %v1157, %v1320
        %v1324 = vld [vmem:[%s11] sm:$0x1]
        %v1325 = vld [vmem:[%s12] sm:$0x1]
        %1326 = vadd.xlane.f32.xlu0 %v1323
        %v1327 = vpop.xlane.xlu0 %1326
        %v1328 = vmul.f32 %v1327, 0.03125
        %v1329 = vmul.f32 %v1323, %v1323
        %1330 = vadd.xlane.f32.xlu0 %v1329
        %v1331 = vpop.xlane.xlu0 %1330
        %v1332 = vmul.f32 %v1331, 0.03125
        %v1333 = vmul.f32 %v1328, %v1328
        %v1334 = vsub.f32 %v1332, %v1333
        %v1335 = vsub.f32 %v1323, %v1328
        %v1336 = vadd.f32 %v1334, 1e-05
        %v1337 = vrsqrt.pop %v1336
        %v1338 = vmul.f32 %v1337, %v1336
        %v1339 = vmul.f32 %v1338, %v1337
        %v1340 = vmul.f32 0.5, %v1339
        %v1341 = vsub.f32 1.5, %v1340
        %v1342 = vmul.f32 %v1337, %v1341
        %vm1343 = vweird.f32 %v1336
        %vm1344 = vweird.f32 %v1337
        %vm1345 = vmor %vm1343, %vm1344
        %v1346 = vsel %vm1345, %v1337, %v1342
        %v1347 = vmul.f32 %v1335, %v1346
        %v1349 = vperm.slane %v1324, 0
        %v1351 = vmul.f32 %v1347, %v1349
        %v1353 = vperm.slane %v1325, 0
        %v1355 = vadd.f32 %v1351, %v1353
        %1356 = vst [vmem:[%s538] sm:$0xff] %v1355
        %s1357 = sand.u32 %s319, 1
        %s1358 = scalar_lea.sflag [#allocation4], %s1357
        %s1359 = sand.u32 %s319, 1
        %s1360 = smul.addr %s1359, 8
        %s1361 = scalar_lea.vmem [#allocation13], %s1360
        // Predicated region
        $region97: #{tpu_custom_call.1} parent=71 // pred_check
          %p1362 = pneg %p329
        $region98: #{tpu_custom_call.1} parent=71 // pred_check_branch
          %1364 = sbr.rel (%p1362) target = $region100
        $region99: #{tpu_custom_call.1} parent=71 // pred_region
          %1366 = vsyncadd %s1358, 0
          %s1367 = smul.addr %s33, 8
          %s1368 = scalar_lea.hbm %s13, %s1367
          %s1370 = sshll.u32 %s1361, 4
          %s1371 = int_to_ptr.vmem [resolvable:$true] %s1370
          %s1372 = sshll.u32 %s1368, 4
          %s1373 = int_to_ptr.hbm [resolvable:$true] %s1372
          %1375 = dma.vmem_to_hbm [thread:$0]  %s1371, 128, %s1373, %s1358
        $region100: #{tpu_custom_call.1} parent=71 // pred_fallthru
          _
      $region72: #{tpu_custom_call.1} parent=5 // pred_fallthru
        _
      %p1376 = scmp.le.s32.totalorder 2, %s28
      // Predicated region
      $region101: #{tpu_custom_call.1} parent=5 // pred_check
        %p1377 = pneg %p1376
      $region102: #{tpu_custom_call.1} parent=5 // pred_check_branch
        %1379 = sbr.rel (%p1377) target = $region104
      $region103: #{tpu_custom_call.1} parent=5 // pred_region
        %s1380 = ssub.s32 %s28, 2
        // Predicated region
        $region105: #{tpu_custom_call.1} parent=103 // pred_check
          %p1381 = pneg %p335
        $region106: #{tpu_custom_call.1} parent=103 // pred_check_branch
          %1383 = sbr.rel (%p1381) target = $region108
        $region107: #{tpu_custom_call.1} parent=103 // pred_region
          %s1384 = sand.u32 %s320, 1
          %s1385 = scalar_lea.sflag [#allocation4], %s1384
          %s1386 = sand.u32 %s320, 1
          %s1387 = smul.addr %s1386, 8
          %s1388 = scalar_lea.vmem [#allocation13], %s1387
          %1390 = dma.done %s1385, 128
        $region108: #{tpu_custom_call.1} parent=103 // pred_fallthru
          _
      $region104: #{tpu_custom_call.1} parent=5 // pred_fallthru
        _
    $region6: #{tpu_custom_call.1} parent=1 // loop_footer
      %s32 = sadd.s32 1, %s28
    $region7: #{tpu_custom_call.1} parent=1 // loop_footer_branch
      %27 = sbr.rel target = $region3
    $region8: #{tpu_custom_call.1} parent=1 // loop_exit
      _
    %1391 = vsyncpa [#allocation3], 1
    %s1392 = scalar_lea.sflag [#allocation3], 1
    %1393 = vsyncpa %s1392, 1
    %1394 = vsyncpa [#allocation6], 1
    %1395 = vsyncpa [#allocation9], 1
    %1396 = vsyncpa [#allocation12], 1
    %1397 = vsyncpa [#allocation4], 1
    %s1398 = scalar_lea.sflag [#allocation4], 1
    %1399 = vsyncpa %s1398, 1

</llo_original>
